<compile_context>
chip_gen: v5e
topology: v5e:2x2
jax: 0.10.0
libtpu: 0.0.40
codegen_flags: <defaults>
</compile_context>

<pallas_src>
import math
from functools import partial

import jax
import jax.numpy as jnp
from jax import lax
from jax.experimental import pallas as pl
from jax.experimental.pallas import tpu as pltpu

VMEM_LIMIT = 32 * 1024 * 1024  # explicit scoped-VMEM budget; safe on v5e/v6e/v7x


def _ceil_to(x, m):
    return ((x + m - 1) // m) * m


def _pad2d(a, rows, cols):
    r, c = a.shape
    if (r, c) == (rows, cols):
        return a
    return jnp.pad(a, ((0, rows - r), (0, cols - c)))


# --------------------------- tiled matmul + bias -----------------------------

def _matmul_bias_kernel(x_ref, w_ref, b_ref, o_ref, acc_ref):
    @pl.when(pl.program_id(2) == 0)
    def _():
        acc_ref[...] = jnp.zeros_like(acc_ref)

    acc_ref[...] += jnp.dot(x_ref[...], w_ref[...],
                            preferred_element_type=jnp.float32)

    @pl.when(pl.program_id(2) == pl.num_programs(2) - 1)
    def _():
        o_ref[...] = (acc_ref[...] + b_ref[...]).astype(o_ref.dtype)


def matmul_bias(x, w, b=None, out_dtype=jnp.bfloat16):
    """(M,K) @ (K,N) + b -> (M,N). bf16 operands, f32 accumulation, tiled."""
    M, K = x.shape
    Kw, N = w.shape
    assert K == Kw

    tm = 256 if M > 256 else _ceil_to(M, 8)
    tn = 256 if N > 256 else _ceil_to(N, 128)      # lane-dense output tiles
    tk = 512 if K > 1024 else _ceil_to(K, 8)       # only tile K for big problems
    Mp, Np, Kp = _ceil_to(M, tm), _ceil_to(N, tn), _ceil_to(K, tk)

    xb = _pad2d(x.astype(jnp.bfloat16), Mp, Kp)
    wb = _pad2d(w.astype(jnp.bfloat16), Kp, Np)
    if b is None:
        bb = jnp.zeros((1, Np), jnp.float32)
    else:
        bb = _pad2d(b.reshape(1, N).astype(jnp.float32), 1, Np)

    cost = pl.CostEstimate(
        flops=2 * Mp * Np * Kp,
        transcendentals=0,
        bytes_accessed=2 * (Mp * Kp + Kp * Np) + 4 * Np
        + Mp * Np * jnp.dtype(out_dtype).itemsize)

    out = pl.pallas_call(
        _matmul_bias_kernel,
        out_shape=jax.ShapeDtypeStruct((Mp, Np), out_dtype),
        grid=(Mp // tm, Np // tn, Kp // tk),
        in_specs=[pl.BlockSpec((tm, tk), lambda i, j, k: (i, k)),
                  pl.BlockSpec((tk, tn), lambda i, j, k: (k, j)),
                  pl.BlockSpec((1, tn), lambda i, j, k: (0, j))],
        out_specs=pl.BlockSpec((tm, tn), lambda i, j, k: (i, j)),
        scratch_shapes=[pltpu.VMEM((tm, tn), jnp.float32)],
        compiler_params=pltpu.CompilerParams(
            dimension_semantics=("parallel", "parallel", "arbitrary"),
            vmem_limit_bytes=VMEM_LIMIT),
        cost_estimate=cost,
    )(xb, wb, bb)
    return out[:M, :N]


# ----------------------- fused LayerNorm + matmul ----------------------------

def _ln_matmul_kernel(x_ref, g_ref, bln_ref, w_ref, b_ref, o_ref, *, eps):
    x = x_ref[...].astype(jnp.float32)                      # LN stats in f32
    mean = jnp.mean(x, axis=-1, keepdims=True)
    var = jnp.mean(jnp.square(x - mean), axis=-1, keepdims=True)
    xn = (x - mean) * lax.rsqrt(var + eps)
    xn = (xn * g_ref[...] + bln_ref[...]).astype(w_ref.dtype)
    acc = jnp.dot(xn, w_ref[...], preferred_element_type=jnp.float32)
    o_ref[...] = (acc + b_ref[...]).astype(o_ref.dtype)


def layernorm_matmul(x, gamma, beta, w, b=None, eps=1e-5, out_dtype=jnp.bfloat16):
    """(LayerNorm(x) @ w + b) fused; contraction dim (= C, small) stays untiled."""
    M, C = x.shape
    Cw, N = w.shape
    assert C == Cw

    tm = 256 if M > 256 else _ceil_to(M, 8)
    tn = 256 if N > 256 else _ceil_to(N, 128)
    Mp, Np = _ceil_to(M, tm), _ceil_to(N, tn)

    xb = _pad2d(x.astype(jnp.bfloat16), Mp, C)
    wb = _pad2d(w.astype(jnp.bfloat16), C, Np)
    g2 = gamma.reshape(1, C).astype(jnp.float32)
    bt = beta.reshape(1, C).astype(jnp.float32)
    if b is None:
        bb = jnp.zeros((1, Np), jnp.float32)
    else:
        bb = _pad2d(b.reshape(1, N).astype(jnp.float32), 1, Np)

    cost = pl.CostEstimate(
        flops=2 * Mp * Np * C + 8 * Mp * C,
        transcendentals=Mp,
        bytes_accessed=2 * (Mp * C + C * Np)
        + Mp * Np * jnp.dtype(out_dtype).itemsize)

    out = pl.pallas_call(
        partial(_ln_matmul_kernel, eps=eps),
        out_shape=jax.ShapeDtypeStruct((Mp, Np), out_dtype),
        grid=(Mp // tm, Np // tn),
        in_specs=[pl.BlockSpec((tm, C), lambda i, j: (i, 0)),
                  pl.BlockSpec((1, C), lambda i, j: (0, 0)),
                  pl.BlockSpec((1, C), lambda i, j: (0, 0)),
                  pl.BlockSpec((C, tn), lambda i, j: (0, j)),
                  pl.BlockSpec((1, tn), lambda i, j: (0, j))],
        out_specs=pl.BlockSpec((tm, tn), lambda i, j: (i, j)),
        compiler_params=pltpu.CompilerParams(
            dimension_semantics=("parallel", "parallel"),
            vmem_limit_bytes=VMEM_LIMIT),
        cost_estimate=cost,
    )(xb, g2, bt, wb, bb)
    return out[:M, :N]


# --------------------------- fused attention core ----------------------------

def _attn_kernel(q_ref, k_ref, v_ref, o_ref, *, num_heads, scale):
    C = q_ref.shape[-1]
    d = C // num_heads
    q = q_ref[0].astype(jnp.float32) * scale   # scale q once: N*d mults, not N*Nk
    k = k_ref[0]                               # (Nk, C) bf16
    v = v_ref[0]
    outs = []
    for h in range(num_heads):                 # static loop; static lane slices
        qh = q[:, h * d:(h + 1) * d].astype(k.dtype)
        kh = k[:, h * d:(h + 1) * d]
        vh = v[:, h * d:(h + 1) * d]
        # contract last dims directly -> no explicit k transpose / relayout
        s = lax.dot_general(qh, kh, (((1,), (1,)), ((), ())),
                            preferred_element_type=jnp.float32)     # (N, Nk)
        s = s - jnp.max(s, axis=-1, keepdims=True)
        p = jnp.exp(s)
        r = pl.reciprocal(jnp.sum(p, axis=-1, keepdims=True), approx=True)
        p = (p * r).astype(vh.dtype)
        outs.append(lax.dot_general(p, vh, (((1,), (0,)), ((), ())),
                                    preferred_element_type=jnp.float32))
    o_ref[0] = jnp.concatenate(outs, axis=-1).astype(o_ref.dtype)   # lane-dense


def attention_core(q, k, v, scale, num_heads):
    B, N, C = q.shape
    Nk = k.shape[1]
    d = C // num_heads
    cost = pl.CostEstimate(
        flops=4 * B * num_heads * N * Nk * d,
        transcendentals=B * num_heads * N * Nk,
        bytes_accessed=2 * (2 * B * N * C + 2 * B * Nk * C))
    return pl.pallas_call(
        partial(_attn_kernel, num_heads=num_heads, scale=scale),
        out_shape=jax.ShapeDtypeStruct((B, N, C), jnp.bfloat16),
        grid=(B,),
        in_specs=[pl.BlockSpec((1, N, C), lambda b: (b, 0, 0)),
                  pl.BlockSpec((1, Nk, C), lambda b: (b, 0, 0)),
                  pl.BlockSpec((1, Nk, C), lambda b: (b, 0, 0))],
        out_specs=pl.BlockSpec((1, N, C), lambda b: (b, 0, 0)),
        compiler_params=pltpu.CompilerParams(
            dimension_semantics=("parallel",),
            vmem_limit_bytes=VMEM_LIMIT),
        cost_estimate=cost,
    )(q.astype(jnp.bfloat16), k.astype(jnp.bfloat16), v.astype(jnp.bfloat16))


# ------------------------------ module forward -------------------------------

def attention_forward(params, x, H, W, *, num_heads, sr_ratio):
    B, N, C = x.shape
    d = C // num_heads
    scale = d ** (-0.5)
    x2 = x.reshape(B * N, C)

    if sr_ratio > 1:
        # q from full-resolution tokens (qkv_bias=False)
        q = matmul_bias(x2, params['q_w'], None).reshape(B, N, C)
        # sr conv: kernel_size == stride == sr_ratio, pad 0 -> patch extraction
        # is a pure reshape/transpose (no im2col HBM blow-up), then one matmul.
        Hs, Ws = H // sr_ratio, W // sr_ratio
        patches = (x.reshape(B, Hs, sr_ratio, Ws, sr_ratio, C)
                    .transpose(0, 1, 3, 2, 4, 5)
                    .reshape(B * Hs * Ws, sr_ratio * sr_ratio * C))
        sr_w2 = params['sr_w'].transpose(2, 3, 1, 0).reshape(
            sr_ratio * sr_ratio * C, C)
        x_sr = matmul_bias(patches, sr_w2, params['sr_b'])
        # LayerNorm fused into the kv projection (saves one HBM round trip)
        kv = layernorm_matmul(x_sr, params['norm_g'], params['norm_b'],
                              params['kv_w'], None)
        Nk = Hs * Ws
        kv = kv.reshape(B, Nk, 2 * C)
    else:
        # same input for q and kv -> single fused 3*C-wide projection
        qkv_w = jnp.concatenate([params['q_w'], params['kv_w']], axis=1)
        qkv = matmul_bias(x2, qkv_w, None).reshape(B, N, 3 * C)
        q, kv = qkv[..., :C], qkv[..., C:]
        Nk = N

    k, v = kv[..., :C], kv[..., C:]
    o = attention_core(q, k, v, scale, num_heads)            # (B, N, C) bf16
    # attn_drop / proj_drop are p=0.0 -> identity at inference.
    out = matmul_bias(o.reshape(B * N, C), params['proj_w'], params['proj_b'],
                      out_dtype=jnp.float32)
    return out.reshape(B, N, C)


# --------------------------- pure-JAX reference ------------------------------

def attention_reference(params, x, H, W, *, num_heads, sr_ratio):
    B, N, C = x.shape
    d = C // num_heads
    scale = d ** (-0.5)
    q = x @ params['q_w']
    if sr_ratio > 1:
        Hs, Ws = H // sr_ratio, W // sr_ratio
        patches = (x.reshape(B, Hs, sr_ratio, Ws, sr_ratio, C)
                    .transpose(0, 1, 3, 2, 4, 5)
                    .reshape(B, Hs * Ws, sr_ratio * sr_ratio * C))
        sr_w2 = params['sr_w'].transpose(2, 3, 1, 0).reshape(-1, C)
        x_ = patches @ sr_w2 + params['sr_b']
        mu = x_.mean(-1, keepdims=True)
        var = ((x_ - mu) ** 2).mean(-1, keepdims=True)
        x_ = (x_ - mu) / jnp.sqrt(var + 1e-5) * params['norm_g'] + params['norm_b']
    else:
        x_ = x
    kv = x_ @ params['kv_w']
    k, v = kv[..., :C], kv[..., C:]

    def heads(t):
        return t.reshape(t.shape[0], t.shape[1], num_heads, d).transpose(0, 2, 1, 3)

    qh, kh, vh = heads(q), heads(k), heads(v)
    attn = jax.nn.softmax(jnp.einsum('bhnd,bhmd->bhnm', qh, kh) * scale, axis=-1)
    o = jnp.einsum('bhnm,bhmd->bhnd', attn, vh).transpose(0, 2, 1, 3).reshape(B, N, C)
    return o @ params['proj_w'] + params['proj_b']


# ------------------------------ parameter init -------------------------------

def init_params(key, dim, sr_ratio):
    ks = jax.random.split(key, 4)
    std = 0.02     # trunc_normal_(std=0.02) approximated with a normal draw
    p = {
        'q_w': std * jax.random.normal(ks[0], (dim, dim), jnp.float32),
        'kv_w': std * jax.random.normal(ks[1], (dim, 2 * dim), jnp.float32),
        'proj_w': std * jax.random.normal(ks[2], (dim, dim), jnp.float32),
        'proj_b': jnp.zeros((dim,), jnp.float32),
    }
    if sr_ratio > 1:
        fan_out = sr_ratio * sr_ratio * dim
        p['sr_w'] = (math.sqrt(2.0 / fan_out)
                     * jax.random.normal(ks[3], (dim, dim, sr_ratio, sr_ratio),
                                         jnp.float32))
        p['sr_b'] = jnp.zeros((dim,), jnp.float32)
        p['norm_g'] = jnp.ones((dim,), jnp.float32)
        p['norm_b'] = jnp.zeros((dim,), jnp.float32)
    return p


# ----------------------------------- main ------------------------------------

if __name__ == "__main__":
    B, H, W, C, num_heads = 2, 16, 16, 64, 2
    N = H * W
    key = jax.random.PRNGKey(0)
    kx, kp1, kp2 = jax.random.split(key, 3)
    x = jax.random.normal(kx, (B, N, C), jnp.float32)

    for sr_ratio, kp in ((2, kp1), (1, kp2)):   # exercise both code paths
        params = init_params(kp, C, sr_ratio)
        fwd = jax.jit(partial(attention_forward, H=H, W=W,
                              num_heads=num_heads, sr_ratio=sr_ratio))
        out = fwd(params, x)
        jax.block_until_ready(out)
        assert out.shape == (B, N, C), out.shape
        assert bool(jnp.all(jnp.isfinite(out)))
        ref = attention_reference(params, x, H, W,
                                  num_heads=num_heads, sr_ratio=sr_ratio)
        rel = float(jnp.sqrt(jnp.mean((out - ref) ** 2)
                             / (jnp.mean(ref ** 2) + 1e-12)))
        assert rel < 5e-2, f"sr_ratio={sr_ratio}: relative error {rel}"

    print("KERNEL_OK")
</pallas_src>

<mosaic_0001>
module attributes {stable_mosaic.version = 11 : i64} {
  func.func @_ln_matmul_kernel(%arg0: i32, %arg1: i32, %arg2: memref<128x64xbf16, #tpu.memory_space<vmem>>, %arg3: memref<1x64xf32, #tpu.memory_space<vmem>>, %arg4: memref<1x64xf32, #tpu.memory_space<vmem>>, %arg5: memref<64x128xbf16, #tpu.memory_space<vmem>>, %arg6: memref<1x128xf32, #tpu.memory_space<vmem>>, %arg7: memref<128x128xbf16, #tpu.memory_space<vmem>>) attributes {dimension_semantics = [#tpu.dimension_semantics<parallel>, #tpu.dimension_semantics<parallel>], iteration_bounds = array<i64: 1, 1>, scalar_prefetch = 0 : i64, scratch_operands = 0 : i64, tpu.core_type = #tpu.core_type<tc>, window_params = [{transform_indices = @transform_0, window_bounds = array<i64: 128, 64>}, {pipeline_mode = #tpu.pipeline_mode<synchronous>, transform_indices = @transform_1, window_bounds = array<i64: 1, 64>}, {pipeline_mode = #tpu.pipeline_mode<synchronous>, transform_indices = @transform_2, window_bounds = array<i64: 1, 64>}, {transform_indices = @transform_3, window_bounds = array<i64: 64, 128>}, {transform_indices = @transform_4, window_bounds = array<i64: 1, 128>}, {transform_indices = @transform_5, window_bounds = array<i64: 128, 128>}]} {
    %c0 = arith.constant 0 : index
    %c0_0 = arith.constant 0 : index
    %0 = vector.load %arg2[%c0, %c0_0] : memref<128x64xbf16, #tpu.memory_space<vmem>>, vector<128x64xbf16>
    %1 = arith.extf %0 : vector<128x64xbf16> to vector<128x64xf32>
    %cst = arith.constant dense<0.000000e+00> : vector<128xf32>
    %2 = vector.multi_reduction <add>, %1, %cst [1] : vector<128x64xf32> to vector<128xf32>
    %3 = vector.shape_cast %2 : vector<128xf32> to vector<128x1xf32>
    %cst_1 = arith.constant 6.400000e+01 : f32
    %4 = vector.broadcast %cst_1 : f32 to vector<128x1xf32>
    %5 = arith.divf %3, %4 : vector<128x1xf32>
    %6 = vector.broadcast %5 : vector<128x1xf32> to vector<128x64xf32>
    %7 = arith.subf %1, %6 : vector<128x64xf32>
    %8 = arith.mulf %7, %7 : vector<128x64xf32>
    %cst_2 = arith.constant dense<0.000000e+00> : vector<128xf32>
    %9 = vector.multi_reduction <add>, %8, %cst_2 [1] : vector<128x64xf32> to vector<128xf32>
    %10 = vector.shape_cast %9 : vector<128xf32> to vector<128x1xf32>
    %cst_3 = arith.constant 6.400000e+01 : f32
    %11 = vector.broadcast %cst_3 : f32 to vector<128x1xf32>
    %12 = arith.divf %10, %11 : vector<128x1xf32>
    %13 = vector.broadcast %5 : vector<128x1xf32> to vector<128x64xf32>
    %14 = arith.subf %1, %13 : vector<128x64xf32>
    %cst_4 = arith.constant 9.99999974E-6 : f32
    %15 = vector.broadcast %cst_4 : f32 to vector<128x1xf32>
    %16 = arith.addf %12, %15 : vector<128x1xf32>
    %17 = math.rsqrt %16 : vector<128x1xf32>
    %18 = vector.broadcast %17 : vector<128x1xf32> to vector<128x64xf32>
    %19 = arith.mulf %14, %18 : vector<128x64xf32>
    %c0_5 = arith.constant 0 : index
    %c0_6 = arith.constant 0 : index
    %20 = vector.load %arg3[%c0_5, %c0_6] : memref<1x64xf32, #tpu.memory_space<vmem>>, vector<1x64xf32>
    %21 = vector.broadcast %20 : vector<1x64xf32> to vector<128x64xf32>
    %22 = arith.mulf %19, %21 : vector<128x64xf32>
    %c0_7 = arith.constant 0 : index
    %c0_8 = arith.constant 0 : index
    %23 = vector.load %arg4[%c0_7, %c0_8] : memref<1x64xf32, #tpu.memory_space<vmem>>, vector<1x64xf32>
    %24 = vector.broadcast %23 : vector<1x64xf32> to vector<128x64xf32>
    %25 = arith.addf %22, %24 : vector<128x64xf32>
    %26 = arith.truncf %25 : vector<128x64xf32> to vector<128x64xbf16>
    %c0_9 = arith.constant 0 : index
    %c0_10 = arith.constant 0 : index
    %27 = vector.load %arg5[%c0_9, %c0_10] : memref<64x128xbf16, #tpu.memory_space<vmem>>, vector<64x128xbf16>
    %cst_11 = arith.constant dense<0.000000e+00> : vector<128x128xf32>
    %28 = tpu.matmul %26, %27, %cst_11 {dimension_numbers = #tpu.dot_dimension_numbers<[1], [0], [0], [1], [0, 0, 1, 1], [], []>} : vector<128x64xbf16>, vector<64x128xbf16>, vector<128x128xf32> -> vector<128x128xf32>
    %c0_12 = arith.constant 0 : index
    %c0_13 = arith.constant 0 : index
    %29 = vector.load %arg6[%c0_12, %c0_13] : memref<1x128xf32, #tpu.memory_space<vmem>>, vector<1x128xf32>
    %30 = vector.broadcast %29 : vector<1x128xf32> to vector<128x128xf32>
    %31 = arith.addf %28, %30 : vector<128x128xf32>
    %32 = arith.truncf %31 : vector<128x128xf32> to vector<128x128xbf16>
    %c0_14 = arith.constant 0 : index
    %c0_15 = arith.constant 0 : index
    %33 = vector.load %arg7[%c0_14, %c0_15] : memref<128x128xbf16, #tpu.memory_space<vmem>>, vector<128x128xbf16>
    tpu.vector_store %arg7[%c0_14, %c0_15], %32 {strides = array<i32>} : memref<128x128xbf16, #tpu.memory_space<vmem>>, vector<128x128xbf16>,
    return
  }
  func.func @transform_0(%arg0: i32, %arg1: i32) -> (i32, i32) {
    %c0_i32 = arith.constant 0 : i32
    %c0_i32_0 = arith.constant 0 : i32
    return %arg0, %c0_i32 : i32, i32
  }
  func.func @transform_1(%arg0: i32, %arg1: i32) -> (i32, i32) {
    %c0_i32 = arith.constant 0 : i32
    %c0_i32_0 = arith.constant 0 : i32
    %c0_i32_1 = arith.constant 0 : i32
    return %c0_i32, %c0_i32_0 : i32, i32
  }
  func.func @transform_2(%arg0: i32, %arg1: i32) -> (i32, i32) {
    %c0_i32 = arith.constant 0 : i32
    %c0_i32_0 = arith.constant 0 : i32
    %c0_i32_1 = arith.constant 0 : i32
    return %c0_i32, %c0_i32_0 : i32, i32
  }
  func.func @transform_3(%arg0: i32, %arg1: i32) -> (i32, i32) {
    %c0_i32 = arith.constant 0 : i32
    %c0_i32_0 = arith.constant 0 : i32
    return %c0_i32, %arg1 : i32, i32
  }
  func.func @transform_4(%arg0: i32, %arg1: i32) -> (i32, i32) {
    %c0_i32 = arith.constant 0 : i32
    %c0_i32_0 = arith.constant 0 : i32
    return %c0_i32, %arg1 : i32, i32
  }
  func.func @transform_5(%arg0: i32, %arg1: i32) -> (i32, i32) {
    %c0_i32 = arith.constant 0 : i32
    return %arg0, %arg1 : i32, i32
  }
}

module attributes {stable_mosaic.version = 11 : i64} {
  func.func @_matmul_bias_kernel(%arg0: i32, %arg1: i32, %arg2: i32, %arg3: memref<128x256xbf16, #tpu.memory_space<vmem>>, %arg4: memref<256x128xbf16, #tpu.memory_space<vmem>>, %arg5: memref<1x128xf32, #tpu.memory_space<vmem>>, %arg6: memref<128x128xbf16, #tpu.memory_space<vmem>>, %arg7: memref<128x128xf32, #tpu.memory_space<vmem>>) attributes {dimension_semantics = [#tpu.dimension_semantics<parallel>, #tpu.dimension_semantics<parallel>, #tpu.dimension_semantics<arbitrary>], iteration_bounds = array<i64: 1, 1, 1>, scalar_prefetch = 0 : i64, scratch_operands = 1 : i64, tpu.core_type = #tpu.core_type<tc>, window_params = [{transform_indices = @transform_0, window_bounds = array<i64: 128, 256>}, {transform_indices = @transform_1, window_bounds = array<i64: 256, 128>}, {transform_indices = @transform_2, window_bounds = array<i64: 1, 128>}, {transform_indices = @transform_3, window_bounds = array<i64: 128, 128>}]} {
    %c0_i32 = arith.constant 0 : i32
    %0 = arith.cmpi eq, %arg2, %c0_i32 : i32
    %1 = arith.extui %0 : i1 to i32
    %c0_i32_0 = arith.constant 0 : i32
    %2 = arith.cmpi ne, %1, %c0_i32_0 : i32
    scf.if %2 {
      %cst_10 = arith.constant 0.000000e+00 : f32
      %12 = vector.broadcast %cst_10 : f32 to vector<128x128xf32>
      %c0_11 = arith.constant 0 : index
      %c0_12 = arith.constant 0 : index
      %13 = vector.load %arg7[%c0_11, %c0_12] : memref<128x128xf32, #tpu.memory_space<vmem>>, vector<128x128xf32>
      tpu.vector_store %arg7[%c0_11, %c0_12], %12 {strides = array<i32>} : memref<128x128xf32, #tpu.memory_space<vmem>>, vector<128x128xf32>,
    } else {
    }
    %c0 = arith.constant 0 : index
    %c0_1 = arith.constant 0 : index
    %3 = vector.load %arg7[%c0, %c0_1] : memref<128x128xf32, #tpu.memory_space<vmem>>, vector<128x128xf32>
    %c0_2 = arith.constant 0 : index
    %c0_3 = arith.constant 0 : index
    %4 = vector.load %arg3[%c0_2, %c0_3] : memref<128x256xbf16, #tpu.memory_space<vmem>>, vector<128x256xbf16>
    %c0_4 = arith.constant 0 : index
    %c0_5 = arith.constant 0 : index
    %5 = vector.load %arg4[%c0_4, %c0_5] : memref<256x128xbf16, #tpu.memory_space<vmem>>, vector<256x128xbf16>
    %cst = arith.constant dense<0.000000e+00> : vector<128x128xf32>
    %6 = tpu.matmul %4, %5, %cst {dimension_numbers = #tpu.dot_dimension_numbers<[1], [0], [0], [1], [0, 0, 1, 1], [], []>} : vector<128x256xbf16>, vector<256x128xbf16>, vector<128x128xf32> -> vector<128x128xf32>
    %7 = arith.addf %3, %6 : vector<128x128xf32>
    %c0_6 = arith.constant 0 : index
    %c0_7 = arith.constant 0 : index
    %8 = vector.load %arg7[%c0_6, %c0_7] : memref<128x128xf32, #tpu.memory_space<vmem>>, vector<128x128xf32>
    tpu.vector_store %arg7[%c0_6, %c0_7], %7 {strides = array<i32>} : memref<128x128xf32, #tpu.memory_space<vmem>>, vector<128x128xf32>,
    %c0_i32_8 = arith.constant 0 : i32
    %9 = arith.cmpi eq, %arg2, %c0_i32_8 : i32
    %10 = arith.extui %9 : i1 to i32
    %c0_i32_9 = arith.constant 0 : i32
    %11 = arith.cmpi ne, %10, %c0_i32_9 : i32
    scf.if %11 {
      %c0_10 = arith.constant 0 : index
      %c0_11 = arith.constant 0 : index
      %12 = vector.load %arg7[%c0_10, %c0_11] : memref<128x128xf32, #tpu.memory_space<vmem>>, vector<128x128xf32>
      %c0_12 = arith.constant 0 : index
      %c0_13 = arith.constant 0 : index
      %13 = vector.load %arg5[%c0_12, %c0_13] : memref<1x128xf32, #tpu.memory_space<vmem>>, vector<1x128xf32>
      %14 = vector.broadcast %13 : vector<1x128xf32> to vector<128x128xf32>
      %15 = arith.addf %12, %14 : vector<128x128xf32>
      %16 = arith.truncf %15 : vector<128x128xf32> to vector<128x128xbf16>
      %c0_14 = arith.constant 0 : index
      %c0_15 = arith.constant 0 : index
      %17 = vector.load %arg6[%c0_14, %c0_15] : memref<128x128xbf16, #tpu.memory_space<vmem>>, vector<128x128xbf16>
      tpu.vector_store %arg6[%c0_14, %c0_15], %16 {strides = array<i32>} : memref<128x128xbf16, #tpu.memory_space<vmem>>, vector<128x128xbf16>,
    } else {
    }
    return
  }
  func.func @transform_0(%arg0: i32, %arg1: i32, %arg2: i32) -> (i32, i32) {
    %c0_i32 = arith.constant 0 : i32
    return %arg0, %arg2 : i32, i32
  }
  func.func @transform_1(%arg0: i32, %arg1: i32, %arg2: i32) -> (i32, i32) {
    %c0_i32 = arith.constant 0 : i32
    return %arg2, %arg1 : i32, i32
  }
  func.func @transform_2(%arg0: i32, %arg1: i32, %arg2: i32) -> (i32, i32) {
    %c0_i32 = arith.constant 0 : i32
    %c0_i32_0 = arith.constant 0 : i32
    return %c0_i32, %arg1 : i32, i32
  }
  func.func @transform_3(%arg0: i32, %arg1: i32, %arg2: i32) -> (i32, i32) {
    %c0_i32 = arith.constant 0 : i32
    return %arg0, %arg1 : i32, i32
  }
}

module attributes {stable_mosaic.version = 11 : i64} {
  func.func @_matmul_bias_kernel(%arg0: i32, %arg1: i32, %arg2: i32, %arg3: memref<256x64xbf16, #tpu.memory_space<vmem>>, %arg4: memref<64x128xbf16, #tpu.memory_space<vmem>>, %arg5: memref<1x128xf32, #tpu.memory_space<vmem>>, %arg6: memref<256x128xbf16, #tpu.memory_space<vmem>>, %arg7: memref<256x128xf32, #tpu.memory_space<vmem>>) attributes {dimension_semantics = [#tpu.dimension_semantics<parallel>, #tpu.dimension_semantics<parallel>, #tpu.dimension_semantics<arbitrary>], iteration_bounds = array<i64: 2, 1, 1>, scalar_prefetch = 0 : i64, scratch_operands = 1 : i64, tpu.core_type = #tpu.core_type<tc>, window_params = [{transform_indices = @transform_0, window_bounds = array<i64: 256, 64>}, {transform_indices = @transform_1, window_bounds = array<i64: 64, 128>}, {transform_indices = @transform_2, window_bounds = array<i64: 1, 128>}, {transform_indices = @transform_3, window_bounds = array<i64: 256, 128>}]} {
    %c0_i32 = arith.constant 0 : i32
    %0 = arith.cmpi eq, %arg2, %c0_i32 : i32
    %1 = arith.extui %0 : i1 to i32
    %c0_i32_0 = arith.constant 0 : i32
    %2 = arith.cmpi ne, %1, %c0_i32_0 : i32
    scf.if %2 {
      %cst_10 = arith.constant 0.000000e+00 : f32
      %12 = vector.broadcast %cst_10 : f32 to vector<256x128xf32>
      %c0_11 = arith.constant 0 : index
      %c0_12 = arith.constant 0 : index
      %13 = vector.load %arg7[%c0_11, %c0_12] : memref<256x128xf32, #tpu.memory_space<vmem>>, vector<256x128xf32>
      tpu.vector_store %arg7[%c0_11, %c0_12], %12 {strides = array<i32>} : memref<256x128xf32, #tpu.memory_space<vmem>>, vector<256x128xf32>,
    } else {
    }
    %c0 = arith.constant 0 : index
    %c0_1 = arith.constant 0 : index
    %3 = vector.load %arg7[%c0, %c0_1] : memref<256x128xf32, #tpu.memory_space<vmem>>, vector<256x128xf32>
    %c0_2 = arith.constant 0 : index
    %c0_3 = arith.constant 0 : index
    %4 = vector.load %arg3[%c0_2, %c0_3] : memref<256x64xbf16, #tpu.memory_space<vmem>>, vector<256x64xbf16>
    %c0_4 = arith.constant 0 : index
    %c0_5 = arith.constant 0 : index
    %5 = vector.load %arg4[%c0_4, %c0_5] : memref<64x128xbf16, #tpu.memory_space<vmem>>, vector<64x128xbf16>
    %cst = arith.constant dense<0.000000e+00> : vector<256x128xf32>
    %6 = tpu.matmul %4, %5, %cst {dimension_numbers = #tpu.dot_dimension_numbers<[1], [0], [0], [1], [0, 0, 1, 1], [], []>} : vector<256x64xbf16>, vector<64x128xbf16>, vector<256x128xf32> -> vector<256x128xf32>
    %7 = arith.addf %3, %6 : vector<256x128xf32>
    %c0_6 = arith.constant 0 : index
    %c0_7 = arith.constant 0 : index
    %8 = vector.load %arg7[%c0_6, %c0_7] : memref<256x128xf32, #tpu.memory_space<vmem>>, vector<256x128xf32>
    tpu.vector_store %arg7[%c0_6, %c0_7], %7 {strides = array<i32>} : memref<256x128xf32, #tpu.memory_space<vmem>>, vector<256x128xf32>,
    %c0_i32_8 = arith.constant 0 : i32
    %9 = arith.cmpi eq, %arg2, %c0_i32_8 : i32
    %10 = arith.extui %9 : i1 to i32
    %c0_i32_9 = arith.constant 0 : i32
    %11 = arith.cmpi ne, %10, %c0_i32_9 : i32
    scf.if %11 {
      %c0_10 = arith.constant 0 : index
      %c0_11 = arith.constant 0 : index
      %12 = vector.load %arg7[%c0_10, %c0_11] : memref<256x128xf32, #tpu.memory_space<vmem>>, vector<256x128xf32>
      %c0_12 = arith.constant 0 : index
      %c0_13 = arith.constant 0 : index
      %13 = vector.load %arg5[%c0_12, %c0_13] : memref<1x128xf32, #tpu.memory_space<vmem>>, vector<1x128xf32>
      %14 = vector.broadcast %13 : vector<1x128xf32> to vector<256x128xf32>
      %15 = arith.addf %12, %14 : vector<256x128xf32>
      %16 = arith.truncf %15 : vector<256x128xf32> to vector<256x128xbf16>
      %c0_14 = arith.constant 0 : index
      %c0_15 = arith.constant 0 : index
      %17 = vector.load %arg6[%c0_14, %c0_15] : memref<256x128xbf16, #tpu.memory_space<vmem>>, vector<256x128xbf16>
      tpu.vector_store %arg6[%c0_14, %c0_15], %16 {strides = array<i32>} : memref<256x128xbf16, #tpu.memory_space<vmem>>, vector<256x128xbf16>,
    } else {
    }
    return
  }
  func.func @transform_0(%arg0: i32, %arg1: i32, %arg2: i32) -> (i32, i32) {
    %c0_i32 = arith.constant 0 : i32
    return %arg0, %arg2 : i32, i32
  }
  func.func @transform_1(%arg0: i32, %arg1: i32, %arg2: i32) -> (i32, i32) {
    %c0_i32 = arith.constant 0 : i32
    return %arg2, %arg1 : i32, i32
  }
  func.func @transform_2(%arg0: i32, %arg1: i32, %arg2: i32) -> (i32, i32) {
    %c0_i32 = arith.constant 0 : i32
    %c0_i32_0 = arith.constant 0 : i32
    return %c0_i32, %arg1 : i32, i32
  }
  func.func @transform_3(%arg0: i32, %arg1: i32, %arg2: i32) -> (i32, i32) {
    %c0_i32 = arith.constant 0 : i32
    return %arg0, %arg1 : i32, i32
  }
}

module attributes {stable_mosaic.version = 11 : i64} {
  func.func @_attn_kernel(%arg0: i32, %arg1: memref<1x256x64xbf16, #tpu.memory_space<vmem>>, %arg2: memref<1x64x64xbf16, #tpu.memory_space<vmem>>, %arg3: memref<1x64x64xbf16, #tpu.memory_space<vmem>>, %arg4: memref<1x256x64xbf16, #tpu.memory_space<vmem>>) attributes {dimension_semantics = [#tpu.dimension_semantics<parallel>], iteration_bounds = array<i64: 2>, scalar_prefetch = 0 : i64, scratch_operands = 0 : i64, tpu.core_type = #tpu.core_type<tc>, window_params = [{transform_indices = @transform_0, window_bounds = array<i64: 1, 256, 64>}, {transform_indices = @transform_1, window_bounds = array<i64: 1, 64, 64>}, {transform_indices = @transform_2, window_bounds = array<i64: 1, 64, 64>}, {transform_indices = @transform_3, window_bounds = array<i64: 1, 256, 64>}]} {
    %c0 = arith.constant 0 : index
    %c0_0 = arith.constant 0 : index
    %c0_1 = arith.constant 0 : index
    %0 = vector.load %arg1[%c0, %c0_0, %c0_1] : memref<1x256x64xbf16, #tpu.memory_space<vmem>>, vector<1x256x64xbf16>
    %1 = vector.shape_cast %0 : vector<1x256x64xbf16> to vector<256x64xbf16>
    %2 = arith.extf %1 : vector<256x64xbf16> to vector<256x64xf32>
    %cst = arith.constant 0.176776692 : f32
    %3 = vector.broadcast %cst : f32 to vector<256x64xf32>
    %4 = arith.mulf %2, %3 : vector<256x64xf32>
    %c0_2 = arith.constant 0 : index
    %c0_3 = arith.constant 0 : index
    %c0_4 = arith.constant 0 : index
    %5 = vector.load %arg2[%c0_2, %c0_3, %c0_4] : memref<1x64x64xbf16, #tpu.memory_space<vmem>>, vector<1x64x64xbf16>
    %6 = vector.shape_cast %5 : vector<1x64x64xbf16> to vector<64x64xbf16>
    %c0_5 = arith.constant 0 : index
    %c0_6 = arith.constant 0 : index
    %c0_7 = arith.constant 0 : index
    %7 = vector.load %arg3[%c0_5, %c0_6, %c0_7] : memref<1x64x64xbf16, #tpu.memory_space<vmem>>, vector<1x64x64xbf16>
    %8 = vector.shape_cast %7 : vector<1x64x64xbf16> to vector<64x64xbf16>
    %9 = vector.extract_strided_slice %4 {offsets = [0, 0], sizes = [256, 32], strides = [1, 1]} : vector<256x64xf32> to vector<256x32xf32>
    %10 = arith.truncf %9 : vector<256x32xf32> to vector<256x32xbf16>
    %11 = vector.extract_strided_slice %6 {offsets = [0, 0], sizes = [64, 32], strides = [1, 1]} : vector<64x64xbf16> to vector<64x32xbf16>
    %12 = vector.extract_strided_slice %8 {offsets = [0, 0], sizes = [64, 32], strides = [1, 1]} : vector<64x64xbf16> to vector<64x32xbf16>
    %cst_8 = arith.constant dense<0.000000e+00> : vector<256x64xf32>
    %13 = tpu.matmul %10, %11, %cst_8 {dimension_numbers = #tpu.dot_dimension_numbers<[1], [1], [0], [0], [0, 0, 1, 0], [], []>} : vector<256x32xbf16>, vector<64x32xbf16>, vector<256x64xf32> -> vector<256x64xf32>
    %cst_9 = arith.constant dense<0xFF800000> : vector<256xf32>
    %14 = vector.multi_reduction <maximumf>, %13, %cst_9 [1] : vector<256x64xf32> to vector<256xf32>
    %15 = vector.shape_cast %14 : vector<256xf32> to vector<256x1xf32>
    %16 = vector.broadcast %15 : vector<256x1xf32> to vector<256x64xf32>
    %17 = arith.subf %13, %16 : vector<256x64xf32>
    %18 = math.exp %17 : vector<256x64xf32>
    %cst_10 = arith.constant dense<0.000000e+00> : vector<256xf32>
    %19 = vector.multi_reduction <add>, %18, %cst_10 [1] : vector<256x64xf32> to vector<256xf32>
    %20 = vector.shape_cast %19 : vector<256xf32> to vector<256x1xf32>
    %21 = tpu.reciprocal %20 {approx = true} : vector<256x1xf32> -> vector<256x1xf32>
    %22 = vector.broadcast %21 : vector<256x1xf32> to vector<256x64xf32>
    %23 = arith.mulf %18, %22 : vector<256x64xf32>
    %24 = arith.truncf %23 : vector<256x64xf32> to vector<256x64xbf16>
    %cst_11 = arith.constant dense<0.000000e+00> : vector<256x32xf32>
    %25 = tpu.matmul %24, %12, %cst_11 {dimension_numbers = #tpu.dot_dimension_numbers<[1], [0], [0], [1], [0, 0, 1, 1], [], []>} : vector<256x64xbf16>, vector<64x32xbf16>, vector<256x32xf32> -> vector<256x32xf32>
    %26 = vector.extract_strided_slice %4 {offsets = [0, 32], sizes = [256, 32], strides = [1, 1]} : vector<256x64xf32> to vector<256x32xf32>
    %27 = arith.truncf %26 : vector<256x32xf32> to vector<256x32xbf16>
    %28 = vector.extract_strided_slice %6 {offsets = [0, 32], sizes = [64, 32], strides = [1, 1]} : vector<64x64xbf16> to vector<64x32xbf16>
    %29 = vector.extract_strided_slice %8 {offsets = [0, 32], sizes = [64, 32], strides = [1, 1]} : vector<64x64xbf16> to vector<64x32xbf16>
    %cst_12 = arith.constant dense<0.000000e+00> : vector<256x64xf32>
    %30 = tpu.matmul %27, %28, %cst_12 {dimension_numbers = #tpu.dot_dimension_numbers<[1], [1], [0], [0], [0, 0, 1, 0], [], []>} : vector<256x32xbf16>, vector<64x32xbf16>, vector<256x64xf32> -> vector<256x64xf32>
    %cst_13 = arith.constant dense<0xFF800000> : vector<256xf32>
    %31 = vector.multi_reduction <maximumf>, %30, %cst_13 [1] : vector<256x64xf32> to vector<256xf32>
    %32 = vector.shape_cast %31 : vector<256xf32> to vector<256x1xf32>
    %33 = vector.broadcast %32 : vector<256x1xf32> to vector<256x64xf32>
    %34 = arith.subf %30, %33 : vector<256x64xf32>
    %35 = math.exp %34 : vector<256x64xf32>
    %cst_14 = arith.constant dense<0.000000e+00> : vector<256xf32>
    %36 = vector.multi_reduction <add>, %35, %cst_14 [1] : vector<256x64xf32> to vector<256xf32>
    %37 = vector.shape_cast %36 : vector<256xf32> to vector<256x1xf32>
    %38 = tpu.reciprocal %37 {approx = true} : vector<256x1xf32> -> vector<256x1xf32>
    %39 = vector.broadcast %38 : vector<256x1xf32> to vector<256x64xf32>
    %40 = arith.mulf %35, %39 : vector<256x64xf32>
    %41 = arith.truncf %40 : vector<256x64xf32> to vector<256x64xbf16>
    %cst_15 = arith.constant dense<0.000000e+00> : vector<256x32xf32>
    %42 = tpu.matmul %41, %29, %cst_15 {dimension_numbers = #tpu.dot_dimension_numbers<[1], [0], [0], [1], [0, 0, 1, 1], [], []>} : vector<256x64xbf16>, vector<64x32xbf16>, vector<256x32xf32> -> vector<256x32xf32>
    %43 = tpu.concatenate %25, %42 in 1 : vector<256x32xf32>, vector<256x32xf32> -> vector<256x64xf32>
    %44 = arith.truncf %43 : vector<256x64xf32> to vector<256x64xbf16>
    %c0_16 = arith.constant 0 : index
    %c0_17 = arith.constant 0 : index
    %c0_18 = arith.constant 0 : index
    %45 = vector.load %arg4[%c0_16, %c0_17, %c0_18] : memref<1x256x64xbf16, #tpu.memory_space<vmem>>, vector<1x256x64xbf16>
    %46 = vector.shape_cast %45 : vector<1x256x64xbf16> to vector<256x64xbf16>
    %47 = vector.shape_cast %44 : vector<256x64xbf16> to vector<1x256x64xbf16>
    tpu.vector_store %arg4[%c0_16, %c0_17, %c0_18], %47 {strides = array<i32>} : memref<1x256x64xbf16, #tpu.memory_space<vmem>>, vector<1x256x64xbf16>,
    return
  }
  func.func @transform_0(%arg0: i32) -> (i32, i32, i32) {
    %c0_i32 = arith.constant 0 : i32
    %c0_i32_0 = arith.constant 0 : i32
    %c0_i32_1 = arith.constant 0 : i32
    return %arg0, %c0_i32, %c0_i32_0 : i32, i32, i32
  }
  func.func @transform_1(%arg0: i32) -> (i32, i32, i32) {
    %c0_i32 = arith.constant 0 : i32
    %c0_i32_0 = arith.constant 0 : i32
    %c0_i32_1 = arith.constant 0 : i32
    return %arg0, %c0_i32, %c0_i32_0 : i32, i32, i32
  }
  func.func @transform_2(%arg0: i32) -> (i32, i32, i32) {
    %c0_i32 = arith.constant 0 : i32
    %c0_i32_0 = arith.constant 0 : i32
    %c0_i32_1 = arith.constant 0 : i32
    return %arg0, %c0_i32, %c0_i32_0 : i32, i32, i32
  }
  func.func @transform_3(%arg0: i32) -> (i32, i32, i32) {
    %c0_i32 = arith.constant 0 : i32
    %c0_i32_0 = arith.constant 0 : i32
    %c0_i32_1 = arith.constant 0 : i32
    return %arg0, %c0_i32, %c0_i32_0 : i32, i32, i32
  }
}

module attributes {stable_mosaic.version = 11 : i64} {
  func.func @_matmul_bias_kernel(%arg0: i32, %arg1: i32, %arg2: i32, %arg3: memref<256x64xbf16, #tpu.memory_space<vmem>>, %arg4: memref<64x128xbf16, #tpu.memory_space<vmem>>, %arg5: memref<1x128xf32, #tpu.memory_space<vmem>>, %arg6: memref<256x128xf32, #tpu.memory_space<vmem>>, %arg7: memref<256x128xf32, #tpu.memory_space<vmem>>) attributes {dimension_semantics = [#tpu.dimension_semantics<parallel>, #tpu.dimension_semantics<parallel>, #tpu.dimension_semantics<arbitrary>], iteration_bounds = array<i64: 2, 1, 1>, scalar_prefetch = 0 : i64, scratch_operands = 1 : i64, tpu.core_type = #tpu.core_type<tc>, window_params = [{transform_indices = @transform_0, window_bounds = array<i64: 256, 64>}, {transform_indices = @transform_1, window_bounds = array<i64: 64, 128>}, {transform_indices = @transform_2, window_bounds = array<i64: 1, 128>}, {transform_indices = @transform_3, window_bounds = array<i64: 256, 128>}]} {
    %c0_i32 = arith.constant 0 : i32
    %0 = arith.cmpi eq, %arg2, %c0_i32 : i32
    %1 = arith.extui %0 : i1 to i32
    %c0_i32_0 = arith.constant 0 : i32
    %2 = arith.cmpi ne, %1, %c0_i32_0 : i32
    scf.if %2 {
      %cst_10 = arith.constant 0.000000e+00 : f32
      %12 = vector.broadcast %cst_10 : f32 to vector<256x128xf32>
      %c0_11 = arith.constant 0 : index
      %c0_12 = arith.constant 0 : index
      %13 = vector.load %arg7[%c0_11, %c0_12] : memref<256x128xf32, #tpu.memory_space<vmem>>, vector<256x128xf32>
      tpu.vector_store %arg7[%c0_11, %c0_12], %12 {strides = array<i32>} : memref<256x128xf32, #tpu.memory_space<vmem>>, vector<256x128xf32>,
    } else {
    }
    %c0 = arith.constant 0 : index
    %c0_1 = arith.constant 0 : index
    %3 = vector.load %arg7[%c0, %c0_1] : memref<256x128xf32, #tpu.memory_space<vmem>>, vector<256x128xf32>
    %c0_2 = arith.constant 0 : index
    %c0_3 = arith.constant 0 : index
    %4 = vector.load %arg3[%c0_2, %c0_3] : memref<256x64xbf16, #tpu.memory_space<vmem>>, vector<256x64xbf16>
    %c0_4 = arith.constant 0 : index
    %c0_5 = arith.constant 0 : index
    %5 = vector.load %arg4[%c0_4, %c0_5] : memref<64x128xbf16, #tpu.memory_space<vmem>>, vector<64x128xbf16>
    %cst = arith.constant dense<0.000000e+00> : vector<256x128xf32>
    %6 = tpu.matmul %4, %5, %cst {dimension_numbers = #tpu.dot_dimension_numbers<[1], [0], [0], [1], [0, 0, 1, 1], [], []>} : vector<256x64xbf16>, vector<64x128xbf16>, vector<256x128xf32> -> vector<256x128xf32>
    %7 = arith.addf %3, %6 : vector<256x128xf32>
    %c0_6 = arith.constant 0 : index
    %c0_7 = arith.constant 0 : index
    %8 = vector.load %arg7[%c0_6, %c0_7] : memref<256x128xf32, #tpu.memory_space<vmem>>, vector<256x128xf32>
    tpu.vector_store %arg7[%c0_6, %c0_7], %7 {strides = array<i32>} : memref<256x128xf32, #tpu.memory_space<vmem>>, vector<256x128xf32>,
    %c0_i32_8 = arith.constant 0 : i32
    %9 = arith.cmpi eq, %arg2, %c0_i32_8 : i32
    %10 = arith.extui %9 : i1 to i32
    %c0_i32_9 = arith.constant 0 : i32
    %11 = arith.cmpi ne, %10, %c0_i32_9 : i32
    scf.if %11 {
      %c0_10 = arith.constant 0 : index
      %c0_11 = arith.constant 0 : index
      %12 = vector.load %arg7[%c0_10, %c0_11] : memref<256x128xf32, #tpu.memory_space<vmem>>, vector<256x128xf32>
      %c0_12 = arith.constant 0 : index
      %c0_13 = arith.constant 0 : index
      %13 = vector.load %arg5[%c0_12, %c0_13] : memref<1x128xf32, #tpu.memory_space<vmem>>, vector<1x128xf32>
      %14 = vector.broadcast %13 : vector<1x128xf32> to vector<256x128xf32>
      %15 = arith.addf %12, %14 : vector<256x128xf32>
      %c0_14 = arith.constant 0 : index
      %c0_15 = arith.constant 0 : index
      %16 = vector.load %arg6[%c0_14, %c0_15] : memref<256x128xf32, #tpu.memory_space<vmem>>, vector<256x128xf32>
      tpu.vector_store %arg6[%c0_14, %c0_15], %15 {strides = array<i32>} : memref<256x128xf32, #tpu.memory_space<vmem>>, vector<256x128xf32>,
    } else {
    }
    return
  }
  func.func @transform_0(%arg0: i32, %arg1: i32, %arg2: i32) -> (i32, i32) {
    %c0_i32 = arith.constant 0 : i32
    return %arg0, %arg2 : i32, i32
  }
  func.func @transform_1(%arg0: i32, %arg1: i32, %arg2: i32) -> (i32, i32) {
    %c0_i32 = arith.constant 0 : i32
    return %arg2, %arg1 : i32, i32
  }
  func.func @transform_2(%arg0: i32, %arg1: i32, %arg2: i32) -> (i32, i32) {
    %c0_i32 = arith.constant 0 : i32
    %c0_i32_0 = arith.constant 0 : i32
    return %c0_i32, %arg1 : i32, i32
  }
  func.func @transform_3(%arg0: i32, %arg1: i32, %arg2: i32) -> (i32, i32) {
    %c0_i32 = arith.constant 0 : i32
    return %arg0, %arg1 : i32, i32
  }
}

</mosaic_0001>

<llo_original>
// kernel: attention_forward.6
$region0: #{attention_forward.6}
  #allocation0 [shape = 'u32[]', space=smem, size = 0x4, offset = 0x4, fixed_abs, tag = 'smem constant byte address 0x4 - core index']
  #allocation1 [shape = 'u32[72,128]{1,0:T(1,128)}', space=vmem, size = 0x9000, scoped, tag = 'internal scratch']
  #allocation2 [shape = 'f32[128,128]{1,0:T(8,128)}', space=vmem, size = 0x10000, scoped, tag = 'scratch operand']
  %s0 = inlined_call_operand.vmem [shape: bf16[128,256], index: 0, kind: input, shape index: {}]
  %s1 = inlined_call_operand.vmem [shape: bf16[256,128], index: 1, kind: input, shape index: {}]
  %s2 = inlined_call_operand.vmem [shape: f32[1,128], index: 2, kind: input, shape index: {}]
  %s3 = inlined_call_operand.vmem [shape: bf16[128,128], index: 3, kind: output, shape index: {}]
  %s4 = sld [smem:[#allocation0]]
  $region30: #{attention_forward.6} parent=0
    _
  %s6 = ssub.s32 1, %s4
  %s7 = scalar_select 0, %s6, %s4
  // Predicated region
  $region2: #{attention_forward.6} parent=0 // pred_check
    _
  $region3: #{attention_forward.6} parent=0 // pred_check_branch
    %9 = sbr.rel (0) target = $region5
  $region4: #{attention_forward.6} parent=0 // pred_region
    _
  $region5: #{attention_forward.6} parent=0 // pred_fallthru
    _
  // Predicated region
  $region6: #{attention_forward.6} parent=0 // pred_check
    _
  $region7: #{attention_forward.6} parent=0 // pred_check_branch
    %11 = sbr.rel (0) target = $region9
  $region8: #{attention_forward.6} parent=0 // pred_region
    _
  $region9: #{attention_forward.6} parent=0 // pred_fallthru
    _
  // Predicated region
  $region10: #{attention_forward.6} parent=0 // pred_check
    _
  $region11: #{attention_forward.6} parent=0 // pred_check_branch
    %13 = sbr.rel (0) target = $region13
  $region12: #{attention_forward.6} parent=0 // pred_region
    _
  $region13: #{attention_forward.6} parent=0 // pred_fallthru
    _
  %p14 = scmp.eq.s32.totalorder 0, 0
  // Predicated region
  $region14: #{attention_forward.6} parent=0 // pred_check
    %p15 = pneg %p14
  $region15: #{attention_forward.6} parent=0 // pred_check_branch
    %17 = sbr.rel (%p15) target = $region17
  $region16: #{attention_forward.6} parent=0 // pred_region
    %18 = vst [vmem:[#allocation2] sm:$0xff] 0.0
    %19 = vst [vmem:[#allocation2 + $0x8] sm:$0xff] 0.0
    %20 = vst [vmem:[#allocation2 + $0x10] sm:$0xff] 0.0
    %21 = vst [vmem:[#allocation2 + $0x18] sm:$0xff] 0.0
    %22 = vst [vmem:[#allocation2 + $0x20] sm:$0xff] 0.0
    %23 = vst [vmem:[#allocation2 + $0x28] sm:$0xff] 0.0
    %24 = vst [vmem:[#allocation2 + $0x30] sm:$0xff] 0.0
    %25 = vst [vmem:[#allocation2 + $0x38] sm:$0xff] 0.0
    %26 = vst [vmem:[#allocation2 + $0x40] sm:$0xff] 0.0
    %27 = vst [vmem:[#allocation2 + $0x48] sm:$0xff] 0.0
    %28 = vst [vmem:[#allocation2 + $0x50] sm:$0xff] 0.0
    %29 = vst [vmem:[#allocation2 + $0x58] sm:$0xff] 0.0
    %30 = vst [vmem:[#allocation2 + $0x60] sm:$0xff] 0.0
    %31 = vst [vmem:[#allocation2 + $0x68] sm:$0xff] 0.0
    %32 = vst [vmem:[#allocation2 + $0x70] sm:$0xff] 0.0
    %33 = vst [vmem:[#allocation2 + $0x78] sm:$0xff] 0.0
  $region17: #{attention_forward.6} parent=0 // pred_fallthru
    _
  %v34 = vld [vmem:[#allocation2] sm:$0xff]
  %v35 = vld [vmem:[#allocation2 + $0x8] sm:$0xff]
  %v36 = vld [vmem:[#allocation2 + $0x10] sm:$0xff]
  %v37 = vld [vmem:[#allocation2 + $0x18] sm:$0xff]
  %v38 = vld [vmem:[#allocation2 + $0x20] sm:$0xff]
  %v39 = vld [vmem:[#allocation2 + $0x28] sm:$0xff]
  %v40 = vld [vmem:[#allocation2 + $0x30] sm:$0xff]
  %v41 = vld [vmem:[#allocation2 + $0x38] sm:$0xff]
  %v42 = vld [vmem:[#allocation2 + $0x40] sm:$0xff]
  %v43 = vld [vmem:[#allocation2 + $0x48] sm:$0xff]
  %v44 = vld [vmem:[#allocation2 + $0x50] sm:$0xff]
  %v45 = vld [vmem:[#allocation2 + $0x58] sm:$0xff]
  %v46 = vld [vmem:[#allocation2 + $0x60] sm:$0xff]
  %v47 = vld [vmem:[#allocation2 + $0x68] sm:$0xff]
  %v48 = vld [vmem:[#allocation2 + $0x70] sm:$0xff]
  %v49 = vld [vmem:[#allocation2 + $0x78] sm:$0xff]
  %v50 = vld [vmem:[%s0] sm:$0xff]
  %v51 = vld [vmem:[%s0 + $0x8] sm:$0xff]
  %v52 = vld [vmem:[%s0 + $0x10] sm:$0xff]
  %v53 = vld [vmem:[%s0 + $0x18] sm:$0xff]
  %v54 = vld [vmem:[%s0 + $0x20] sm:$0xff]
  %v55 = vld [vmem:[%s0 + $0x28] sm:$0xff]
  %v56 = vld [vmem:[%s0 + $0x30] sm:$0xff]
  %v57 = vld [vmem:[%s0 + $0x38] sm:$0xff]
  %v58 = vld [vmem:[%s0 + $0x40] sm:$0xff]
  %v59 = vld [vmem:[%s0 + $0x48] sm:$0xff]
  %v60 = vld [vmem:[%s0 + $0x50] sm:$0xff]
  %v61 = vld [vmem:[%s0 + $0x58] sm:$0xff]
  %v62 = vld [vmem:[%s0 + $0x60] sm:$0xff]
  %v63 = vld [vmem:[%s0 + $0x68] sm:$0xff]
  %v64 = vld [vmem:[%s0 + $0x70] sm:$0xff]
  %v65 = vld [vmem:[%s0 + $0x78] sm:$0xff]
  %v66 = vld [vmem:[%s1] sm:$0xf]
  %v67 = vld [vmem:[%s1 + $0x4] sm:$0xf]
  %v68 = vld [vmem:[%s1 + $0x8] sm:$0xf]
  %v69 = vld [vmem:[%s1 + $0xc] sm:$0xf]
  %v70 = vld [vmem:[%s1 + $0x10] sm:$0xf]
  %v71 = vld [vmem:[%s1 + $0x14] sm:$0xf]
  %v72 = vld [vmem:[%s1 + $0x18] sm:$0xf]
  %v73 = vld [vmem:[%s1 + $0x1c] sm:$0xf]
  %v74 = vld [vmem:[%s1 + $0x20] sm:$0xf]
  %v75 = vld [vmem:[%s1 + $0x24] sm:$0xf]
  %v76 = vld [vmem:[%s1 + $0x28] sm:$0xf]
  %v77 = vld [vmem:[%s1 + $0x2c] sm:$0xf]
  %v78 = vld [vmem:[%s1 + $0x30] sm:$0xf]
  %v79 = vld [vmem:[%s1 + $0x34] sm:$0xf]
  %v80 = vld [vmem:[%s1 + $0x38] sm:$0xf]
  %v81 = vld [vmem:[%s1 + $0x3c] sm:$0xf]
  %v82 = vld [vmem:[%s1 + $0x40] sm:$0xf]
  %v83 = vld [vmem:[%s1 + $0x44] sm:$0xf]
  %v84 = vld [vmem:[%s1 + $0x48] sm:$0xf]
  %v85 = vld [vmem:[%s1 + $0x4c] sm:$0xf]
  %v86 = vld [vmem:[%s1 + $0x50] sm:$0xf]
  %v87 = vld [vmem:[%s1 + $0x54] sm:$0xf]
  %v88 = vld [vmem:[%s1 + $0x58] sm:$0xf]
  %v89 = vld [vmem:[%s1 + $0x5c] sm:$0xf]
  %v90 = vld [vmem:[%s1 + $0x60] sm:$0xf]
  %v91 = vld [vmem:[%s1 + $0x64] sm:$0xf]
  %v92 = vld [vmem:[%s1 + $0x68] sm:$0xf]
  %v93 = vld [vmem:[%s1 + $0x6c] sm:$0xf]
  %v94 = vld [vmem:[%s1 + $0x70] sm:$0xf]
  %v95 = vld [vmem:[%s1 + $0x74] sm:$0xf]
  %v96 = vld [vmem:[%s1 + $0x78] sm:$0xf]
  %v97 = vld [vmem:[%s1 + $0x7c] sm:$0xf]
  %v114 = vunpack.c.l.b16 %v50
  %v115 = vunpack.c.h.b16 %v50
  %v116 = vunpack.c.l.b16 %v51
  %v117 = vunpack.c.h.b16 %v51
  %v118 = vunpack.c.l.b16 %v52
  %v119 = vunpack.c.h.b16 %v52
  %v120 = vunpack.c.l.b16 %v53
  %v121 = vunpack.c.h.b16 %v53
  %v122 = vunpack.c.l.b16 %v54
  %v123 = vunpack.c.h.b16 %v54
  %v124 = vunpack.c.l.b16 %v55
  %v125 = vunpack.c.h.b16 %v55
  %v126 = vunpack.c.l.b16 %v56
  %v127 = vunpack.c.h.b16 %v56
  %v128 = vunpack.c.l.b16 %v57
  %v129 = vunpack.c.h.b16 %v57
  %v130 = vunpack.c.l.b16 %v58
  %v131 = vunpack.c.h.b16 %v58
  %v132 = vunpack.c.l.b16 %v59
  %v133 = vunpack.c.h.b16 %v59
  %v134 = vunpack.c.l.b16 %v60
  %v135 = vunpack.c.h.b16 %v60
  %v136 = vunpack.c.l.b16 %v61
  %v137 = vunpack.c.h.b16 %v61
  %v138 = vunpack.c.l.b16 %v62
  %v139 = vunpack.c.h.b16 %v62
  %v140 = vunpack.c.l.b16 %v63
  %v141 = vunpack.c.h.b16 %v63
  %v142 = vunpack.c.l.b16 %v64
  %v143 = vunpack.c.h.b16 %v64
  %v144 = vunpack.c.l.b16 %v65
  %v145 = vunpack.c.h.b16 %v65
  %v146 = vpack.c.b16 %v116, %v114
  %v147 = vpack.c.b16 %v117, %v115
  %v148 = vpack.c.b16 %v120, %v118
  %v149 = vpack.c.b16 %v121, %v119
  %v150 = vpack.c.b16 %v124, %v122
  %v151 = vpack.c.b16 %v125, %v123
  %v152 = vpack.c.b16 %v128, %v126
  %v153 = vpack.c.b16 %v129, %v127
  %v154 = vpack.c.b16 %v132, %v130
  %v155 = vpack.c.b16 %v133, %v131
  %v156 = vpack.c.b16 %v136, %v134
  %v157 = vpack.c.b16 %v137, %v135
  %v158 = vpack.c.b16 %v140, %v138
  %v159 = vpack.c.b16 %v141, %v139
  %v160 = vpack.c.b16 %v144, %v142
  %v161 = vpack.c.b16 %v145, %v143
  %v210 = vunpack.c.l.b16 %v66
  %v211 = vunpack.c.l.b16 %v67
  %v212 = vunpack.c.l.b16 %v68
  %v213 = vunpack.c.l.b16 %v69
  %v214 = vunpack.c.l.b16 %v70
  %v215 = vunpack.c.l.b16 %v71
  %v216 = vunpack.c.l.b16 %v72
  %v217 = vunpack.c.l.b16 %v73
  %v218 = vunpack.c.l.b16 %v74
  %v219 = vunpack.c.l.b16 %v75
  %v220 = vunpack.c.l.b16 %v76
  %v221 = vunpack.c.l.b16 %v77
  %v222 = vunpack.c.l.b16 %v78
  %v223 = vunpack.c.l.b16 %v79
  %v224 = vunpack.c.l.b16 %v80
  %v225 = vunpack.c.l.b16 %v81
  %v226 = vunpack.c.l.b16 %v82
  %v227 = vunpack.c.l.b16 %v83
  %v228 = vunpack.c.l.b16 %v84
  %v229 = vunpack.c.l.b16 %v85
  %v230 = vunpack.c.l.b16 %v86
  %v231 = vunpack.c.l.b16 %v87
  %v232 = vunpack.c.l.b16 %v88
  %v233 = vunpack.c.l.b16 %v89
  %v234 = vunpack.c.l.b16 %v90
  %v235 = vunpack.c.l.b16 %v91
  %v236 = vunpack.c.l.b16 %v92
  %v237 = vunpack.c.l.b16 %v93
  %v238 = vunpack.c.l.b16 %v94
  %v239 = vunpack.c.l.b16 %v95
  %v240 = vunpack.c.l.b16 %v96
  %v241 = vunpack.c.l.b16 %v97
  %v242 = vpack.c.b16 %v211, %v210
  %v243 = vpack.c.b16 %v213, %v212
  %v244 = vpack.c.b16 %v215, %v214
  %v245 = vpack.c.b16 %v217, %v216
  %v246 = vpack.c.b16 %v219, %v218
  %v247 = vpack.c.b16 %v221, %v220
  %v248 = vpack.c.b16 %v223, %v222
  %v249 = vpack.c.b16 %v225, %v224
  %v250 = vpack.c.b16 %v227, %v226
  %v251 = vpack.c.b16 %v229, %v228
  %v252 = vpack.c.b16 %v231, %v230
  %v253 = vpack.c.b16 %v233, %v232
  %v254 = vpack.c.b16 %v235, %v234
  %v255 = vpack.c.b16 %v237, %v236
  %v256 = vpack.c.b16 %v239, %v238
  %v257 = vpack.c.b16 %v241, %v240
  %274 = vmatpush.bf16.msra.mxu0 %v249
  %275 = vmatpush.bf16.msra.mxu0 %v248
  %276 = vmatpush.bf16.msra.mxu0 %v247
  %277 = vmatpush.bf16.msra.mxu0 %v246
  %278 = vmatpush.bf16.msra.mxu0 %v245
  %279 = vmatpush.bf16.msra.mxu0 %v244
  %280 = vmatpush.bf16.msra.mxu0 %v243
  %281 = vmatpush.bf16.msra.mxu0 %v242
  %282 = vmatmul.bf16.gmra.mxu0 %v146
  %v283 = vpop.f32.mrf.mxu0
  %v284 = vadd.f32 0.0, %v283
  %v285 = vpop.f32.mrf.mxu0
  %v286 = vadd.f32 0.0, %v285
  %287 = vmatmul.bf16.gmra.mxu0 %v148
  %v288 = vpop.f32.mrf.mxu0
  %v289 = vadd.f32 0.0, %v288
  %v290 = vpop.f32.mrf.mxu0
  %v291 = vadd.f32 0.0, %v290
  %292 = vmatmul.bf16.gmra.mxu0 %v150
  %v293 = vpop.f32.mrf.mxu0
  %v294 = vadd.f32 0.0, %v293
  %v295 = vpop.f32.mrf.mxu0
  %v296 = vadd.f32 0.0, %v295
  %297 = vmatmul.bf16.gmra.mxu0 %v152
  %v298 = vpop.f32.mrf.mxu0
  %v299 = vadd.f32 0.0, %v298
  %v300 = vpop.f32.mrf.mxu0
  %v301 = vadd.f32 0.0, %v300
  %302 = vmatmul.bf16.gmra.mxu0 %v154
  %v303 = vpop.f32.mrf.mxu0
  %v304 = vadd.f32 0.0, %v303
  %v305 = vpop.f32.mrf.mxu0
  %v306 = vadd.f32 0.0, %v305
  %307 = vmatmul.bf16.gmra.mxu0 %v156
  %v308 = vpop.f32.mrf.mxu0
  %v309 = vadd.f32 0.0, %v308
  %v310 = vpop.f32.mrf.mxu0
  %v311 = vadd.f32 0.0, %v310
  %312 = vmatmul.bf16.gmra.mxu0 %v158
  %v313 = vpop.f32.mrf.mxu0
  %v314 = vadd.f32 0.0, %v313
  %v315 = vpop.f32.mrf.mxu0
  %v316 = vadd.f32 0.0, %v315
  %317 = vmatmul.bf16.gmra.mxu0 %v160
  %v318 = vpop.f32.mrf.mxu0
  %v319 = vadd.f32 0.0, %v318
  %v320 = vpop.f32.mrf.mxu0
  %v321 = vadd.f32 0.0, %v320
  %322 = vdwg.mxu0
  %323 = vmatpush.bf16.msra.mxu0 %v257
  %324 = vmatpush.bf16.msra.mxu0 %v256
  %325 = vmatpush.bf16.msra.mxu0 %v255
  %326 = vmatpush.bf16.msra.mxu0 %v254
  %327 = vmatpush.bf16.msra.mxu0 %v253
  %328 = vmatpush.bf16.msra.mxu0 %v252
  %329 = vmatpush.bf16.msra.mxu0 %v251
  %330 = vmatpush.bf16.msra.mxu0 %v250
  %331 = vmatmul.bf16.gmra.mxu0 %v147
  %v332 = vpop.f32.mrf.mxu0
  %v333 = vadd.f32 %v284, %v332
  %v334 = vpop.f32.mrf.mxu0
  %v335 = vadd.f32 %v286, %v334
  %336 = vmatmul.bf16.gmra.mxu0 %v149
  %v337 = vpop.f32.mrf.mxu0
  %v338 = vadd.f32 %v289, %v337
  %v339 = vpop.f32.mrf.mxu0
  %v340 = vadd.f32 %v291, %v339
  %341 = vmatmul.bf16.gmra.mxu0 %v151
  %v342 = vpop.f32.mrf.mxu0
  %v343 = vadd.f32 %v294, %v342
  %v344 = vpop.f32.mrf.mxu0
  %v345 = vadd.f32 %v296, %v344
  %346 = vmatmul.bf16.gmra.mxu0 %v153
  %v347 = vpop.f32.mrf.mxu0
  %v348 = vadd.f32 %v299, %v347
  %v349 = vpop.f32.mrf.mxu0
  %v350 = vadd.f32 %v301, %v349
  %351 = vmatmul.bf16.gmra.mxu0 %v155
  %v352 = vpop.f32.mrf.mxu0
  %v353 = vadd.f32 %v304, %v352
  %v354 = vpop.f32.mrf.mxu0
  %v355 = vadd.f32 %v306, %v354
  %356 = vmatmul.bf16.gmra.mxu0 %v157
  %v357 = vpop.f32.mrf.mxu0
  %v358 = vadd.f32 %v309, %v357
  %v359 = vpop.f32.mrf.mxu0
  %v360 = vadd.f32 %v311, %v359
  %361 = vmatmul.bf16.gmra.mxu0 %v159
  %v362 = vpop.f32.mrf.mxu0
  %v363 = vadd.f32 %v314, %v362
  %v364 = vpop.f32.mrf.mxu0
  %v365 = vadd.f32 %v316, %v364
  %366 = vmatmul.bf16.gmra.mxu0 %v161
  %v367 = vpop.f32.mrf.mxu0
  %v368 = vadd.f32 %v319, %v367
  %v369 = vpop.f32.mrf.mxu0
  %v370 = vadd.f32 %v321, %v369
  %371 = vdwg.mxu0
  %v372 = vadd.f32 %v34, %v333
  %v373 = vadd.f32 %v35, %v335
  %v374 = vadd.f32 %v36, %v338
  %v375 = vadd.f32 %v37, %v340
  %v376 = vadd.f32 %v38, %v343
  %v377 = vadd.f32 %v39, %v345
  %v378 = vadd.f32 %v40, %v348
  %v379 = vadd.f32 %v41, %v350
  %v380 = vadd.f32 %v42, %v353
  %v381 = vadd.f32 %v43, %v355
  %v382 = vadd.f32 %v44, %v358
  %v383 = vadd.f32 %v45, %v360
  %v384 = vadd.f32 %v46, %v363
  %v385 = vadd.f32 %v47, %v365
  %v386 = vadd.f32 %v48, %v368
  %v387 = vadd.f32 %v49, %v370
  %388 = vst [vmem:[#allocation2] sm:$0xff] %v372
  %389 = vst [vmem:[#allocation2 + $0x8] sm:$0xff] %v373
  %390 = vst [vmem:[#allocation2 + $0x10] sm:$0xff] %v374
  %391 = vst [vmem:[#allocation2 + $0x18] sm:$0xff] %v375
  %392 = vst [vmem:[#allocation2 + $0x20] sm:$0xff] %v376
  %393 = vst [vmem:[#allocation2 + $0x28] sm:$0xff] %v377
  %394 = vst [vmem:[#allocation2 + $0x30] sm:$0xff] %v378
  %395 = vst [vmem:[#allocation2 + $0x38] sm:$0xff] %v379
  %396 = vst [vmem:[#allocation2 + $0x40] sm:$0xff] %v380
  %397 = vst [vmem:[#allocation2 + $0x48] sm:$0xff] %v381
  %398 = vst [vmem:[#allocation2 + $0x50] sm:$0xff] %v382
  %399 = vst [vmem:[#allocation2 + $0x58] sm:$0xff] %v383
  %400 = vst [vmem:[#allocation2 + $0x60] sm:$0xff] %v384
  %401 = vst [vmem:[#allocation2 + $0x68] sm:$0xff] %v385
  %402 = vst [vmem:[#allocation2 + $0x70] sm:$0xff] %v386
  %403 = vst [vmem:[#allocation2 + $0x78] sm:$0xff] %v387
  // Predicated region
  $region18: #{attention_forward.6} parent=0 // pred_check
    %p404 = pneg %p14
  $region19: #{attention_forward.6} parent=0 // pred_check_branch
    %406 = sbr.rel (%p404) target = $region21
  $region20: #{attention_forward.6} parent=0 // pred_region
    %v407 = vld [vmem:[#allocation2] sm:$0xff]
    %v408 = vld [vmem:[#allocation2 + $0x8] sm:$0xff]
    %v409 = vld [vmem:[#allocation2 + $0x10] sm:$0xff]
    %v410 = vld [vmem:[#allocation2 + $0x18] sm:$0xff]
    %v411 = vld [vmem:[#allocation2 + $0x20] sm:$0xff]
    %v412 = vld [vmem:[#allocation2 + $0x28] sm:$0xff]
    %v413 = vld [vmem:[#allocation2 + $0x30] sm:$0xff]
    %v414 = vld [vmem:[#allocation2 + $0x38] sm:$0xff]
    %v415 = vld [vmem:[#allocation2 + $0x40] sm:$0xff]
    %v416 = vld [vmem:[#allocation2 + $0x48] sm:$0xff]
    %v417 = vld [vmem:[#allocation2 + $0x50] sm:$0xff]
    %v418 = vld [vmem:[#allocation2 + $0x58] sm:$0xff]
    %v419 = vld [vmem:[#allocation2 + $0x60] sm:$0xff]
    %v420 = vld [vmem:[#allocation2 + $0x68] sm:$0xff]
    %v421 = vld [vmem:[#allocation2 + $0x70] sm:$0xff]
    %v422 = vld [vmem:[#allocation2 + $0x78] sm:$0xff]
    %v423 = vld [vmem:[%s2] sm:$0x1]
    %v425 = vperm.slane %v423, 0
    %v427 = vadd.f32 %v407, %v425
    %v428 = vadd.f32 %v408, %v425
    %v429 = vadd.f32 %v409, %v425
    %v430 = vadd.f32 %v410, %v425
    %v431 = vadd.f32 %v411, %v425
    %v432 = vadd.f32 %v412, %v425
    %v433 = vadd.f32 %v413, %v425
    %v434 = vadd.f32 %v414, %v425
    %v435 = vadd.f32 %v415, %v425
    %v436 = vadd.f32 %v416, %v425
    %v437 = vadd.f32 %v417, %v425
    %v438 = vadd.f32 %v418, %v425
    %v439 = vadd.f32 %v419, %v425
    %v440 = vadd.f32 %v420, %v425
    %v441 = vadd.f32 %v421, %v425
    %v442 = vadd.f32 %v422, %v425
    %v443 = vpack.c.bf16 %v427, %v427
    %v444 = vpack.c.bf16 %v428, %v428
    %v445 = vpack.c.bf16 %v429, %v429
    %v446 = vpack.c.bf16 %v430, %v430
    %v447 = vpack.c.bf16 %v431, %v431
    %v448 = vpack.c.bf16 %v432, %v432
    %v449 = vpack.c.bf16 %v433, %v433
    %v450 = vpack.c.bf16 %v434, %v434
    %v451 = vpack.c.bf16 %v435, %v435
    %v452 = vpack.c.bf16 %v436, %v436
    %v453 = vpack.c.bf16 %v437, %v437
    %v454 = vpack.c.bf16 %v438, %v438
    %v455 = vpack.c.bf16 %v439, %v439
    %v456 = vpack.c.bf16 %v440, %v440
    %v457 = vpack.c.bf16 %v441, %v441
    %v458 = vpack.c.bf16 %v442, %v442
    %459 = vst [vmem:[%s3] sm:$0xf] %v443
    %460 = vst [vmem:[%s3 + $0x4] sm:$0xf] %v444
    %461 = vst [vmem:[%s3 + $0x8] sm:$0xf] %v445
    %462 = vst [vmem:[%s3 + $0xc] sm:$0xf] %v446
    %463 = vst [vmem:[%s3 + $0x10] sm:$0xf] %v447
    %464 = vst [vmem:[%s3 + $0x14] sm:$0xf] %v448
    %465 = vst [vmem:[%s3 + $0x18] sm:$0xf] %v449
    %466 = vst [vmem:[%s3 + $0x1c] sm:$0xf] %v450
    %467 = vst [vmem:[%s3 + $0x20] sm:$0xf] %v451
    %468 = vst [vmem:[%s3 + $0x24] sm:$0xf] %v452
    %469 = vst [vmem:[%s3 + $0x28] sm:$0xf] %v453
    %470 = vst [vmem:[%s3 + $0x2c] sm:$0xf] %v454
    %471 = vst [vmem:[%s3 + $0x30] sm:$0xf] %v455
    %472 = vst [vmem:[%s3 + $0x34] sm:$0xf] %v456
    %473 = vst [vmem:[%s3 + $0x38] sm:$0xf] %v457
    %474 = vst [vmem:[%s3 + $0x3c] sm:$0xf] %v458
  $region21: #{attention_forward.6} parent=0 // pred_fallthru
    _
  // Predicated region
  $region22: #{attention_forward.6} parent=0 // pred_check
    _
  $region23: #{attention_forward.6} parent=0 // pred_check_branch
    %476 = sbr.rel (0) target = $region25
  $region24: #{attention_forward.6} parent=0 // pred_region
    _
  $region25: #{attention_forward.6} parent=0 // pred_fallthru
    _
  // Predicated region
  $region26: #{attention_forward.6} parent=0 // pred_check
    _
  $region27: #{attention_forward.6} parent=0 // pred_check_branch
    %478 = sbr.rel (0) target = $region29
  $region28: #{attention_forward.6} parent=0 // pred_region
    _
  $region29: #{attention_forward.6} parent=0 // pred_fallthru
    _

// kernel: attention_forward.7
$region0: #{attention_forward.7}
  #allocation0 [shape = 'u32[]', space=smem, size = 0x4, offset = 0x4, fixed_abs, tag = 'smem constant byte address 0x4 - core index']
  #allocation1 [shape = 'u32[72,128]{1,0:T(1,128)}', space=vmem, size = 0x9000, scoped, tag = 'internal scratch']
  %s0 = inlined_call_operand.vmem [shape: bf16[128,64], index: 0, kind: input, shape index: {}]
  %s1 = inlined_call_operand.vmem [shape: f32[1,64], index: 1, kind: input, shape index: {}]
  %s2 = inlined_call_operand.vmem [shape: f32[1,64], index: 2, kind: input, shape index: {}]
  %s3 = inlined_call_operand.vmem [shape: bf16[64,128], index: 3, kind: input, shape index: {}]
  %s4 = inlined_call_operand.vmem [shape: f32[1,128], index: 4, kind: input, shape index: {}]
  %s5 = inlined_call_operand.vmem [shape: bf16[128,128], index: 5, kind: output, shape index: {}]
  %s6 = sld [smem:[#allocation0]]
  $region30: #{attention_forward.7} parent=0
    _
  %s8 = ssub.s32 1, %s6
  %s9 = scalar_select 0, %s8, %s6
  // Predicated region
  $region2: #{attention_forward.7} parent=0 // pred_check
    _
  $region3: #{attention_forward.7} parent=0 // pred_check_branch
    %11 = sbr.rel (0) target = $region5
  $region4: #{attention_forward.7} parent=0 // pred_region
    _
  $region5: #{attention_forward.7} parent=0 // pred_fallthru
    _
  // Predicated region
  $region6: #{attention_forward.7} parent=0 // pred_check
    _
  $region7: #{attention_forward.7} parent=0 // pred_check_branch
    %13 = sbr.rel (0) target = $region9
  $region8: #{attention_forward.7} parent=0 // pred_region
    _
  $region9: #{attention_forward.7} parent=0 // pred_fallthru
    _
  // Predicated region
  $region10: #{attention_forward.7} parent=0 // pred_check
    _
  $region11: #{attention_forward.7} parent=0 // pred_check_branch
    %15 = sbr.rel (0) target = $region13
  $region12: #{attention_forward.7} parent=0 // pred_region
    _
  $region13: #{attention_forward.7} parent=0 // pred_fallthru
    _
  // Predicated region
  $region14: #{attention_forward.7} parent=0 // pred_check
    _
  $region15: #{attention_forward.7} parent=0 // pred_check_branch
    %17 = sbr.rel (0) target = $region17
  $region16: #{attention_forward.7} parent=0 // pred_region
    _
  $region17: #{attention_forward.7} parent=0 // pred_fallthru
    _
  // Predicated region
  $region18: #{attention_forward.7} parent=0 // pred_check
    _
  $region19: #{attention_forward.7} parent=0 // pred_check_branch
    %19 = sbr.rel (0) target = $region21
  $region20: #{attention_forward.7} parent=0 // pred_region
    _
  $region21: #{attention_forward.7} parent=0 // pred_fallthru
    _
  %v21 = vld [vmem:[%s0] sm:$0xf]
  %v22 = vld [vmem:[%s0 + $0x4] sm:$0xf]
  %v23 = vld [vmem:[%s0 + $0x8] sm:$0xf]
  %v24 = vld [vmem:[%s0 + $0xc] sm:$0xf]
  %v25 = vld [vmem:[%s0 + $0x10] sm:$0xf]
  %v26 = vld [vmem:[%s0 + $0x14] sm:$0xf]
  %v27 = vld [vmem:[%s0 + $0x18] sm:$0xf]
  %v28 = vld [vmem:[%s0 + $0x1c] sm:$0xf]
  %v29 = vld [vmem:[%s0 + $0x20] sm:$0xf]
  %v30 = vld [vmem:[%s0 + $0x24] sm:$0xf]
  %v31 = vld [vmem:[%s0 + $0x28] sm:$0xf]
  %v32 = vld [vmem:[%s0 + $0x2c] sm:$0xf]
  %v33 = vld [vmem:[%s0 + $0x30] sm:$0xf]
  %v34 = vld [vmem:[%s0 + $0x34] sm:$0xf]
  %v35 = vld [vmem:[%s0 + $0x38] sm:$0xf]
  %v36 = vld [vmem:[%s0 + $0x3c] sm:$0xf]
  %v37 = vunpack.c.l.bf16 %v21
  %v38 = vunpack.c.l.bf16 %v22
  %v39 = vunpack.c.l.bf16 %v23
  %v40 = vunpack.c.l.bf16 %v24
  %v41 = vunpack.c.l.bf16 %v25
  %v42 = vunpack.c.l.bf16 %v26
  %v43 = vunpack.c.l.bf16 %v27
  %v44 = vunpack.c.l.bf16 %v28
  %v45 = vunpack.c.l.bf16 %v29
  %v46 = vunpack.c.l.bf16 %v30
  %v47 = vunpack.c.l.bf16 %v31
  %v48 = vunpack.c.l.bf16 %v32
  %v49 = vunpack.c.l.bf16 %v33
  %v50 = vunpack.c.l.bf16 %v34
  %v51 = vunpack.c.l.bf16 %v35
  %v52 = vunpack.c.l.bf16 %v36
  %vm53 = vcmask 523264
  %v54 = vsel %vm53, %v37, 0.0
  %55 = vadd.xlane.f32.xlu0 %v54
  %v56 = vpop.xlane.xlu0 %55
  %v57 = vsel %vm53, %v38, 0.0
  %58 = vadd.xlane.f32.xlu0 %v57
  %v59 = vpop.xlane.xlu0 %58
  %v60 = vsel %vm53, %v39, 0.0
  %61 = vadd.xlane.f32.xlu0 %v60
  %v62 = vpop.xlane.xlu0 %61
  %v63 = vsel %vm53, %v40, 0.0
  %64 = vadd.xlane.f32.xlu0 %v63
  %v65 = vpop.xlane.xlu0 %64
  %v66 = vsel %vm53, %v41, 0.0
  %67 = vadd.xlane.f32.xlu0 %v66
  %v68 = vpop.xlane.xlu0 %67
  %v69 = vsel %vm53, %v42, 0.0
  %70 = vadd.xlane.f32.xlu0 %v69
  %v71 = vpop.xlane.xlu0 %70
  %v72 = vsel %vm53, %v43, 0.0
  %73 = vadd.xlane.f32.xlu0 %v72
  %v74 = vpop.xlane.xlu0 %73
  %v75 = vsel %vm53, %v44, 0.0
  %76 = vadd.xlane.f32.xlu0 %v75
  %v77 = vpop.xlane.xlu0 %76
  %v78 = vsel %vm53, %v45, 0.0
  %79 = vadd.xlane.f32.xlu0 %v78
  %v80 = vpop.xlane.xlu0 %79
  %v81 = vsel %vm53, %v46, 0.0
  %82 = vadd.xlane.f32.xlu0 %v81
  %v83 = vpop.xlane.xlu0 %82
  %v84 = vsel %vm53, %v47, 0.0
  %85 = vadd.xlane.f32.xlu0 %v84
  %v86 = vpop.xlane.xlu0 %85
  %v87 = vsel %vm53, %v48, 0.0
  %88 = vadd.xlane.f32.xlu0 %v87
  %v89 = vpop.xlane.xlu0 %88
  %v90 = vsel %vm53, %v49, 0.0
  %91 = vadd.xlane.f32.xlu0 %v90
  %v92 = vpop.xlane.xlu0 %91
  %v93 = vsel %vm53, %v50, 0.0
  %94 = vadd.xlane.f32.xlu0 %v93
  %v95 = vpop.xlane.xlu0 %94
  %v96 = vsel %vm53, %v51, 0.0
  %97 = vadd.xlane.f32.xlu0 %v96
  %v98 = vpop.xlane.xlu0 %97
  %v99 = vsel %vm53, %v52, 0.0
  %100 = vadd.xlane.f32.xlu0 %v99
  %v101 = vpop.xlane.xlu0 %100
  %v102 = vrcp.pop 64.0
  %v103 = vmul.f32 64.0, %v102
  %v104 = vsub.f32 1.0, %v103
  %v105 = vmul.f32 %v102, %v104
  %v106 = vadd.f32 %v102, %v105
  %vm107 = vweird.f32 %v102
  %v108 = vsel %vm107, %v102, %v106
  %v109 = vmul.f32 %v56, %v108
  %v110 = vmul.f32 %v59, %v108
  %v111 = vmul.f32 %v62, %v108
  %v112 = vmul.f32 %v65, %v108
  %v113 = vmul.f32 %v68, %v108
  %v114 = vmul.f32 %v71, %v108
  %v115 = vmul.f32 %v74, %v108
  %v116 = vmul.f32 %v77, %v108
  %v117 = vmul.f32 %v80, %v108
  %v118 = vmul.f32 %v83, %v108
  %v119 = vmul.f32 %v86, %v108
  %v120 = vmul.f32 %v89, %v108
  %v121 = vmul.f32 %v92, %v108
  %v122 = vmul.f32 %v95, %v108
  %v123 = vmul.f32 %v98, %v108
  %v124 = vmul.f32 %v101, %v108
  %v125 = vsub.f32 %v37, %v109
  %v126 = vsub.f32 %v38, %v110
  %v127 = vsub.f32 %v39, %v111
  %v128 = vsub.f32 %v40, %v112
  %v129 = vsub.f32 %v41, %v113
  %v130 = vsub.f32 %v42, %v114
  %v131 = vsub.f32 %v43, %v115
  %v132 = vsub.f32 %v44, %v116
  %v133 = vsub.f32 %v45, %v117
  %v134 = vsub.f32 %v46, %v118
  %v135 = vsub.f32 %v47, %v119
  %v136 = vsub.f32 %v48, %v120
  %v137 = vsub.f32 %v49, %v121
  %v138 = vsub.f32 %v50, %v122
  %v139 = vsub.f32 %v51, %v123
  %v140 = vsub.f32 %v52, %v124
  %v141 = vmul.f32 %v125, %v125
  %v142 = vmul.f32 %v126, %v126
  %v143 = vmul.f32 %v127, %v127
  %v144 = vmul.f32 %v128, %v128
  %v145 = vmul.f32 %v129, %v129
  %v146 = vmul.f32 %v130, %v130
  %v147 = vmul.f32 %v131, %v131
  %v148 = vmul.f32 %v132, %v132
  %v149 = vmul.f32 %v133, %v133
  %v150 = vmul.f32 %v134, %v134
  %v151 = vmul.f32 %v135, %v135
  %v152 = vmul.f32 %v136, %v136
  %v153 = vmul.f32 %v137, %v137
  %v154 = vmul.f32 %v138, %v138
  %v155 = vmul.f32 %v139, %v139
  %v156 = vmul.f32 %v140, %v140
  %v157 = vsel %vm53, %v141, 0.0
  %158 = vadd.xlane.f32.xlu0 %v157
  %v159 = vpop.xlane.xlu0 %158
  %v160 = vsel %vm53, %v142, 0.0
  %161 = vadd.xlane.f32.xlu0 %v160
  %v162 = vpop.xlane.xlu0 %161
  %v163 = vsel %vm53, %v143, 0.0
  %164 = vadd.xlane.f32.xlu0 %v163
  %v165 = vpop.xlane.xlu0 %164
  %v166 = vsel %vm53, %v144, 0.0
  %167 = vadd.xlane.f32.xlu0 %v166
  %v168 = vpop.xlane.xlu0 %167
  %v169 = vsel %vm53, %v145, 0.0
  %170 = vadd.xlane.f32.xlu0 %v169
  %v171 = vpop.xlane.xlu0 %170
  %v172 = vsel %vm53, %v146, 0.0
  %173 = vadd.xlane.f32.xlu0 %v172
  %v174 = vpop.xlane.xlu0 %173
  %v175 = vsel %vm53, %v147, 0.0
  %176 = vadd.xlane.f32.xlu0 %v175
  %v177 = vpop.xlane.xlu0 %176
  %v178 = vsel %vm53, %v148, 0.0
  %179 = vadd.xlane.f32.xlu0 %v178
  %v180 = vpop.xlane.xlu0 %179
  %v181 = vsel %vm53, %v149, 0.0
  %182 = vadd.xlane.f32.xlu0 %v181
  %v183 = vpop.xlane.xlu0 %182
  %v184 = vsel %vm53, %v150, 0.0
  %185 = vadd.xlane.f32.xlu0 %v184
  %v186 = vpop.xlane.xlu0 %185
  %v187 = vsel %vm53, %v151, 0.0
  %188 = vadd.xlane.f32.xlu0 %v187
  %v189 = vpop.xlane.xlu0 %188
  %v190 = vsel %vm53, %v152, 0.0
  %191 = vadd.xlane.f32.xlu0 %v190
  %v192 = vpop.xlane.xlu0 %191
  %v193 = vsel %vm53, %v153, 0.0
  %194 = vadd.xlane.f32.xlu0 %v193
  %v195 = vpop.xlane.xlu0 %194
  %v196 = vsel %vm53, %v154, 0.0
  %197 = vadd.xlane.f32.xlu0 %v196
  %v198 = vpop.xlane.xlu0 %197
  %v199 = vsel %vm53, %v155, 0.0
  %200 = vadd.xlane.f32.xlu0 %v199
  %v201 = vpop.xlane.xlu0 %200
  %v202 = vsel %vm53, %v156, 0.0
  %203 = vadd.xlane.f32.xlu0 %v202
  %v204 = vpop.xlane.xlu0 %203
  %v205 = vmul.f32 %v159, %v108
  %v206 = vmul.f32 %v162, %v108
  %v207 = vmul.f32 %v165, %v108
  %v208 = vmul.f32 %v168, %v108
  %v209 = vmul.f32 %v171, %v108
  %v210 = vmul.f32 %v174, %v108
  %v211 = vmul.f32 %v177, %v108
  %v212 = vmul.f32 %v180, %v108
  %v213 = vmul.f32 %v183, %v108
  %v214 = vmul.f32 %v186, %v108
  %v215 = vmul.f32 %v189, %v108
  %v216 = vmul.f32 %v192, %v108
  %v217 = vmul.f32 %v195, %v108
  %v218 = vmul.f32 %v198, %v108
  %v219 = vmul.f32 %v201, %v108
  %v220 = vmul.f32 %v204, %v108
  %v221 = vadd.f32 %v205, 1e-05
  %v222 = vadd.f32 %v206, 1e-05
  %v223 = vadd.f32 %v207, 1e-05
  %v224 = vadd.f32 %v208, 1e-05
  %v225 = vadd.f32 %v209, 1e-05
  %v226 = vadd.f32 %v210, 1e-05
  %v227 = vadd.f32 %v211, 1e-05
  %v228 = vadd.f32 %v212, 1e-05
  %v229 = vadd.f32 %v213, 1e-05
  %v230 = vadd.f32 %v214, 1e-05
  %v231 = vadd.f32 %v215, 1e-05
  %v232 = vadd.f32 %v216, 1e-05
  %v233 = vadd.f32 %v217, 1e-05
  %v234 = vadd.f32 %v218, 1e-05
  %v235 = vadd.f32 %v219, 1e-05
  %v236 = vadd.f32 %v220, 1e-05
  %v237 = vrsqrt.pop %v221
  %v238 = vmul.f32 %v237, %v221
  %v239 = vmul.f32 %v238, %v237
  %v240 = vmul.f32 0.5, %v239
  %v241 = vsub.f32 1.5, %v240
  %v242 = vmul.f32 %v237, %v241
  %vm243 = vweird.f32 %v221
  %vm244 = vweird.f32 %v237
  %vm245 = vmor %vm243, %vm244
  %v246 = vsel %vm245, %v237, %v242
  %v247 = vrsqrt.pop %v222
  %v248 = vmul.f32 %v247, %v222
  %v249 = vmul.f32 %v248, %v247
  %v250 = vmul.f32 0.5, %v249
  %v251 = vsub.f32 1.5, %v250
  %v252 = vmul.f32 %v247, %v251
  %vm253 = vweird.f32 %v222
  %vm254 = vweird.f32 %v247
  %vm255 = vmor %vm253, %vm254
  %v256 = vsel %vm255, %v247, %v252
  %v257 = vrsqrt.pop %v223
  %v258 = vmul.f32 %v257, %v223
  %v259 = vmul.f32 %v258, %v257
  %v260 = vmul.f32 0.5, %v259
  %v261 = vsub.f32 1.5, %v260
  %v262 = vmul.f32 %v257, %v261
  %vm263 = vweird.f32 %v223
  %vm264 = vweird.f32 %v257
  %vm265 = vmor %vm263, %vm264
  %v266 = vsel %vm265, %v257, %v262
  %v267 = vrsqrt.pop %v224
  %v268 = vmul.f32 %v267, %v224
  %v269 = vmul.f32 %v268, %v267
  %v270 = vmul.f32 0.5, %v269
  %v271 = vsub.f32 1.5, %v270
  %v272 = vmul.f32 %v267, %v271
  %vm273 = vweird.f32 %v224
  %vm274 = vweird.f32 %v267
  %vm275 = vmor %vm273, %vm274
  %v276 = vsel %vm275, %v267, %v272
  %v277 = vrsqrt.pop %v225
  %v278 = vmul.f32 %v277, %v225
  %v279 = vmul.f32 %v278, %v277
  %v280 = vmul.f32 0.5, %v279
  %v281 = vsub.f32 1.5, %v280
  %v282 = vmul.f32 %v277, %v281
  %vm283 = vweird.f32 %v225
  %vm284 = vweird.f32 %v277
  %vm285 = vmor %vm283, %vm284
  %v286 = vsel %vm285, %v277, %v282
  %v287 = vrsqrt.pop %v226
  %v288 = vmul.f32 %v287, %v226
  %v289 = vmul.f32 %v288, %v287
  %v290 = vmul.f32 0.5, %v289
  %v291 = vsub.f32 1.5, %v290
  %v292 = vmul.f32 %v287, %v291
  %vm293 = vweird.f32 %v226
  %vm294 = vweird.f32 %v287
  %vm295 = vmor %vm293, %vm294
  %v296 = vsel %vm295, %v287, %v292
  %v297 = vrsqrt.pop %v227
  %v298 = vmul.f32 %v297, %v227
  %v299 = vmul.f32 %v298, %v297
  %v300 = vmul.f32 0.5, %v299
  %v301 = vsub.f32 1.5, %v300
  %v302 = vmul.f32 %v297, %v301
  %vm303 = vweird.f32 %v227
  %vm304 = vweird.f32 %v297
  %vm305 = vmor %vm303, %vm304
  %v306 = vsel %vm305, %v297, %v302
  %v307 = vrsqrt.pop %v228
  %v308 = vmul.f32 %v307, %v228
  %v309 = vmul.f32 %v308, %v307
  %v310 = vmul.f32 0.5, %v309
  %v311 = vsub.f32 1.5, %v310
  %v312 = vmul.f32 %v307, %v311
  %vm313 = vweird.f32 %v228
  %vm314 = vweird.f32 %v307
  %vm315 = vmor %vm313, %vm314
  %v316 = vsel %vm315, %v307, %v312
  %v317 = vrsqrt.pop %v229
  %v318 = vmul.f32 %v317, %v229
  %v319 = vmul.f32 %v318, %v317
  %v320 = vmul.f32 0.5, %v319
  %v321 = vsub.f32 1.5, %v320
  %v322 = vmul.f32 %v317, %v321
  %vm323 = vweird.f32 %v229
  %vm324 = vweird.f32 %v317
  %vm325 = vmor %vm323, %vm324
  %v326 = vsel %vm325, %v317, %v322
  %v327 = vrsqrt.pop %v230
  %v328 = vmul.f32 %v327, %v230
  %v329 = vmul.f32 %v328, %v327
  %v330 = vmul.f32 0.5, %v329
  %v331 = vsub.f32 1.5, %v330
  %v332 = vmul.f32 %v327, %v331
  %vm333 = vweird.f32 %v230
  %vm334 = vweird.f32 %v327
  %vm335 = vmor %vm333, %vm334
  %v336 = vsel %vm335, %v327, %v332
  %v337 = vrsqrt.pop %v231
  %v338 = vmul.f32 %v337, %v231
  %v339 = vmul.f32 %v338, %v337
  %v340 = vmul.f32 0.5, %v339
  %v341 = vsub.f32 1.5, %v340
  %v342 = vmul.f32 %v337, %v341
  %vm343 = vweird.f32 %v231
  %vm344 = vweird.f32 %v337
  %vm345 = vmor %vm343, %vm344
  %v346 = vsel %vm345, %v337, %v342
  %v347 = vrsqrt.pop %v232
  %v348 = vmul.f32 %v347, %v232
  %v349 = vmul.f32 %v348, %v347
  %v350 = vmul.f32 0.5, %v349
  %v351 = vsub.f32 1.5, %v350
  %v352 = vmul.f32 %v347, %v351
  %vm353 = vweird.f32 %v232
  %vm354 = vweird.f32 %v347
  %vm355 = vmor %vm353, %vm354
  %v356 = vsel %vm355, %v347, %v352
  %v357 = vrsqrt.pop %v233
  %v358 = vmul.f32 %v357, %v233
  %v359 = vmul.f32 %v358, %v357
  %v360 = vmul.f32 0.5, %v359
  %v361 = vsub.f32 1.5, %v360
  %v362 = vmul.f32 %v357, %v361
  %vm363 = vweird.f32 %v233
  %vm364 = vweird.f32 %v357
  %vm365 = vmor %vm363, %vm364
  %v366 = vsel %vm365, %v357, %v362
  %v367 = vrsqrt.pop %v234
  %v368 = vmul.f32 %v367, %v234
  %v369 = vmul.f32 %v368, %v367
  %v370 = vmul.f32 0.5, %v369
  %v371 = vsub.f32 1.5, %v370
  %v372 = vmul.f32 %v367, %v371
  %vm373 = vweird.f32 %v234
  %vm374 = vweird.f32 %v367
  %vm375 = vmor %vm373, %vm374
  %v376 = vsel %vm375, %v367, %v372
  %v377 = vrsqrt.pop %v235
  %v378 = vmul.f32 %v377, %v235
  %v379 = vmul.f32 %v378, %v377
  %v380 = vmul.f32 0.5, %v379
  %v381 = vsub.f32 1.5, %v380
  %v382 = vmul.f32 %v377, %v381
  %vm383 = vweird.f32 %v235
  %vm384 = vweird.f32 %v377
  %vm385 = vmor %vm383, %vm384
  %v386 = vsel %vm385, %v377, %v382
  %v387 = vrsqrt.pop %v236
  %v388 = vmul.f32 %v387, %v236
  %v389 = vmul.f32 %v388, %v387
  %v390 = vmul.f32 0.5, %v389
  %v391 = vsub.f32 1.5, %v390
  %v392 = vmul.f32 %v387, %v391
  %vm393 = vweird.f32 %v236
  %vm394 = vweird.f32 %v387
  %vm395 = vmor %vm393, %vm394
  %v396 = vsel %vm395, %v387, %v392
  %v397 = vmul.f32 %v125, %v246
  %v398 = vmul.f32 %v126, %v256
  %v399 = vmul.f32 %v127, %v266
  %v400 = vmul.f32 %v128, %v276
  %v401 = vmul.f32 %v129, %v286
  %v402 = vmul.f32 %v130, %v296
  %v403 = vmul.f32 %v131, %v306
  %v404 = vmul.f32 %v132, %v316
  %v405 = vmul.f32 %v133, %v326
  %v406 = vmul.f32 %v134, %v336
  %v407 = vmul.f32 %v135, %v346
  %v408 = vmul.f32 %v136, %v356
  %v409 = vmul.f32 %v137, %v366
  %v410 = vmul.f32 %v138, %v376
  %v411 = vmul.f32 %v139, %v386
  %v412 = vmul.f32 %v140, %v396
  %v413 = vld [vmem:[%s1] sm:$0x1]
  %v415 = vperm.slane %v413, 0
  %v417 = vmul.f32 %v397, %v415
  %v418 = vmul.f32 %v398, %v415
  %v419 = vmul.f32 %v399, %v415
  %v420 = vmul.f32 %v400, %v415
  %v421 = vmul.f32 %v401, %v415
  %v422 = vmul.f32 %v402, %v415
  %v423 = vmul.f32 %v403, %v415
  %v424 = vmul.f32 %v404, %v415
  %v425 = vmul.f32 %v405, %v415
  %v426 = vmul.f32 %v406, %v415
  %v427 = vmul.f32 %v407, %v415
  %v428 = vmul.f32 %v408, %v415
  %v429 = vmul.f32 %v409, %v415
  %v430 = vmul.f32 %v410, %v415
  %v431 = vmul.f32 %v411, %v415
  %v432 = vmul.f32 %v412, %v415
  %v433 = vld [vmem:[%s2] sm:$0x1]
  %v435 = vperm.slane %v433, 0
  %v437 = vadd.f32 %v417, %v435
  %v438 = vadd.f32 %v418, %v435
  %v439 = vadd.f32 %v419, %v435
  %v440 = vadd.f32 %v420, %v435
  %v441 = vadd.f32 %v421, %v435
  %v442 = vadd.f32 %v422, %v435
  %v443 = vadd.f32 %v423, %v435
  %v444 = vadd.f32 %v424, %v435
  %v445 = vadd.f32 %v425, %v435
  %v446 = vadd.f32 %v426, %v435
  %v447 = vadd.f32 %v427, %v435
  %v448 = vadd.f32 %v428, %v435
  %v449 = vadd.f32 %v429, %v435
  %v450 = vadd.f32 %v430, %v435
  %v451 = vadd.f32 %v431, %v435
  %v452 = vadd.f32 %v432, %v435
  %v453 = vpack.c.bf16 %v438, %v437
  %v454 = vpack.c.bf16 %v440, %v439
  %v455 = vpack.c.bf16 %v442, %v441
  %v456 = vpack.c.bf16 %v444, %v443
  %v457 = vpack.c.bf16 %v446, %v445
  %v458 = vpack.c.bf16 %v448, %v447
  %v459 = vpack.c.bf16 %v450, %v449
  %v460 = vpack.c.bf16 %v452, %v451
  %v461 = vld [vmem:[%s3] sm:$0xf]
  %v462 = vld [vmem:[%s3 + $0x4] sm:$0xf]
  %v463 = vld [vmem:[%s3 + $0x8] sm:$0xf]
  %v464 = vld [vmem:[%s3 + $0xc] sm:$0xf]
  %v465 = vld [vmem:[%s3 + $0x10] sm:$0xf]
  %v466 = vld [vmem:[%s3 + $0x14] sm:$0xf]
  %v467 = vld [vmem:[%s3 + $0x18] sm:$0xf]
  %v468 = vld [vmem:[%s3 + $0x1c] sm:$0xf]
  %v469 = vld [vmem:[%s4] sm:$0x1]
  %v471 = vperm.slane %v469, 0
  %v481 = vunpack.c.l.b16 %v461
  %v482 = vunpack.c.l.b16 %v462
  %v483 = vunpack.c.l.b16 %v463
  %v484 = vunpack.c.l.b16 %v464
  %v485 = vunpack.c.l.b16 %v465
  %v486 = vunpack.c.l.b16 %v466
  %v487 = vunpack.c.l.b16 %v467
  %v488 = vunpack.c.l.b16 %v468
  %v489 = vpack.c.b16 %v482, %v481
  %v490 = vpack.c.b16 %v484, %v483
  %v491 = vpack.c.b16 %v486, %v485
  %v492 = vpack.c.b16 %v488, %v487
  %v498 = vsel %vm53, %v453, 0
  %v501 = vsel %vm53, %v454, 0
  %v504 = vsel %vm53, %v455, 0
  %v507 = vsel %vm53, %v456, 0
  %v510 = vsel %vm53, %v457, 0
  %v513 = vsel %vm53, %v458, 0
  %v516 = vsel %vm53, %v459, 0
  %v519 = vsel %vm53, %v460, 0
  %521 = vmatpush.bf16.msra.mxu0 0
  %522 = vmatpush.bf16.msra.mxu0 0
  %523 = vmatpush.bf16.msra.mxu0 0
  %524 = vmatpush.bf16.msra.mxu0 0
  %525 = vmatpush.bf16.msra.mxu0 %v492
  %526 = vmatpush.bf16.msra.mxu0 %v491
  %527 = vmatpush.bf16.msra.mxu0 %v490
  %528 = vmatpush.bf16.msra.mxu0 %v489
  %529 = vmatmul.bf16.gmra.mxu0 %v498
  %v530 = vpop.f32.mrf.mxu0
  %v531 = vadd.f32 %v471, %v530
  %v532 = vpop.f32.mrf.mxu0
  %v533 = vadd.f32 %v471, %v532
  %534 = vmatmul.bf16.gmra.mxu0 %v501
  %v535 = vpop.f32.mrf.mxu0
  %v536 = vadd.f32 %v471, %v535
  %v537 = vpop.f32.mrf.mxu0
  %v538 = vadd.f32 %v471, %v537
  %539 = vmatmul.bf16.gmra.mxu0 %v504
  %v540 = vpop.f32.mrf.mxu0
  %v541 = vadd.f32 %v471, %v540
  %v542 = vpop.f32.mrf.mxu0
  %v543 = vadd.f32 %v471, %v542
  %544 = vmatmul.bf16.gmra.mxu0 %v507
  %v545 = vpop.f32.mrf.mxu0
  %v546 = vadd.f32 %v471, %v545
  %v547 = vpop.f32.mrf.mxu0
  %v548 = vadd.f32 %v471, %v547
  %549 = vmatmul.bf16.gmra.mxu0 %v510
  %v550 = vpop.f32.mrf.mxu0
  %v551 = vadd.f32 %v471, %v550
  %v552 = vpop.f32.mrf.mxu0
  %v553 = vadd.f32 %v471, %v552
  %554 = vmatmul.bf16.gmra.mxu0 %v513
  %v555 = vpop.f32.mrf.mxu0
  %v556 = vadd.f32 %v471, %v555
  %v557 = vpop.f32.mrf.mxu0
  %v558 = vadd.f32 %v471, %v557
  %559 = vmatmul.bf16.gmra.mxu0 %v516
  %v560 = vpop.f32.mrf.mxu0
  %v561 = vadd.f32 %v471, %v560
  %v562 = vpop.f32.mrf.mxu0
  %v563 = vadd.f32 %v471, %v562
  %564 = vmatmul.bf16.gmra.mxu0 %v519
  %v565 = vpop.f32.mrf.mxu0
  %v566 = vadd.f32 %v471, %v565
  %v567 = vpop.f32.mrf.mxu0
  %v568 = vadd.f32 %v471, %v567
  %569 = vdwg.mxu0
  %v570 = vpack.c.bf16 %v531, %v531
  %v571 = vpack.c.bf16 %v533, %v533
  %v572 = vpack.c.bf16 %v536, %v536
  %v573 = vpack.c.bf16 %v538, %v538
  %v574 = vpack.c.bf16 %v541, %v541
  %v575 = vpack.c.bf16 %v543, %v543
  %v576 = vpack.c.bf16 %v546, %v546
  %v577 = vpack.c.bf16 %v548, %v548
  %v578 = vpack.c.bf16 %v551, %v551
  %v579 = vpack.c.bf16 %v553, %v553
  %v580 = vpack.c.bf16 %v556, %v556
  %v581 = vpack.c.bf16 %v558, %v558
  %v582 = vpack.c.bf16 %v561, %v561
  %v583 = vpack.c.bf16 %v563, %v563
  %v584 = vpack.c.bf16 %v566, %v566
  %v585 = vpack.c.bf16 %v568, %v568
  %586 = vst [vmem:[%s5] sm:$0xf] %v570
  %587 = vst [vmem:[%s5 + $0x4] sm:$0xf] %v571
  %588 = vst [vmem:[%s5 + $0x8] sm:$0xf] %v572
  %589 = vst [vmem:[%s5 + $0xc] sm:$0xf] %v573
  %590 = vst [vmem:[%s5 + $0x10] sm:$0xf] %v574
  %591 = vst [vmem:[%s5 + $0x14] sm:$0xf] %v575
  %592 = vst [vmem:[%s5 + $0x18] sm:$0xf] %v576
  %593 = vst [vmem:[%s5 + $0x1c] sm:$0xf] %v577
  %594 = vst [vmem:[%s5 + $0x20] sm:$0xf] %v578
  %595 = vst [vmem:[%s5 + $0x24] sm:$0xf] %v579
  %596 = vst [vmem:[%s5 + $0x28] sm:$0xf] %v580
  %597 = vst [vmem:[%s5 + $0x2c] sm:$0xf] %v581
  %598 = vst [vmem:[%s5 + $0x30] sm:$0xf] %v582
  %599 = vst [vmem:[%s5 + $0x34] sm:$0xf] %v583
  %600 = vst [vmem:[%s5 + $0x38] sm:$0xf] %v584
  %601 = vst [vmem:[%s5 + $0x3c] sm:$0xf] %v585
  // Predicated region
  $region22: #{attention_forward.7} parent=0 // pred_check
    _
  $region23: #{attention_forward.7} parent=0 // pred_check_branch
    %603 = sbr.rel (0) target = $region25
  $region24: #{attention_forward.7} parent=0 // pred_region
    _
  $region25: #{attention_forward.7} parent=0 // pred_fallthru
    _
  // Predicated region
  $region26: #{attention_forward.7} parent=0 // pred_check
    _
  $region27: #{attention_forward.7} parent=0 // pred_check_branch
    %605 = sbr.rel (0) target = $region29
  $region28: #{attention_forward.7} parent=0 // pred_region
    _
  $region29: #{attention_forward.7} parent=0 // pred_fallthru
    _

// kernel: attention_forward.5
$region0: #{attention_forward.5}
  #allocation0 [shape = 'u32[]', space=smem, size = 0x4, offset = 0x4, fixed_abs, tag = 'smem constant byte address 0x4 - core index']
  #allocation1 [shape = 'u32[72,128]{1,0:T(1,128)}', space=vmem, size = 0x9000, scoped, tag = 'internal scratch']
  #allocation2 [shape = 'f32[256,128]{1,0:T(8,128)}', space=vmem, size = 0x20000, scoped, tag = 'scratch operand']
  %s0 = inlined_call_operand.vmem [shape: bf16[512,64], index: 0, kind: input, shape index: {}]
  %s1 = inlined_call_operand.vmem [shape: bf16[64,128], index: 1, kind: input, shape index: {}]
  %s2 = inlined_call_operand.vmem [shape: f32[1,128], index: 2, kind: input, shape index: {}]
  %s3 = inlined_call_operand.vmem [shape: bf16[512,128], index: 3, kind: output, shape index: {}]
  %s4 = sld [smem:[#allocation0]]
  $region53: #{attention_forward.5} parent=0
    _
  %s6 = ssub.s32 1, %s4
  %s7 = scalar_select 0, %s6, %s4
  loop: start=0, step=1, limit=4
  $region2: #{attention_forward.5} parent=0 // loop_pre_header
    _
  $region3: #{attention_forward.5} parent=0 // loop_header
    %s9 = sphi 0, %s13
    %p10 = scmp.ge.s32.totalorder %s9, 4
    %s16 = sphi 0, %s35
    %s17 = sphi 0, %s31
    %s18 = sphi 0, %s27
    %s19 = sphi 0, %s16
    %s20 = sphi 0, %s17
    %s21 = sphi 0, %s18
    %s22 = sphi 0, %s19
    %s23 = sphi 0, %s20
    %s24 = sphi 0, %s21
    %s40 = sphi 0, %s42
    %s43 = sphi 0, %s40
    %s44 = sphi 0, %s43
    %s60 = sphi 0, %s44
    %s68 = sphi 0, %s70
    %s71 = sphi 0, %s68
    %s72 = sphi 0, %s71
    %s88 = sphi 0, %s72
    %s94 = sphi 0, %s96
    %s97 = sphi 0, %s94
    %s98 = sphi 0, %s97
    %s114 = sphi 0, %s98
    %s122 = sphi 0, %s124
    %s125 = sphi 0, %s122
    %s126 = sphi 0, %s125
    %s142 = sphi 0, %s126
  $region4: #{attention_forward.5} parent=0 // loop_header_branch
    %12 = sbr.rel (%p10) target = $region8
  $region5: #{attention_forward.5} parent=0 // loop_body
    %s14 = ssub.s32 %s9, 1
    %s15 = ssub.s32 %s9, 2
    %s25 = sadd.s32 1, %s18
    %p26 = scmp.ge.s32.totalorder %s25, 1
    %s27 = scalar_select %p26, 0, %s25
    %s28 = sadd.s32 1, %s17
    %s29 = scalar_select %p26, %s28, %s17
    %p30 = scmp.ge.s32.totalorder %s29, 1
    %s31 = scalar_select %p30, 0, %s29
    %s32 = sadd.s32 1, %s16
    %s33 = scalar_select %p30, %s32, %s16
    %p34 = scmp.ge.s32.totalorder %s33, 2
    %s35 = scalar_select %p34, 0, %s33
    %s36 = ssub.s32 %s16, %s35
    %s37 = ssub.s32 %s18, %s27
    %s38 = sor.u32 %s36, %s37
    %p39 = scmp.eq.s32.totalorder %s38, 0
    %s41 = sadd.s32 %s40, 1
    %s42 = scalar_select %p39, %s40, %s41
    %p45 = pneg %p39
    %p46 = scmp.eq.s32.totalorder %s9, 1
    %p47 = por %p45, %p46
    %p48 = scmp.ne.s32.totalorder %s40, %s43
    %p49 = scmp.eq.s32.totalorder %s9, 0
    %p50 = por %p48, %p49
    %p51 = scmp.ne.s32.totalorder %s40, %s43
    %p52 = scmp.eq.s32.totalorder %s14, 1
    %p53 = por %p51, %p52
    %p54 = scmp.ne.s32.totalorder %s43, %s44
    %p55 = scmp.eq.s32.totalorder %s14, 0
    %p56 = por %p54, %p55
    %p57 = scmp.ne.s32.totalorder %s43, %s44
    %p58 = scmp.eq.s32.totalorder %s15, 1
    %p59 = por %p57, %p58
    %p61 = scmp.ne.s32.totalorder %s44, %s60
    %p62 = scmp.eq.s32.totalorder %s15, 0
    %p63 = por %p61, %p62
    %s64 = ssub.s32 %s18, %s27
    %s65 = ssub.s32 %s17, %s31
    %s66 = sor.u32 %s64, %s65
    %p67 = scmp.eq.s32.totalorder %s66, 0
    %s69 = sadd.s32 %s68, 1
    %s70 = scalar_select %p67, %s68, %s69
    %p73 = pneg %p67
    %p74 = scmp.eq.s32.totalorder %s9, 1
    %p75 = por %p73, %p74
    %p76 = scmp.ne.s32.totalorder %s68, %s71
    %p77 = scmp.eq.s32.totalorder %s9, 0
    %p78 = por %p76, %p77
    %p79 = scmp.ne.s32.totalorder %s68, %s71
    %p80 = scmp.eq.s32.totalorder %s14, 1
    %p81 = por %p79, %p80
    %p82 = scmp.ne.s32.totalorder %s71, %s72
    %p83 = scmp.eq.s32.totalorder %s14, 0
    %p84 = por %p82, %p83
    %p85 = scmp.ne.s32.totalorder %s71, %s72
    %p86 = scmp.eq.s32.totalorder %s15, 1
    %p87 = por %p85, %p86
    %p89 = scmp.ne.s32.totalorder %s72, %s88
    %p90 = scmp.eq.s32.totalorder %s15, 0
    %p91 = por %p89, %p90
    %s92 = ssub.s32 %s17, %s31
    %p93 = scmp.eq.s32.totalorder %s92, 0
    %s95 = sadd.s32 %s94, 1
    %s96 = scalar_select %p93, %s94, %s95
    %p99 = pneg %p93
    %p100 = scmp.eq.s32.totalorder %s9, 1
    %p101 = por %p99, %p100
    %p102 = scmp.ne.s32.totalorder %s94, %s97
    %p103 = scmp.eq.s32.totalorder %s9, 0
    %p104 = por %p102, %p103
    %p105 = scmp.ne.s32.totalorder %s94, %s97
    %p106 = scmp.eq.s32.totalorder %s14, 1
    %p107 = por %p105, %p106
    %p108 = scmp.ne.s32.totalorder %s97, %s98
    %p109 = scmp.eq.s32.totalorder %s14, 0
    %p110 = por %p108, %p109
    %p111 = scmp.ne.s32.totalorder %s97, %s98
    %p112 = scmp.eq.s32.totalorder %s15, 1
    %p113 = por %p111, %p112
    %p115 = scmp.ne.s32.totalorder %s98, %s114
    %p116 = scmp.eq.s32.totalorder %s15, 0
    %p117 = por %p115, %p116
    %s118 = ssub.s32 %s16, %s35
    %s119 = ssub.s32 %s17, %s31
    %s120 = sor.u32 %s118, %s119
    %p121 = scmp.eq.s32.totalorder %s120, 0
    %s123 = sadd.s32 %s122, 1
    %s124 = scalar_select %p121, %s122, %s123
    %p127 = pneg %p121
    %p128 = scmp.eq.s32.totalorder %s9, 1
    %p129 = por %p127, %p128
    %p130 = scmp.ne.s32.totalorder %s122, %s125
    %p131 = scmp.eq.s32.totalorder %s9, 0
    %p132 = por %p130, %p131
    %p133 = scmp.ne.s32.totalorder %s122, %s125
    %p134 = scmp.eq.s32.totalorder %s14, 1
    %p135 = por %p133, %p134
    %p136 = scmp.ne.s32.totalorder %s125, %s126
    %p137 = scmp.eq.s32.totalorder %s14, 0
    %p138 = por %p136, %p137
    %p139 = scmp.ne.s32.totalorder %s125, %s126
    %p140 = scmp.eq.s32.totalorder %s15, 1
    %p141 = por %p139, %p140
    %p143 = scmp.ne.s32.totalorder %s126, %s142
    %p144 = scmp.eq.s32.totalorder %s15, 0
    %p145 = por %p143, %p144
    %p146 = scmp.le.s32.totalorder 1, %s9
    %p147 = scmp.lt.s32.totalorder %s9, 3
    %p148 = pnand %p146, %p147
    %p149 = pneg %p148
    // Predicated region
    $region9: #{attention_forward.5} parent=5 // pred_check
      _
    $region10: #{attention_forward.5} parent=5 // pred_check_branch
      %151 = sbr.rel (%p148) target = $region12
    $region11: #{attention_forward.5} parent=5 // pred_region
      %s152 = ssub.s32 %s9, 1
      // Predicated region
      $region13: #{attention_forward.5} parent=11 // pred_check
        %p153 = pneg %p84
      $region14: #{attention_forward.5} parent=11 // pred_check_branch
        %155 = sbr.rel (%p153) target = $region16
      $region15: #{attention_forward.5} parent=11 // pred_region
        %s156 = smul.u32 8, %s21
        %p157 = scmp.lt.s32.totalorder %s156, 7
        %s158 = scalar_select %p157, %s156, 7
        %p159 = scmp.lt.s32.totalorder %s20, 0
        %s160 = scalar_select %p159, %s20, 0
        %s161 = sadd.s32 %s160, %s158
        %s162 = smul.addr %s161, 4
        %s163 = scalar_lea.vmem %s1, %s162
        %s164 = smul.u32 8, %s21
      $region16: #{attention_forward.5} parent=11 // pred_fallthru
        _
      // Predicated region
      $region17: #{attention_forward.5} parent=11 // pred_check
        %p165 = pneg %p110
      $region18: #{attention_forward.5} parent=11 // pred_check_branch
        %167 = sbr.rel (%p165) target = $region20
      $region19: #{attention_forward.5} parent=11 // pred_region
        %p168 = scmp.lt.s32.totalorder %s20, 0
        %s169 = scalar_select %p168, %s20, 0
        %s170 = scalar_lea.vmem %s2, %s169
      $region20: #{attention_forward.5} parent=11 // pred_fallthru
        _
    $region12: #{attention_forward.5} parent=5 // pred_fallthru
      _
    %p171 = scmp.lt.s32.totalorder %s9, 2
    // Predicated region
    $region21: #{attention_forward.5} parent=5 // pred_check
      %p172 = pneg %p171
    $region22: #{attention_forward.5} parent=5 // pred_check_branch
      %174 = sbr.rel (%p172) target = $region24
    $region23: #{attention_forward.5} parent=5 // pred_region
      // Predicated region
      $region25: #{attention_forward.5} parent=23 // pred_check
        %p175 = pneg %p50
      $region26: #{attention_forward.5} parent=23 // pred_check_branch
        %177 = sbr.rel (%p175) target = $region28
      $region27: #{attention_forward.5} parent=23 // pred_region
        %s178 = smul.u32 32, %s16
        %p179 = scmp.lt.s32.totalorder %s178, 63
        %s180 = scalar_select %p179, %s178, 63
        %p181 = scmp.lt.s32.totalorder %s18, 0
        %s182 = scalar_select %p181, %s18, 0
        %s183 = sadd.s32 %s182, %s180
        %s184 = smul.addr %s183, 4
        %s185 = scalar_lea.vmem %s0, %s184
        %s186 = smul.u32 32, %s16
      $region28: #{attention_forward.5} parent=23 // pred_fallthru
        _
    $region24: #{attention_forward.5} parent=5 // pred_fallthru
      _
    %p187 = scmp.le.s32.totalorder 1, %s9
    %p188 = scmp.lt.s32.totalorder %s9, 3
    %p189 = pnand %p187, %p188
    %p190 = pneg %p189
    // Predicated region
    $region29: #{attention_forward.5} parent=5 // pred_check
      _
    $region30: #{attention_forward.5} parent=5 // pred_check_branch
      %192 = sbr.rel (%p189) target = $region32
    $region31: #{attention_forward.5} parent=5 // pred_region
      %s193 = ssub.s32 %s9, 1
      %s194 = smul.u32 32, %s19
      %p195 = scmp.lt.s32.totalorder %s194, 63
      %s196 = scalar_select %p195, %s194, 63
      %p197 = scmp.lt.s32.totalorder %s21, 0
      %s198 = scalar_select %p197, %s21, 0
      %s199 = sadd.s32 %s198, %s196
      %s200 = smul.addr %s199, 4
      %s201 = scalar_lea.vmem %s0, %s200
      %p202 = pneg %p56
      %p203 = pneg %p53
      %s204 = smul.u32 8, %s21
      %p205 = scmp.lt.s32.totalorder %s204, 7
      %s206 = scalar_select %p205, %s204, 7
      %p207 = scmp.lt.s32.totalorder %s20, 0
      %s208 = scalar_select %p207, %s20, 0
      %s209 = sadd.s32 %s208, %s206
      %s210 = smul.addr %s209, 4
      %s211 = scalar_lea.vmem %s1, %s210
      %p212 = pneg %p84
      %p213 = pneg %p81
      %p214 = scmp.lt.s32.totalorder %s20, 0
      %s215 = scalar_select %p214, %s20, 0
      %s216 = scalar_lea.vmem %s2, %s215
      %p217 = pneg %p110
      %p218 = pneg %p107
      %p219 = pneg %p138
      %p220 = pneg %p135
      %s221 = smul.u32 32, %s19
      %p222 = scmp.lt.s32.totalorder %s221, 63
      %s223 = scalar_select %p222, %s221, 63
      %p224 = scmp.lt.s32.totalorder %s20, 0
      %s225 = scalar_select %p224, %s20, 0
      %s226 = sadd.s32 %s225, %s223
      %s227 = smul.addr %s226, 4
      %s228 = scalar_lea.vmem %s3, %s227
      %s229 = smul.u32 32, %s19
      %p230 = scmp.lt.s32.totalorder %s229, 63
      %s231 = scalar_select %p230, %s229, 63
      %p232 = scmp.lt.s32.totalorder %s21, 0
      %s233 = scalar_select %p232, %s21, 0
      %s234 = sadd.s32 %s233, %s231
      %s235 = smul.addr %s234, 4
      %s236 = scalar_lea.vmem %s0, %s235
      %s237 = smul.u32 32, %s19
      %s238 = smul.u32 8, %s21
      %p239 = scmp.lt.s32.totalorder %s238, 7
      %s240 = scalar_select %p239, %s238, 7
      %p241 = scmp.lt.s32.totalorder %s20, 0
      %s242 = scalar_select %p241, %s20, 0
      %s243 = sadd.s32 %s242, %s240
      %s244 = smul.addr %s243, 4
      %s245 = scalar_lea.vmem %s1, %s244
      %s246 = smul.u32 8, %s21
      %p247 = scmp.lt.s32.totalorder %s20, 0
      %s248 = scalar_select %p247, %s20, 0
      %s249 = scalar_lea.vmem %s2, %s248
      %s250 = smul.u32 32, %s19
      %p251 = scmp.lt.s32.totalorder %s250, 63
      %s252 = scalar_select %p251, %s250, 63
      %p253 = scmp.lt.s32.totalorder %s20, 0
      %s254 = scalar_select %p253, %s20, 0
      %s255 = sadd.s32 %s254, %s252
      %s256 = smul.addr %s255, 4
      %s257 = scalar_lea.vmem %s3, %s256
      %s258 = smul.u32 32, %s19
      %p260 = scmp.eq.s32.totalorder %s21, 0
      // Predicated region
      $region33: #{attention_forward.5} parent=31 // pred_check
        %p261 = pneg %p260
      $region34: #{attention_forward.5} parent=31 // pred_check_branch
        %263 = sbr.rel (%p261) target = $region36
      $region35: #{attention_forward.5} parent=31 // pred_region
        %264 = vst [vmem:[#allocation2] sm:$0xff] 0.0
        %265 = vst [vmem:[#allocation2 + $0x8] sm:$0xff] 0.0
        %266 = vst [vmem:[#allocation2 + $0x10] sm:$0xff] 0.0
        %267 = vst [vmem:[#allocation2 + $0x18] sm:$0xff] 0.0
        %268 = vst [vmem:[#allocation2 + $0x20] sm:$0xff] 0.0
        %269 = vst [vmem:[#allocation2 + $0x28] sm:$0xff] 0.0
        %270 = vst [vmem:[#allocation2 + $0x30] sm:$0xff] 0.0
        %271 = vst [vmem:[#allocation2 + $0x38] sm:$0xff] 0.0
        %272 = vst [vmem:[#allocation2 + $0x40] sm:$0xff] 0.0
        %273 = vst [vmem:[#allocation2 + $0x48] sm:$0xff] 0.0
        %274 = vst [vmem:[#allocation2 + $0x50] sm:$0xff] 0.0
        %275 = vst [vmem:[#allocation2 + $0x58] sm:$0xff] 0.0
        %276 = vst [vmem:[#allocation2 + $0x60] sm:$0xff] 0.0
        %277 = vst [vmem:[#allocation2 + $0x68] sm:$0xff] 0.0
        %278 = vst [vmem:[#allocation2 + $0x70] sm:$0xff] 0.0
        %279 = vst [vmem:[#allocation2 + $0x78] sm:$0xff] 0.0
        %280 = vst [vmem:[#allocation2 + $0x80] sm:$0xff] 0.0
        %281 = vst [vmem:[#allocation2 + $0x88] sm:$0xff] 0.0
        %282 = vst [vmem:[#allocation2 + $0x90] sm:$0xff] 0.0
        %283 = vst [vmem:[#allocation2 + $0x98] sm:$0xff] 0.0
        %284 = vst [vmem:[#allocation2 + $0xa0] sm:$0xff] 0.0
        %285 = vst [vmem:[#allocation2 + $0xa8] sm:$0xff] 0.0
        %286 = vst [vmem:[#allocation2 + $0xb0] sm:$0xff] 0.0
        %287 = vst [vmem:[#allocation2 + $0xb8] sm:$0xff] 0.0
        %288 = vst [vmem:[#allocation2 + $0xc0] sm:$0xff] 0.0
        %289 = vst [vmem:[#allocation2 + $0xc8] sm:$0xff] 0.0
        %290 = vst [vmem:[#allocation2 + $0xd0] sm:$0xff] 0.0
        %291 = vst [vmem:[#allocation2 + $0xd8] sm:$0xff] 0.0
        %292 = vst [vmem:[#allocation2 + $0xe0] sm:$0xff] 0.0
        %293 = vst [vmem:[#allocation2 + $0xe8] sm:$0xff] 0.0
        %294 = vst [vmem:[#allocation2 + $0xf0] sm:$0xff] 0.0
        %295 = vst [vmem:[#allocation2 + $0xf8] sm:$0xff] 0.0
      $region36: #{attention_forward.5} parent=31 // pred_fallthru
        _
      %v296 = vld [vmem:[#allocation2] sm:$0xff]
      %v297 = vld [vmem:[#allocation2 + $0x8] sm:$0xff]
      %v298 = vld [vmem:[#allocation2 + $0x10] sm:$0xff]
      %v299 = vld [vmem:[#allocation2 + $0x18] sm:$0xff]
      %v300 = vld [vmem:[#allocation2 + $0x20] sm:$0xff]
      %v301 = vld [vmem:[#allocation2 + $0x28] sm:$0xff]
      %v302 = vld [vmem:[#allocation2 + $0x30] sm:$0xff]
      %v303 = vld [vmem:[#allocation2 + $0x38] sm:$0xff]
      %v304 = vld [vmem:[#allocation2 + $0x40] sm:$0xff]
      %v305 = vld [vmem:[#allocation2 + $0x48] sm:$0xff]
      %v306 = vld [vmem:[#allocation2 + $0x50] sm:$0xff]
      %v307 = vld [vmem:[#allocation2 + $0x58] sm:$0xff]
      %v308 = vld [vmem:[#allocation2 + $0x60] sm:$0xff]
      %v309 = vld [vmem:[#allocation2 + $0x68] sm:$0xff]
      %v310 = vld [vmem:[#allocation2 + $0x70] sm:$0xff]
      %v311 = vld [vmem:[#allocation2 + $0x78] sm:$0xff]
      %v312 = vld [vmem:[#allocation2 + $0x80] sm:$0xff]
      %v313 = vld [vmem:[#allocation2 + $0x88] sm:$0xff]
      %v314 = vld [vmem:[#allocation2 + $0x90] sm:$0xff]
      %v315 = vld [vmem:[#allocation2 + $0x98] sm:$0xff]
      %v316 = vld [vmem:[#allocation2 + $0xa0] sm:$0xff]
      %v317 = vld [vmem:[#allocation2 + $0xa8] sm:$0xff]
      %v318 = vld [vmem:[#allocation2 + $0xb0] sm:$0xff]
      %v319 = vld [vmem:[#allocation2 + $0xb8] sm:$0xff]
      %v320 = vld [vmem:[#allocation2 + $0xc0] sm:$0xff]
      %v321 = vld [vmem:[#allocation2 + $0xc8] sm:$0xff]
      %v322 = vld [vmem:[#allocation2 + $0xd0] sm:$0xff]
      %v323 = vld [vmem:[#allocation2 + $0xd8] sm:$0xff]
      %v324 = vld [vmem:[#allocation2 + $0xe0] sm:$0xff]
      %v325 = vld [vmem:[#allocation2 + $0xe8] sm:$0xff]
      %v326 = vld [vmem:[#allocation2 + $0xf0] sm:$0xff]
      %v327 = vld [vmem:[#allocation2 + $0xf8] sm:$0xff]
      %v328 = vld [vmem:[%s236] sm:$0xf]
      %v329 = vld [vmem:[%s236 + $0x4] sm:$0xf]
      %v330 = vld [vmem:[%s236 + $0x8] sm:$0xf]
      %v331 = vld [vmem:[%s236 + $0xc] sm:$0xf]
      %v332 = vld [vmem:[%s236 + $0x10] sm:$0xf]
      %v333 = vld [vmem:[%s236 + $0x14] sm:$0xf]
      %v334 = vld [vmem:[%s236 + $0x18] sm:$0xf]
      %v335 = vld [vmem:[%s236 + $0x1c] sm:$0xf]
      %v336 = vld [vmem:[%s236 + $0x20] sm:$0xf]
      %v337 = vld [vmem:[%s236 + $0x24] sm:$0xf]
      %v338 = vld [vmem:[%s236 + $0x28] sm:$0xf]
      %v339 = vld [vmem:[%s236 + $0x2c] sm:$0xf]
      %v340 = vld [vmem:[%s236 + $0x30] sm:$0xf]
      %v341 = vld [vmem:[%s236 + $0x34] sm:$0xf]
      %v342 = vld [vmem:[%s236 + $0x38] sm:$0xf]
      %v343 = vld [vmem:[%s236 + $0x3c] sm:$0xf]
      %v344 = vld [vmem:[%s236 + $0x40] sm:$0xf]
      %v345 = vld [vmem:[%s236 + $0x44] sm:$0xf]
      %v346 = vld [vmem:[%s236 + $0x48] sm:$0xf]
      %v347 = vld [vmem:[%s236 + $0x4c] sm:$0xf]
      %v348 = vld [vmem:[%s236 + $0x50] sm:$0xf]
      %v349 = vld [vmem:[%s236 + $0x54] sm:$0xf]
      %v350 = vld [vmem:[%s236 + $0x58] sm:$0xf]
      %v351 = vld [vmem:[%s236 + $0x5c] sm:$0xf]
      %v352 = vld [vmem:[%s236 + $0x60] sm:$0xf]
      %v353 = vld [vmem:[%s236 + $0x64] sm:$0xf]
      %v354 = vld [vmem:[%s236 + $0x68] sm:$0xf]
      %v355 = vld [vmem:[%s236 + $0x6c] sm:$0xf]
      %v356 = vld [vmem:[%s236 + $0x70] sm:$0xf]
      %v357 = vld [vmem:[%s236 + $0x74] sm:$0xf]
      %v358 = vld [vmem:[%s236 + $0x78] sm:$0xf]
      %v359 = vld [vmem:[%s236 + $0x7c] sm:$0xf]
      %v360 = vld [vmem:[%s245] sm:$0xf]
      %v361 = vld [vmem:[%s245 + $0x4] sm:$0xf]
      %v362 = vld [vmem:[%s245 + $0x8] sm:$0xf]
      %v363 = vld [vmem:[%s245 + $0xc] sm:$0xf]
      %v364 = vld [vmem:[%s245 + $0x10] sm:$0xf]
      %v365 = vld [vmem:[%s245 + $0x14] sm:$0xf]
      %v366 = vld [vmem:[%s245 + $0x18] sm:$0xf]
      %v367 = vld [vmem:[%s245 + $0x1c] sm:$0xf]
      %v400 = vunpack.c.l.b16 %v328
      %v401 = vunpack.c.l.b16 %v329
      %v402 = vunpack.c.l.b16 %v330
      %v403 = vunpack.c.l.b16 %v331
      %v404 = vunpack.c.l.b16 %v332
      %v405 = vunpack.c.l.b16 %v333
      %v406 = vunpack.c.l.b16 %v334
      %v407 = vunpack.c.l.b16 %v335
      %v408 = vunpack.c.l.b16 %v336
      %v409 = vunpack.c.l.b16 %v337
      %v410 = vunpack.c.l.b16 %v338
      %v411 = vunpack.c.l.b16 %v339
      %v412 = vunpack.c.l.b16 %v340
      %v413 = vunpack.c.l.b16 %v341
      %v414 = vunpack.c.l.b16 %v342
      %v415 = vunpack.c.l.b16 %v343
      %v416 = vunpack.c.l.b16 %v344
      %v417 = vunpack.c.l.b16 %v345
      %v418 = vunpack.c.l.b16 %v346
      %v419 = vunpack.c.l.b16 %v347
      %v420 = vunpack.c.l.b16 %v348
      %v421 = vunpack.c.l.b16 %v349
      %v422 = vunpack.c.l.b16 %v350
      %v423 = vunpack.c.l.b16 %v351
      %v424 = vunpack.c.l.b16 %v352
      %v425 = vunpack.c.l.b16 %v353
      %v426 = vunpack.c.l.b16 %v354
      %v427 = vunpack.c.l.b16 %v355
      %v428 = vunpack.c.l.b16 %v356
      %v429 = vunpack.c.l.b16 %v357
      %v430 = vunpack.c.l.b16 %v358
      %v431 = vunpack.c.l.b16 %v359
      %v432 = vpack.c.b16 %v401, %v400
      %v433 = vpack.c.b16 %v403, %v402
      %v434 = vpack.c.b16 %v405, %v404
      %v435 = vpack.c.b16 %v407, %v406
      %v436 = vpack.c.b16 %v409, %v408
      %v437 = vpack.c.b16 %v411, %v410
      %v438 = vpack.c.b16 %v413, %v412
      %v439 = vpack.c.b16 %v415, %v414
      %v440 = vpack.c.b16 %v417, %v416
      %v441 = vpack.c.b16 %v419, %v418
      %v442 = vpack.c.b16 %v421, %v420
      %v443 = vpack.c.b16 %v423, %v422
      %v444 = vpack.c.b16 %v425, %v424
      %v445 = vpack.c.b16 %v427, %v426
      %v446 = vpack.c.b16 %v429, %v428
      %v447 = vpack.c.b16 %v431, %v430
      %v456 = vunpack.c.l.b16 %v360
      %v457 = vunpack.c.l.b16 %v361
      %v458 = vunpack.c.l.b16 %v362
      %v459 = vunpack.c.l.b16 %v363
      %v460 = vunpack.c.l.b16 %v364
      %v461 = vunpack.c.l.b16 %v365
      %v462 = vunpack.c.l.b16 %v366
      %v463 = vunpack.c.l.b16 %v367
      %v464 = vpack.c.b16 %v457, %v456
      %v465 = vpack.c.b16 %v459, %v458
      %v466 = vpack.c.b16 %v461, %v460
      %v467 = vpack.c.b16 %v463, %v462
      %vm472 = vcmask 523264
      %v474 = vsel %vm472, %v432, 0
      %v477 = vsel %vm472, %v433, 0
      %v480 = vsel %vm472, %v434, 0
      %v483 = vsel %vm472, %v435, 0
      %v486 = vsel %vm472, %v436, 0
      %v489 = vsel %vm472, %v437, 0
      %v492 = vsel %vm472, %v438, 0
      %v495 = vsel %vm472, %v439, 0
      %v498 = vsel %vm472, %v440, 0
      %v501 = vsel %vm472, %v441, 0
      %v504 = vsel %vm472, %v442, 0
      %v507 = vsel %vm472, %v443, 0
      %v510 = vsel %vm472, %v444, 0
      %v513 = vsel %vm472, %v445, 0
      %v516 = vsel %vm472, %v446, 0
      %v519 = vsel %vm472, %v447, 0
      %521 = vmatpush.bf16.msra.mxu0 0
      %522 = vmatpush.bf16.msra.mxu0 0
      %523 = vmatpush.bf16.msra.mxu0 0
      %524 = vmatpush.bf16.msra.mxu0 0
      %525 = vmatpush.bf16.msra.mxu0 %v467
      %526 = vmatpush.bf16.msra.mxu0 %v466
      %527 = vmatpush.bf16.msra.mxu0 %v465
      %528 = vmatpush.bf16.msra.mxu0 %v464
      %529 = vmatmul.bf16.gmra.mxu0 %v474
      %v530 = vpop.f32.mrf.mxu0
      %v531 = vadd.f32 0.0, %v530
      %v532 = vpop.f32.mrf.mxu0
      %v533 = vadd.f32 0.0, %v532
      %534 = vmatmul.bf16.gmra.mxu0 %v477
      %v535 = vpop.f32.mrf.mxu0
      %v536 = vadd.f32 0.0, %v535
      %v537 = vpop.f32.mrf.mxu0
      %v538 = vadd.f32 0.0, %v537
      %539 = vmatmul.bf16.gmra.mxu0 %v480
      %v540 = vpop.f32.mrf.mxu0
      %v541 = vadd.f32 0.0, %v540
      %v542 = vpop.f32.mrf.mxu0
      %v543 = vadd.f32 0.0, %v542
      %544 = vmatmul.bf16.gmra.mxu0 %v483
      %v545 = vpop.f32.mrf.mxu0
      %v546 = vadd.f32 0.0, %v545
      %v547 = vpop.f32.mrf.mxu0
      %v548 = vadd.f32 0.0, %v547
      %549 = vmatmul.bf16.gmra.mxu0 %v486
      %v550 = vpop.f32.mrf.mxu0
      %v551 = vadd.f32 0.0, %v550
      %v552 = vpop.f32.mrf.mxu0
      %v553 = vadd.f32 0.0, %v552
      %554 = vmatmul.bf16.gmra.mxu0 %v489
      %v555 = vpop.f32.mrf.mxu0
      %v556 = vadd.f32 0.0, %v555
      %v557 = vpop.f32.mrf.mxu0
      %v558 = vadd.f32 0.0, %v557
      %559 = vmatmul.bf16.gmra.mxu0 %v492
      %v560 = vpop.f32.mrf.mxu0
      %v561 = vadd.f32 0.0, %v560
      %v562 = vpop.f32.mrf.mxu0
      %v563 = vadd.f32 0.0, %v562
      %564 = vmatmul.bf16.gmra.mxu0 %v495
      %v565 = vpop.f32.mrf.mxu0
      %v566 = vadd.f32 0.0, %v565
      %v567 = vpop.f32.mrf.mxu0
      %v568 = vadd.f32 0.0, %v567
      %569 = vmatmul.bf16.gmra.mxu0 %v498
      %v570 = vpop.f32.mrf.mxu0
      %v571 = vadd.f32 0.0, %v570
      %v572 = vpop.f32.mrf.mxu0
      %v573 = vadd.f32 0.0, %v572
      %574 = vmatmul.bf16.gmra.mxu0 %v501
      %v575 = vpop.f32.mrf.mxu0
      %v576 = vadd.f32 0.0, %v575
      %v577 = vpop.f32.mrf.mxu0
      %v578 = vadd.f32 0.0, %v577
      %579 = vmatmul.bf16.gmra.mxu0 %v504
      %v580 = vpop.f32.mrf.mxu0
      %v581 = vadd.f32 0.0, %v580
      %v582 = vpop.f32.mrf.mxu0
      %v583 = vadd.f32 0.0, %v582
      %584 = vmatmul.bf16.gmra.mxu0 %v507
      %v585 = vpop.f32.mrf.mxu0
      %v586 = vadd.f32 0.0, %v585
      %v587 = vpop.f32.mrf.mxu0
      %v588 = vadd.f32 0.0, %v587
      %589 = vmatmul.bf16.gmra.mxu0 %v510
      %v590 = vpop.f32.mrf.mxu0
      %v591 = vadd.f32 0.0, %v590
      %v592 = vpop.f32.mrf.mxu0
      %v593 = vadd.f32 0.0, %v592
      %594 = vmatmul.bf16.gmra.mxu0 %v513
      %v595 = vpop.f32.mrf.mxu0
      %v596 = vadd.f32 0.0, %v595
      %v597 = vpop.f32.mrf.mxu0
      %v598 = vadd.f32 0.0, %v597
      %599 = vmatmul.bf16.gmra.mxu0 %v516
      %v600 = vpop.f32.mrf.mxu0
      %v601 = vadd.f32 0.0, %v600
      %v602 = vpop.f32.mrf.mxu0
      %v603 = vadd.f32 0.0, %v602
      %604 = vmatmul.bf16.gmra.mxu0 %v519
      %v605 = vpop.f32.mrf.mxu0
      %v606 = vadd.f32 0.0, %v605
      %v607 = vpop.f32.mrf.mxu0
      %v608 = vadd.f32 0.0, %v607
      %609 = vdwg.mxu0
      %v610 = vadd.f32 %v296, %v531
      %v611 = vadd.f32 %v297, %v533
      %v612 = vadd.f32 %v298, %v536
      %v613 = vadd.f32 %v299, %v538
      %v614 = vadd.f32 %v300, %v541
      %v615 = vadd.f32 %v301, %v543
      %v616 = vadd.f32 %v302, %v546
      %v617 = vadd.f32 %v303, %v548
      %v618 = vadd.f32 %v304, %v551
      %v619 = vadd.f32 %v305, %v553
      %v620 = vadd.f32 %v306, %v556
      %v621 = vadd.f32 %v307, %v558
      %v622 = vadd.f32 %v308, %v561
      %v623 = vadd.f32 %v309, %v563
      %v624 = vadd.f32 %v310, %v566
      %v625 = vadd.f32 %v311, %v568
      %v626 = vadd.f32 %v312, %v571
      %v627 = vadd.f32 %v313, %v573
      %v628 = vadd.f32 %v314, %v576
      %v629 = vadd.f32 %v315, %v578
      %v630 = vadd.f32 %v316, %v581
      %v631 = vadd.f32 %v317, %v583
      %v632 = vadd.f32 %v318, %v586
      %v633 = vadd.f32 %v319, %v588
      %v634 = vadd.f32 %v320, %v591
      %v635 = vadd.f32 %v321, %v593
      %v636 = vadd.f32 %v322, %v596
      %v637 = vadd.f32 %v323, %v598
      %v638 = vadd.f32 %v324, %v601
      %v639 = vadd.f32 %v325, %v603
      %v640 = vadd.f32 %v326, %v606
      %v641 = vadd.f32 %v327, %v608
      %642 = vst [vmem:[#allocation2] sm:$0xff] %v610
      %643 = vst [vmem:[#allocation2 + $0x8] sm:$0xff] %v611
      %644 = vst [vmem:[#allocation2 + $0x10] sm:$0xff] %v612
      %645 = vst [vmem:[#allocation2 + $0x18] sm:$0xff] %v613
      %646 = vst [vmem:[#allocation2 + $0x20] sm:$0xff] %v614
      %647 = vst [vmem:[#allocation2 + $0x28] sm:$0xff] %v615
      %648 = vst [vmem:[#allocation2 + $0x30] sm:$0xff] %v616
      %649 = vst [vmem:[#allocation2 + $0x38] sm:$0xff] %v617
      %650 = vst [vmem:[#allocation2 + $0x40] sm:$0xff] %v618
      %651 = vst [vmem:[#allocation2 + $0x48] sm:$0xff] %v619
      %652 = vst [vmem:[#allocation2 + $0x50] sm:$0xff] %v620
      %653 = vst [vmem:[#allocation2 + $0x58] sm:$0xff] %v621
      %654 = vst [vmem:[#allocation2 + $0x60] sm:$0xff] %v622
      %655 = vst [vmem:[#allocation2 + $0x68] sm:$0xff] %v623
      %656 = vst [vmem:[#allocation2 + $0x70] sm:$0xff] %v624
      %657 = vst [vmem:[#allocation2 + $0x78] sm:$0xff] %v625
      %658 = vst [vmem:[#allocation2 + $0x80] sm:$0xff] %v626
      %659 = vst [vmem:[#allocation2 + $0x88] sm:$0xff] %v627
      %660 = vst [vmem:[#allocation2 + $0x90] sm:$0xff] %v628
      %661 = vst [vmem:[#allocation2 + $0x98] sm:$0xff] %v629
      %662 = vst [vmem:[#allocation2 + $0xa0] sm:$0xff] %v630
      %663 = vst [vmem:[#allocation2 + $0xa8] sm:$0xff] %v631
      %664 = vst [vmem:[#allocation2 + $0xb0] sm:$0xff] %v632
      %665 = vst [vmem:[#allocation2 + $0xb8] sm:$0xff] %v633
      %666 = vst [vmem:[#allocation2 + $0xc0] sm:$0xff] %v634
      %667 = vst [vmem:[#allocation2 + $0xc8] sm:$0xff] %v635
      %668 = vst [vmem:[#allocation2 + $0xd0] sm:$0xff] %v636
      %669 = vst [vmem:[#allocation2 + $0xd8] sm:$0xff] %v637
      %670 = vst [vmem:[#allocation2 + $0xe0] sm:$0xff] %v638
      %671 = vst [vmem:[#allocation2 + $0xe8] sm:$0xff] %v639
      %672 = vst [vmem:[#allocation2 + $0xf0] sm:$0xff] %v640
      %673 = vst [vmem:[#allocation2 + $0xf8] sm:$0xff] %v641
      // Predicated region
      $region37: #{attention_forward.5} parent=31 // pred_check
        %p674 = pneg %p260
      $region38: #{attention_forward.5} parent=31 // pred_check_branch
        %676 = sbr.rel (%p674) target = $region40
      $region39: #{attention_forward.5} parent=31 // pred_region
        %v677 = vld [vmem:[#allocation2] sm:$0xff]
        %v678 = vld [vmem:[#allocation2 + $0x8] sm:$0xff]
        %v679 = vld [vmem:[#allocation2 + $0x10] sm:$0xff]
        %v680 = vld [vmem:[#allocation2 + $0x18] sm:$0xff]
        %v681 = vld [vmem:[#allocation2 + $0x20] sm:$0xff]
        %v682 = vld [vmem:[#allocation2 + $0x28] sm:$0xff]
        %v683 = vld [vmem:[#allocation2 + $0x30] sm:$0xff]
        %v684 = vld [vmem:[#allocation2 + $0x38] sm:$0xff]
        %v685 = vld [vmem:[#allocation2 + $0x40] sm:$0xff]
        %v686 = vld [vmem:[#allocation2 + $0x48] sm:$0xff]
        %v687 = vld [vmem:[#allocation2 + $0x50] sm:$0xff]
        %v688 = vld [vmem:[#allocation2 + $0x58] sm:$0xff]
        %v689 = vld [vmem:[#allocation2 + $0x60] sm:$0xff]
        %v690 = vld [vmem:[#allocation2 + $0x68] sm:$0xff]
        %v691 = vld [vmem:[#allocation2 + $0x70] sm:$0xff]
        %v692 = vld [vmem:[#allocation2 + $0x78] sm:$0xff]
        %v693 = vld [vmem:[#allocation2 + $0x80] sm:$0xff]
        %v694 = vld [vmem:[#allocation2 + $0x88] sm:$0xff]
        %v695 = vld [vmem:[#allocation2 + $0x90] sm:$0xff]
        %v696 = vld [vmem:[#allocation2 + $0x98] sm:$0xff]
        %v697 = vld [vmem:[#allocation2 + $0xa0] sm:$0xff]
        %v698 = vld [vmem:[#allocation2 + $0xa8] sm:$0xff]
        %v699 = vld [vmem:[#allocation2 + $0xb0] sm:$0xff]
        %v700 = vld [vmem:[#allocation2 + $0xb8] sm:$0xff]
        %v701 = vld [vmem:[#allocation2 + $0xc0] sm:$0xff]
        %v702 = vld [vmem:[#allocation2 + $0xc8] sm:$0xff]
        %v703 = vld [vmem:[#allocation2 + $0xd0] sm:$0xff]
        %v704 = vld [vmem:[#allocation2 + $0xd8] sm:$0xff]
        %v705 = vld [vmem:[#allocation2 + $0xe0] sm:$0xff]
        %v706 = vld [vmem:[#allocation2 + $0xe8] sm:$0xff]
        %v707 = vld [vmem:[#allocation2 + $0xf0] sm:$0xff]
        %v708 = vld [vmem:[#allocation2 + $0xf8] sm:$0xff]
        %v709 = vld [vmem:[%s249] sm:$0x1]
        %v711 = vperm.slane %v709, 0
        %v713 = vadd.f32 %v677, %v711
        %v714 = vadd.f32 %v678, %v711
        %v715 = vadd.f32 %v679, %v711
        %v716 = vadd.f32 %v680, %v711
        %v717 = vadd.f32 %v681, %v711
        %v718 = vadd.f32 %v682, %v711
        %v719 = vadd.f32 %v683, %v711
        %v720 = vadd.f32 %v684, %v711
        %v721 = vadd.f32 %v685, %v711
        %v722 = vadd.f32 %v686, %v711
        %v723 = vadd.f32 %v687, %v711
        %v724 = vadd.f32 %v688, %v711
        %v725 = vadd.f32 %v689, %v711
        %v726 = vadd.f32 %v690, %v711
        %v727 = vadd.f32 %v691, %v711
        %v728 = vadd.f32 %v692, %v711
        %v729 = vadd.f32 %v693, %v711
        %v730 = vadd.f32 %v694, %v711
        %v731 = vadd.f32 %v695, %v711
        %v732 = vadd.f32 %v696, %v711
        %v733 = vadd.f32 %v697, %v711
        %v734 = vadd.f32 %v698, %v711
        %v735 = vadd.f32 %v699, %v711
        %v736 = vadd.f32 %v700, %v711
        %v737 = vadd.f32 %v701, %v711
        %v738 = vadd.f32 %v702, %v711
        %v739 = vadd.f32 %v703, %v711
        %v740 = vadd.f32 %v704, %v711
        %v741 = vadd.f32 %v705, %v711
        %v742 = vadd.f32 %v706, %v711
        %v743 = vadd.f32 %v707, %v711
        %v744 = vadd.f32 %v708, %v711
        %v745 = vpack.c.bf16 %v713, %v713
        %v746 = vpack.c.bf16 %v714, %v714
        %v747 = vpack.c.bf16 %v715, %v715
        %v748 = vpack.c.bf16 %v716, %v716
        %v749 = vpack.c.bf16 %v717, %v717
        %v750 = vpack.c.bf16 %v718, %v718
        %v751 = vpack.c.bf16 %v719, %v719
        %v752 = vpack.c.bf16 %v720, %v720
        %v753 = vpack.c.bf16 %v721, %v721
        %v754 = vpack.c.bf16 %v722, %v722
        %v755 = vpack.c.bf16 %v723, %v723
        %v756 = vpack.c.bf16 %v724, %v724
        %v757 = vpack.c.bf16 %v725, %v725
        %v758 = vpack.c.bf16 %v726, %v726
        %v759 = vpack.c.bf16 %v727, %v727
        %v760 = vpack.c.bf16 %v728, %v728
        %v761 = vpack.c.bf16 %v729, %v729
        %v762 = vpack.c.bf16 %v730, %v730
        %v763 = vpack.c.bf16 %v731, %v731
        %v764 = vpack.c.bf16 %v732, %v732
        %v765 = vpack.c.bf16 %v733, %v733
        %v766 = vpack.c.bf16 %v734, %v734
        %v767 = vpack.c.bf16 %v735, %v735
        %v768 = vpack.c.bf16 %v736, %v736
        %v769 = vpack.c.bf16 %v737, %v737
        %v770 = vpack.c.bf16 %v738, %v738
        %v771 = vpack.c.bf16 %v739, %v739
        %v772 = vpack.c.bf16 %v740, %v740
        %v773 = vpack.c.bf16 %v741, %v741
        %v774 = vpack.c.bf16 %v742, %v742
        %v775 = vpack.c.bf16 %v743, %v743
        %v776 = vpack.c.bf16 %v744, %v744
        %777 = vst [vmem:[%s257] sm:$0xf] %v745
        %778 = vst [vmem:[%s257 + $0x4] sm:$0xf] %v746
        %779 = vst [vmem:[%s257 + $0x8] sm:$0xf] %v747
        %780 = vst [vmem:[%s257 + $0xc] sm:$0xf] %v748
        %781 = vst [vmem:[%s257 + $0x10] sm:$0xf] %v749
        %782 = vst [vmem:[%s257 + $0x14] sm:$0xf] %v750
        %783 = vst [vmem:[%s257 + $0x18] sm:$0xf] %v751
        %784 = vst [vmem:[%s257 + $0x1c] sm:$0xf] %v752
        %785 = vst [vmem:[%s257 + $0x20] sm:$0xf] %v753
        %786 = vst [vmem:[%s257 + $0x24] sm:$0xf] %v754
        %787 = vst [vmem:[%s257 + $0x28] sm:$0xf] %v755
        %788 = vst [vmem:[%s257 + $0x2c] sm:$0xf] %v756
        %789 = vst [vmem:[%s257 + $0x30] sm:$0xf] %v757
        %790 = vst [vmem:[%s257 + $0x34] sm:$0xf] %v758
        %791 = vst [vmem:[%s257 + $0x38] sm:$0xf] %v759
        %792 = vst [vmem:[%s257 + $0x3c] sm:$0xf] %v760
        %793 = vst [vmem:[%s257 + $0x40] sm:$0xf] %v761
        %794 = vst [vmem:[%s257 + $0x44] sm:$0xf] %v762
        %795 = vst [vmem:[%s257 + $0x48] sm:$0xf] %v763
        %796 = vst [vmem:[%s257 + $0x4c] sm:$0xf] %v764
        %797 = vst [vmem:[%s257 + $0x50] sm:$0xf] %v765
        %798 = vst [vmem:[%s257 + $0x54] sm:$0xf] %v766
        %799 = vst [vmem:[%s257 + $0x58] sm:$0xf] %v767
        %800 = vst [vmem:[%s257 + $0x5c] sm:$0xf] %v768
        %801 = vst [vmem:[%s257 + $0x60] sm:$0xf] %v769
        %802 = vst [vmem:[%s257 + $0x64] sm:$0xf] %v770
        %803 = vst [vmem:[%s257 + $0x68] sm:$0xf] %v771
        %804 = vst [vmem:[%s257 + $0x6c] sm:$0xf] %v772
        %805 = vst [vmem:[%s257 + $0x70] sm:$0xf] %v773
        %806 = vst [vmem:[%s257 + $0x74] sm:$0xf] %v774
        %807 = vst [vmem:[%s257 + $0x78] sm:$0xf] %v775
        %808 = vst [vmem:[%s257 + $0x7c] sm:$0xf] %v776
      $region40: #{attention_forward.5} parent=31 // pred_fallthru
        _
      %s809 = smul.u32 32, %s19
      %p810 = scmp.lt.s32.totalorder %s809, 63
      %s811 = scalar_select %p810, %s809, 63
      %p812 = scmp.lt.s32.totalorder %s20, 0
      %s813 = scalar_select %p812, %s20, 0
      %s814 = sadd.s32 %s813, %s811
      %s815 = smul.addr %s814, 4
      %s816 = scalar_lea.vmem %s3, %s815
      // Predicated region
      $region41: #{attention_forward.5} parent=31 // pred_check
        %p817 = pneg %p135
      $region42: #{attention_forward.5} parent=31 // pred_check_branch
        %819 = sbr.rel (%p817) target = $region44
      $region43: #{attention_forward.5} parent=31 // pred_region
        %s820 = smul.u32 32, %s19
      $region44: #{attention_forward.5} parent=31 // pred_fallthru
        _
    $region32: #{attention_forward.5} parent=5 // pred_fallthru
      _
    %p821 = scmp.le.s32.totalorder 2, %s9
    // Predicated region
    $region45: #{attention_forward.5} parent=5 // pred_check
      %p822 = pneg %p821
    $region46: #{attention_forward.5} parent=5 // pred_check_branch
      %824 = sbr.rel (%p822) target = $region48
    $region47: #{attention_forward.5} parent=5 // pred_region
      %s825 = ssub.s32 %s9, 2
      // Predicated region
      $region49: #{attention_forward.5} parent=47 // pred_check
        %p826 = pneg %p141
      $region50: #{attention_forward.5} parent=47 // pred_check_branch
        %828 = sbr.rel (%p826) target = $region52
      $region51: #{attention_forward.5} parent=47 // pred_region
        %s829 = smul.u32 32, %s22
        %p830 = scmp.lt.s32.totalorder %s829, 63
        %s831 = scalar_select %p830, %s829, 63
        %p832 = scmp.lt.s32.totalorder %s23, 0
        %s833 = scalar_select %p832, %s23, 0
        %s834 = sadd.s32 %s833, %s831
        %s835 = smul.addr %s834, 4
        %s836 = scalar_lea.vmem %s3, %s835
      $region52: #{attention_forward.5} parent=47 // pred_fallthru
        _
    $region48: #{attention_forward.5} parent=5 // pred_fallthru
      _
  $region6: #{attention_forward.5} parent=0 // loop_footer
    %s13 = sadd.s32 1, %s9
  $region7: #{attention_forward.5} parent=0 // loop_footer_branch
    %8 = sbr.rel target = $region3
  $region8: #{attention_forward.5} parent=0 // loop_exit
    _

// kernel: attention_forward.8
$region0: #{attention_forward.8}
  #allocation0 [shape = 'u32[]', space=smem, size = 0x4, offset = 0x4, fixed_abs, tag = 'smem constant byte address 0x4 - core index']
  #allocation1 [shape = 'u32[72,128]{1,0:T(1,128)}', space=vmem, size = 0x9000, scoped, tag = 'internal scratch']
  %s0 = inlined_call_operand.vmem [shape: bf16[2,256,64], index: 0, kind: input, shape index: {}]
  %s1 = inlined_call_operand.vmem [shape: bf16[2,64,64], index: 1, kind: input, shape index: {}]
  %s2 = inlined_call_operand.vmem [shape: bf16[2,64,64], index: 2, kind: input, shape index: {}]
  %s3 = inlined_call_operand.vmem [shape: bf16[2,256,64], index: 3, kind: output, shape index: {}]
  %s4 = sld [smem:[#allocation0]]
  $region45: #{attention_forward.8} parent=0
    _
  %s6 = ssub.s32 1, %s4
  %s7 = scalar_select 0, %s6, %s4
  loop: start=0, step=1, limit=4
  $region2: #{attention_forward.8} parent=0 // loop_pre_header
    _
  $region3: #{attention_forward.8} parent=0 // loop_header
    %s9 = sphi 0, %s13
    %p10 = scmp.ge.s32.totalorder %s9, 4
    %s19 = sphi 0, %s21
    %s22 = sphi 0, %s19
    %s23 = sphi 0, %s22
    %s39 = sphi 0, %s23
    %s45 = sphi 0, %s47
    %s48 = sphi 0, %s45
    %s49 = sphi 0, %s48
    %s65 = sphi 0, %s49
    %s71 = sphi 0, %s73
    %s74 = sphi 0, %s71
    %s75 = sphi 0, %s74
    %s91 = sphi 0, %s75
    %s97 = sphi 0, %s99
    %s100 = sphi 0, %s97
    %s101 = sphi 0, %s100
    %s117 = sphi 0, %s101
  $region4: #{attention_forward.8} parent=0 // loop_header_branch
    %12 = sbr.rel (%p10) target = $region8
  $region5: #{attention_forward.8} parent=0 // loop_body
    %s14 = ssub.s32 %s9, 1
    %s15 = ssub.s32 %s9, 2
    %s16 = sadd.s32 %s9, 1
    %s17 = ssub.s32 %s9, %s16
    %p18 = scmp.eq.s32.totalorder %s17, 0
    %s20 = sadd.s32 %s19, 1
    %s21 = scalar_select %p18, %s19, %s20
    %p24 = pneg %p18
    %p25 = scmp.eq.s32.totalorder %s9, 1
    %p26 = por %p24, %p25
    %p27 = scmp.ne.s32.totalorder %s19, %s22
    %p28 = scmp.eq.s32.totalorder %s9, 0
    %p29 = por %p27, %p28
    %p30 = scmp.ne.s32.totalorder %s19, %s22
    %p31 = scmp.eq.s32.totalorder %s14, 1
    %p32 = por %p30, %p31
    %p33 = scmp.ne.s32.totalorder %s22, %s23
    %p34 = scmp.eq.s32.totalorder %s14, 0
    %p35 = por %p33, %p34
    %p36 = scmp.ne.s32.totalorder %s22, %s23
    %p37 = scmp.eq.s32.totalorder %s15, 1
    %p38 = por %p36, %p37
    %p40 = scmp.ne.s32.totalorder %s23, %s39
    %p41 = scmp.eq.s32.totalorder %s15, 0
    %p42 = por %p40, %p41
    %s43 = ssub.s32 %s9, %s16
    %p44 = scmp.eq.s32.totalorder %s43, 0
    %s46 = sadd.s32 %s45, 1
    %s47 = scalar_select %p44, %s45, %s46
    %p50 = pneg %p44
    %p51 = scmp.eq.s32.totalorder %s9, 1
    %p52 = por %p50, %p51
    %p53 = scmp.ne.s32.totalorder %s45, %s48
    %p54 = scmp.eq.s32.totalorder %s9, 0
    %p55 = por %p53, %p54
    %p56 = scmp.ne.s32.totalorder %s45, %s48
    %p57 = scmp.eq.s32.totalorder %s14, 1
    %p58 = por %p56, %p57
    %p59 = scmp.ne.s32.totalorder %s48, %s49
    %p60 = scmp.eq.s32.totalorder %s14, 0
    %p61 = por %p59, %p60
    %p62 = scmp.ne.s32.totalorder %s48, %s49
    %p63 = scmp.eq.s32.totalorder %s15, 1
    %p64 = por %p62, %p63
    %p66 = scmp.ne.s32.totalorder %s49, %s65
    %p67 = scmp.eq.s32.totalorder %s15, 0
    %p68 = por %p66, %p67
    %s69 = ssub.s32 %s9, %s16
    %p70 = scmp.eq.s32.totalorder %s69, 0
    %s72 = sadd.s32 %s71, 1
    %s73 = scalar_select %p70, %s71, %s72
    %p76 = pneg %p70
    %p77 = scmp.eq.s32.totalorder %s9, 1
    %p78 = por %p76, %p77
    %p79 = scmp.ne.s32.totalorder %s71, %s74
    %p80 = scmp.eq.s32.totalorder %s9, 0
    %p81 = por %p79, %p80
    %p82 = scmp.ne.s32.totalorder %s71, %s74
    %p83 = scmp.eq.s32.totalorder %s14, 1
    %p84 = por %p82, %p83
    %p85 = scmp.ne.s32.totalorder %s74, %s75
    %p86 = scmp.eq.s32.totalorder %s14, 0
    %p87 = por %p85, %p86
    %p88 = scmp.ne.s32.totalorder %s74, %s75
    %p89 = scmp.eq.s32.totalorder %s15, 1
    %p90 = por %p88, %p89
    %p92 = scmp.ne.s32.totalorder %s75, %s91
    %p93 = scmp.eq.s32.totalorder %s15, 0
    %p94 = por %p92, %p93
    %s95 = ssub.s32 %s9, %s16
    %p96 = scmp.eq.s32.totalorder %s95, 0
    %s98 = sadd.s32 %s97, 1
    %s99 = scalar_select %p96, %s97, %s98
    %p102 = pneg %p96
    %p103 = scmp.eq.s32.totalorder %s9, 1
    %p104 = por %p102, %p103
    %p105 = scmp.ne.s32.totalorder %s97, %s100
    %p106 = scmp.eq.s32.totalorder %s9, 0
    %p107 = por %p105, %p106
    %p108 = scmp.ne.s32.totalorder %s97, %s100
    %p109 = scmp.eq.s32.totalorder %s14, 1
    %p110 = por %p108, %p109
    %p111 = scmp.ne.s32.totalorder %s100, %s101
    %p112 = scmp.eq.s32.totalorder %s14, 0
    %p113 = por %p111, %p112
    %p114 = scmp.ne.s32.totalorder %s100, %s101
    %p115 = scmp.eq.s32.totalorder %s15, 1
    %p116 = por %p114, %p115
    %p118 = scmp.ne.s32.totalorder %s101, %s117
    %p119 = scmp.eq.s32.totalorder %s15, 0
    %p120 = por %p118, %p119
    %p121 = scmp.le.s32.totalorder 1, %s9
    %p122 = scmp.lt.s32.totalorder %s9, 3
    %p123 = pnand %p121, %p122
    %p124 = pneg %p123
    // Predicated region
    $region9: #{attention_forward.8} parent=5 // pred_check
      _
    $region10: #{attention_forward.8} parent=5 // pred_check_branch
      %126 = sbr.rel (%p123) target = $region12
    $region11: #{attention_forward.8} parent=5 // pred_region
      %s127 = ssub.s32 %s9, 1
    $region12: #{attention_forward.8} parent=5 // pred_fallthru
      _
    %p128 = scmp.lt.s32.totalorder %s9, 2
    // Predicated region
    $region13: #{attention_forward.8} parent=5 // pred_check
      %p129 = pneg %p128
    $region14: #{attention_forward.8} parent=5 // pred_check_branch
      %131 = sbr.rel (%p129) target = $region16
    $region15: #{attention_forward.8} parent=5 // pred_region
      // Predicated region
      $region17: #{attention_forward.8} parent=15 // pred_check
        %p132 = pneg %p29
      $region18: #{attention_forward.8} parent=15 // pred_check_branch
        %134 = sbr.rel (%p132) target = $region20
      $region19: #{attention_forward.8} parent=15 // pred_region
        %p135 = scmp.lt.s32.totalorder %s9, 1
        %s136 = scalar_select %p135, %s9, 1
        %s137 = smul.addr %s136, 32
        %s138 = smul.addr %s137, 4
        %s139 = scalar_lea.vmem %s0, %s138
      $region20: #{attention_forward.8} parent=15 // pred_fallthru
        _
      // Predicated region
      $region21: #{attention_forward.8} parent=15 // pred_check
        %p140 = pneg %p55
      $region22: #{attention_forward.8} parent=15 // pred_check_branch
        %142 = sbr.rel (%p140) target = $region24
      $region23: #{attention_forward.8} parent=15 // pred_region
        %p143 = scmp.lt.s32.totalorder %s9, 1
        %s144 = scalar_select %p143, %s9, 1
        %s145 = smul.addr %s144, 8
        %s146 = smul.addr %s145, 4
        %s147 = scalar_lea.vmem %s1, %s146
      $region24: #{attention_forward.8} parent=15 // pred_fallthru
        _
      // Predicated region
      $region25: #{attention_forward.8} parent=15 // pred_check
        %p148 = pneg %p81
      $region26: #{attention_forward.8} parent=15 // pred_check_branch
        %150 = sbr.rel (%p148) target = $region28
      $region27: #{attention_forward.8} parent=15 // pred_region
        %p151 = scmp.lt.s32.totalorder %s9, 1
        %s152 = scalar_select %p151, %s9, 1
        %s153 = smul.addr %s152, 8
        %s154 = smul.addr %s153, 4
        %s155 = scalar_lea.vmem %s2, %s154
      $region28: #{attention_forward.8} parent=15 // pred_fallthru
        _
    $region16: #{attention_forward.8} parent=5 // pred_fallthru
      _
    %p156 = scmp.le.s32.totalorder 1, %s9
    %p157 = scmp.lt.s32.totalorder %s9, 3
    %p158 = pnand %p156, %p157
    %p159 = pneg %p158
    // Predicated region
    $region29: #{attention_forward.8} parent=5 // pred_check
      _
    $region30: #{attention_forward.8} parent=5 // pred_check_branch
      %161 = sbr.rel (%p158) target = $region32
    $region31: #{attention_forward.8} parent=5 // pred_region
      %s162 = ssub.s32 %s9, 1
      %p163 = scmp.lt.s32.totalorder %s14, 1
      %s164 = scalar_select %p163, %s14, 1
      %s165 = smul.addr %s164, 32
      %s166 = smul.addr %s165, 4
      %s167 = scalar_lea.vmem %s0, %s166
      %p168 = pneg %p35
      %p169 = pneg %p32
      %p170 = scmp.lt.s32.totalorder %s14, 1
      %s171 = scalar_select %p170, %s14, 1
      %s172 = smul.addr %s171, 8
      %s173 = smul.addr %s172, 4
      %s174 = scalar_lea.vmem %s1, %s173
      %p175 = pneg %p61
      %p176 = pneg %p58
      %p177 = scmp.lt.s32.totalorder %s14, 1
      %s178 = scalar_select %p177, %s14, 1
      %s179 = smul.addr %s178, 8
      %s180 = smul.addr %s179, 4
      %s181 = scalar_lea.vmem %s2, %s180
      %p182 = pneg %p87
      %p183 = pneg %p84
      %p184 = pneg %p113
      %p185 = pneg %p110
      %p186 = scmp.lt.s32.totalorder %s14, 1
      %s187 = scalar_select %p186, %s14, 1
      %s188 = smul.addr %s187, 32
      %s189 = smul.addr %s188, 4
      %s190 = scalar_lea.vmem %s3, %s189
      %p191 = scmp.lt.s32.totalorder %s14, 1
      %s192 = scalar_select %p191, %s14, 1
      %s193 = smul.addr %s192, 32
      %s194 = smul.addr %s193, 4
      %s195 = scalar_lea.vmem %s0, %s194
      %p196 = scmp.lt.s32.totalorder %s14, 1
      %s197 = scalar_select %p196, %s14, 1
      %s198 = smul.addr %s197, 8
      %s199 = smul.addr %s198, 4
      %s200 = scalar_lea.vmem %s1, %s199
      %p201 = scmp.lt.s32.totalorder %s14, 1
      %s202 = scalar_select %p201, %s14, 1
      %s203 = smul.addr %s202, 8
      %s204 = smul.addr %s203, 4
      %s205 = scalar_lea.vmem %s2, %s204
      %p206 = scmp.lt.s32.totalorder %s14, 1
      %s207 = scalar_select %p206, %s14, 1
      %s208 = smul.addr %s207, 32
      %s209 = smul.addr %s208, 4
      %s210 = scalar_lea.vmem %s3, %s209
      %v212 = vld [vmem:[%s195] sm:$0xf]
      %v213 = vld [vmem:[%s195 + $0x4] sm:$0xf]
      %v214 = vld [vmem:[%s195 + $0x8] sm:$0xf]
      %v215 = vld [vmem:[%s195 + $0xc] sm:$0xf]
      %v216 = vld [vmem:[%s195 + $0x10] sm:$0xf]
      %v217 = vld [vmem:[%s195 + $0x14] sm:$0xf]
      %v218 = vld [vmem:[%s195 + $0x18] sm:$0xf]
      %v219 = vld [vmem:[%s195 + $0x1c] sm:$0xf]
      %v220 = vld [vmem:[%s195 + $0x20] sm:$0xf]
      %v221 = vld [vmem:[%s195 + $0x24] sm:$0xf]
      %v222 = vld [vmem:[%s195 + $0x28] sm:$0xf]
      %v223 = vld [vmem:[%s195 + $0x2c] sm:$0xf]
      %v224 = vld [vmem:[%s195 + $0x30] sm:$0xf]
      %v225 = vld [vmem:[%s195 + $0x34] sm:$0xf]
      %v226 = vld [vmem:[%s195 + $0x38] sm:$0xf]
      %v227 = vld [vmem:[%s195 + $0x3c] sm:$0xf]
      %v228 = vld [vmem:[%s195 + $0x40] sm:$0xf]
      %v229 = vld [vmem:[%s195 + $0x44] sm:$0xf]
      %v230 = vld [vmem:[%s195 + $0x48] sm:$0xf]
      %v231 = vld [vmem:[%s195 + $0x4c] sm:$0xf]
      %v232 = vld [vmem:[%s195 + $0x50] sm:$0xf]
      %v233 = vld [vmem:[%s195 + $0x54] sm:$0xf]
      %v234 = vld [vmem:[%s195 + $0x58] sm:$0xf]
      %v235 = vld [vmem:[%s195 + $0x5c] sm:$0xf]
      %v236 = vld [vmem:[%s195 + $0x60] sm:$0xf]
      %v237 = vld [vmem:[%s195 + $0x64] sm:$0xf]
      %v238 = vld [vmem:[%s195 + $0x68] sm:$0xf]
      %v239 = vld [vmem:[%s195 + $0x6c] sm:$0xf]
      %v240 = vld [vmem:[%s195 + $0x70] sm:$0xf]
      %v241 = vld [vmem:[%s195 + $0x74] sm:$0xf]
      %v242 = vld [vmem:[%s195 + $0x78] sm:$0xf]
      %v243 = vld [vmem:[%s195 + $0x7c] sm:$0xf]
      %v244 = vunpack.c.l.bf16 %v212
      %v245 = vunpack.c.l.bf16 %v213
      %v246 = vunpack.c.l.bf16 %v214
      %v247 = vunpack.c.l.bf16 %v215
      %v248 = vunpack.c.l.bf16 %v216
      %v249 = vunpack.c.l.bf16 %v217
      %v250 = vunpack.c.l.bf16 %v218
      %v251 = vunpack.c.l.bf16 %v219
      %v252 = vunpack.c.l.bf16 %v220
      %v253 = vunpack.c.l.bf16 %v221
      %v254 = vunpack.c.l.bf16 %v222
      %v255 = vunpack.c.l.bf16 %v223
      %v256 = vunpack.c.l.bf16 %v224
      %v257 = vunpack.c.l.bf16 %v225
      %v258 = vunpack.c.l.bf16 %v226
      %v259 = vunpack.c.l.bf16 %v227
      %v260 = vunpack.c.l.bf16 %v228
      %v261 = vunpack.c.l.bf16 %v229
      %v262 = vunpack.c.l.bf16 %v230
      %v263 = vunpack.c.l.bf16 %v231
      %v264 = vunpack.c.l.bf16 %v232
      %v265 = vunpack.c.l.bf16 %v233
      %v266 = vunpack.c.l.bf16 %v234
      %v267 = vunpack.c.l.bf16 %v235
      %v268 = vunpack.c.l.bf16 %v236
      %v269 = vunpack.c.l.bf16 %v237
      %v270 = vunpack.c.l.bf16 %v238
      %v271 = vunpack.c.l.bf16 %v239
      %v272 = vunpack.c.l.bf16 %v240
      %v273 = vunpack.c.l.bf16 %v241
      %v274 = vunpack.c.l.bf16 %v242
      %v275 = vunpack.c.l.bf16 %v243
      %v276 = vmul.f32 %v244, 0.17677669
      %v277 = vmul.f32 %v245, 0.17677669
      %v278 = vmul.f32 %v246, 0.17677669
      %v279 = vmul.f32 %v247, 0.17677669
      %v280 = vmul.f32 %v248, 0.17677669
      %v281 = vmul.f32 %v249, 0.17677669
      %v282 = vmul.f32 %v250, 0.17677669
      %v283 = vmul.f32 %v251, 0.17677669
      %v284 = vmul.f32 %v252, 0.17677669
      %v285 = vmul.f32 %v253, 0.17677669
      %v286 = vmul.f32 %v254, 0.17677669
      %v287 = vmul.f32 %v255, 0.17677669
      %v288 = vmul.f32 %v256, 0.17677669
      %v289 = vmul.f32 %v257, 0.17677669
      %v290 = vmul.f32 %v258, 0.17677669
      %v291 = vmul.f32 %v259, 0.17677669
      %v292 = vmul.f32 %v260, 0.17677669
      %v293 = vmul.f32 %v261, 0.17677669
      %v294 = vmul.f32 %v262, 0.17677669
      %v295 = vmul.f32 %v263, 0.17677669
      %v296 = vmul.f32 %v264, 0.17677669
      %v297 = vmul.f32 %v265, 0.17677669
      %v298 = vmul.f32 %v266, 0.17677669
      %v299 = vmul.f32 %v267, 0.17677669
      %v300 = vmul.f32 %v268, 0.17677669
      %v301 = vmul.f32 %v269, 0.17677669
      %v302 = vmul.f32 %v270, 0.17677669
      %v303 = vmul.f32 %v271, 0.17677669
      %v304 = vmul.f32 %v272, 0.17677669
      %v305 = vmul.f32 %v273, 0.17677669
      %v306 = vmul.f32 %v274, 0.17677669
      %v307 = vmul.f32 %v275, 0.17677669
      %v308 = vld [vmem:[%s200] sm:$0xf]
      %v309 = vld [vmem:[%s200 + $0x4] sm:$0xf]
      %v310 = vld [vmem:[%s200 + $0x8] sm:$0xf]
      %v311 = vld [vmem:[%s200 + $0xc] sm:$0xf]
      %v312 = vld [vmem:[%s200 + $0x10] sm:$0xf]
      %v313 = vld [vmem:[%s200 + $0x14] sm:$0xf]
      %v314 = vld [vmem:[%s200 + $0x18] sm:$0xf]
      %v315 = vld [vmem:[%s200 + $0x1c] sm:$0xf]
      %v316 = vld [vmem:[%s205] sm:$0xf]
      %v317 = vld [vmem:[%s205 + $0x4] sm:$0xf]
      %v318 = vld [vmem:[%s205 + $0x8] sm:$0xf]
      %v319 = vld [vmem:[%s205 + $0xc] sm:$0xf]
      %v320 = vld [vmem:[%s205 + $0x10] sm:$0xf]
      %v321 = vld [vmem:[%s205 + $0x14] sm:$0xf]
      %v322 = vld [vmem:[%s205 + $0x18] sm:$0xf]
      %v323 = vld [vmem:[%s205 + $0x1c] sm:$0xf]
      %v324 = vpack.c.bf16 %v277, %v276
      %v325 = vpack.c.bf16 %v279, %v278
      %v326 = vpack.c.bf16 %v281, %v280
      %v327 = vpack.c.bf16 %v283, %v282
      %v328 = vpack.c.bf16 %v285, %v284
      %v329 = vpack.c.bf16 %v287, %v286
      %v330 = vpack.c.bf16 %v289, %v288
      %v331 = vpack.c.bf16 %v291, %v290
      %v332 = vpack.c.bf16 %v293, %v292
      %v333 = vpack.c.bf16 %v295, %v294
      %v334 = vpack.c.bf16 %v297, %v296
      %v335 = vpack.c.bf16 %v299, %v298
      %v336 = vpack.c.bf16 %v301, %v300
      %v337 = vpack.c.bf16 %v303, %v302
      %v338 = vpack.c.bf16 %v305, %v304
      %v339 = vpack.c.bf16 %v307, %v306
      %v348 = vunpack.c.l.b16 %v308
      %v349 = vunpack.c.l.b16 %v309
      %v350 = vunpack.c.l.b16 %v310
      %v351 = vunpack.c.l.b16 %v311
      %v352 = vunpack.c.l.b16 %v312
      %v353 = vunpack.c.l.b16 %v313
      %v354 = vunpack.c.l.b16 %v314
      %v355 = vunpack.c.l.b16 %v315
      %v356 = vpack.c.b16 %v349, %v348
      %v357 = vpack.c.b16 %v351, %v350
      %v358 = vpack.c.b16 %v353, %v352
      %v359 = vpack.c.b16 %v355, %v354
      %vm360 = vcmask 261120
      %v362 = vsel %vm360, %v324, 0
      %v365 = vsel %vm360, %v325, 0
      %v368 = vsel %vm360, %v326, 0
      %v371 = vsel %vm360, %v327, 0
      %v374 = vsel %vm360, %v328, 0
      %v377 = vsel %vm360, %v329, 0
      %v380 = vsel %vm360, %v330, 0
      %v383 = vsel %vm360, %v331, 0
      %v386 = vsel %vm360, %v332, 0
      %v389 = vsel %vm360, %v333, 0
      %v392 = vsel %vm360, %v334, 0
      %v395 = vsel %vm360, %v335, 0
      %v398 = vsel %vm360, %v336, 0
      %v401 = vsel %vm360, %v337, 0
      %v404 = vsel %vm360, %v338, 0
      %v407 = vsel %vm360, %v339, 0
      %v410 = vsel %vm360, %v356, 0
      %v413 = vsel %vm360, %v357, 0
      %v416 = vsel %vm360, %v358, 0
      %v419 = vsel %vm360, %v359, 0
      %421 = vmatpush.bf16.xpose.msra.mxu0 0
      %422 = vmatpush.bf16.xpose.msra.mxu0 0
      %423 = vmatpush.bf16.xpose.msra.mxu0 0
      %424 = vmatpush.bf16.xpose.msra.mxu0 0
      %425 = vmatpush.bf16.xpose.msra.mxu0 %v419
      %426 = vmatpush.bf16.xpose.msra.mxu0 %v416
      %427 = vmatpush.bf16.xpose.msra.mxu0 %v413
      %428 = vmatpush.bf16.xpose.msra.mxu0 %v410
      %429 = vmatmul.bf16.gmra.mxu0 %v362
      %v430 = vpop.f32.mrf.mxu0
      %v431 = vadd.f32 0.0, %v430
      %v432 = vpop.f32.mrf.mxu0
      %v433 = vadd.f32 0.0, %v432
      %434 = vmatmul.bf16.gmra.mxu0 %v365
      %v435 = vpop.f32.mrf.mxu0
      %v436 = vadd.f32 0.0, %v435
      %v437 = vpop.f32.mrf.mxu0
      %v438 = vadd.f32 0.0, %v437
      %439 = vmatmul.bf16.gmra.mxu0 %v368
      %v440 = vpop.f32.mrf.mxu0
      %v441 = vadd.f32 0.0, %v440
      %v442 = vpop.f32.mrf.mxu0
      %v443 = vadd.f32 0.0, %v442
      %444 = vmatmul.bf16.gmra.mxu0 %v371
      %v445 = vpop.f32.mrf.mxu0
      %v446 = vadd.f32 0.0, %v445
      %v447 = vpop.f32.mrf.mxu0
      %v448 = vadd.f32 0.0, %v447
      %449 = vmatmul.bf16.gmra.mxu0 %v374
      %v450 = vpop.f32.mrf.mxu0
      %v451 = vadd.f32 0.0, %v450
      %v452 = vpop.f32.mrf.mxu0
      %v453 = vadd.f32 0.0, %v452
      %454 = vmatmul.bf16.gmra.mxu0 %v377
      %v455 = vpop.f32.mrf.mxu0
      %v456 = vadd.f32 0.0, %v455
      %v457 = vpop.f32.mrf.mxu0
      %v458 = vadd.f32 0.0, %v457
      %459 = vmatmul.bf16.gmra.mxu0 %v380
      %v460 = vpop.f32.mrf.mxu0
      %v461 = vadd.f32 0.0, %v460
      %v462 = vpop.f32.mrf.mxu0
      %v463 = vadd.f32 0.0, %v462
      %464 = vmatmul.bf16.gmra.mxu0 %v383
      %v465 = vpop.f32.mrf.mxu0
      %v466 = vadd.f32 0.0, %v465
      %v467 = vpop.f32.mrf.mxu0
      %v468 = vadd.f32 0.0, %v467
      %469 = vmatmul.bf16.gmra.mxu0 %v386
      %v470 = vpop.f32.mrf.mxu0
      %v471 = vadd.f32 0.0, %v470
      %v472 = vpop.f32.mrf.mxu0
      %v473 = vadd.f32 0.0, %v472
      %474 = vmatmul.bf16.gmra.mxu0 %v389
      %v475 = vpop.f32.mrf.mxu0
      %v476 = vadd.f32 0.0, %v475
      %v477 = vpop.f32.mrf.mxu0
      %v478 = vadd.f32 0.0, %v477
      %479 = vmatmul.bf16.gmra.mxu0 %v392
      %v480 = vpop.f32.mrf.mxu0
      %v481 = vadd.f32 0.0, %v480
      %v482 = vpop.f32.mrf.mxu0
      %v483 = vadd.f32 0.0, %v482
      %484 = vmatmul.bf16.gmra.mxu0 %v395
      %v485 = vpop.f32.mrf.mxu0
      %v486 = vadd.f32 0.0, %v485
      %v487 = vpop.f32.mrf.mxu0
      %v488 = vadd.f32 0.0, %v487
      %489 = vmatmul.bf16.gmra.mxu0 %v398
      %v490 = vpop.f32.mrf.mxu0
      %v491 = vadd.f32 0.0, %v490
      %v492 = vpop.f32.mrf.mxu0
      %v493 = vadd.f32 0.0, %v492
      %494 = vmatmul.bf16.gmra.mxu0 %v401
      %v495 = vpop.f32.mrf.mxu0
      %v496 = vadd.f32 0.0, %v495
      %v497 = vpop.f32.mrf.mxu0
      %v498 = vadd.f32 0.0, %v497
      %499 = vmatmul.bf16.gmra.mxu0 %v404
      %v500 = vpop.f32.mrf.mxu0
      %v501 = vadd.f32 0.0, %v500
      %v502 = vpop.f32.mrf.mxu0
      %v503 = vadd.f32 0.0, %v502
      %504 = vmatmul.bf16.gmra.mxu0 %v407
      %v505 = vpop.f32.mrf.mxu0
      %v506 = vadd.f32 0.0, %v505
      %v507 = vpop.f32.mrf.mxu0
      %v508 = vadd.f32 0.0, %v507
      %509 = vdwg.mxu0
      %vm510 = vcmask 523264
      %v511 = vsel %vm510, %v431, -inf
      %512 = vmax.xlane.f32.xlu0 %v511
      %v513 = vpop.xlane.xlu0 %512
      %v514 = vsel %vm510, %v433, -inf
      %515 = vmax.xlane.f32.xlu0 %v514
      %v516 = vpop.xlane.xlu0 %515
      %v517 = vsel %vm510, %v436, -inf
      %518 = vmax.xlane.f32.xlu0 %v517
      %v519 = vpop.xlane.xlu0 %518
      %v520 = vsel %vm510, %v438, -inf
      %521 = vmax.xlane.f32.xlu0 %v520
      %v522 = vpop.xlane.xlu0 %521
      %v523 = vsel %vm510, %v441, -inf
      %524 = vmax.xlane.f32.xlu0 %v523
      %v525 = vpop.xlane.xlu0 %524
      %v526 = vsel %vm510, %v443, -inf
      %527 = vmax.xlane.f32.xlu0 %v526
      %v528 = vpop.xlane.xlu0 %527
      %v529 = vsel %vm510, %v446, -inf
      %530 = vmax.xlane.f32.xlu0 %v529
      %v531 = vpop.xlane.xlu0 %530
      %v532 = vsel %vm510, %v448, -inf
      %533 = vmax.xlane.f32.xlu0 %v532
      %v534 = vpop.xlane.xlu0 %533
      %v535 = vsel %vm510, %v451, -inf
      %536 = vmax.xlane.f32.xlu0 %v535
      %v537 = vpop.xlane.xlu0 %536
      %v538 = vsel %vm510, %v453, -inf
      %539 = vmax.xlane.f32.xlu0 %v538
      %v540 = vpop.xlane.xlu0 %539
      %v541 = vsel %vm510, %v456, -inf
      %542 = vmax.xlane.f32.xlu0 %v541
      %v543 = vpop.xlane.xlu0 %542
      %v544 = vsel %vm510, %v458, -inf
      %545 = vmax.xlane.f32.xlu0 %v544
      %v546 = vpop.xlane.xlu0 %545
      %v547 = vsel %vm510, %v461, -inf
      %548 = vmax.xlane.f32.xlu0 %v547
      %v549 = vpop.xlane.xlu0 %548
      %v550 = vsel %vm510, %v463, -inf
      %551 = vmax.xlane.f32.xlu0 %v550
      %v552 = vpop.xlane.xlu0 %551
      %v553 = vsel %vm510, %v466, -inf
      %554 = vmax.xlane.f32.xlu0 %v553
      %v555 = vpop.xlane.xlu0 %554
      %v556 = vsel %vm510, %v468, -inf
      %557 = vmax.xlane.f32.xlu0 %v556
      %v558 = vpop.xlane.xlu0 %557
      %v559 = vsel %vm510, %v471, -inf
      %560 = vmax.xlane.f32.xlu0 %v559
      %v561 = vpop.xlane.xlu0 %560
      %v562 = vsel %vm510, %v473, -inf
      %563 = vmax.xlane.f32.xlu0 %v562
      %v564 = vpop.xlane.xlu0 %563
      %v565 = vsel %vm510, %v476, -inf
      %566 = vmax.xlane.f32.xlu0 %v565
      %v567 = vpop.xlane.xlu0 %566
      %v568 = vsel %vm510, %v478, -inf
      %569 = vmax.xlane.f32.xlu0 %v568
      %v570 = vpop.xlane.xlu0 %569
      %v571 = vsel %vm510, %v481, -inf
      %572 = vmax.xlane.f32.xlu0 %v571
      %v573 = vpop.xlane.xlu0 %572
      %v574 = vsel %vm510, %v483, -inf
      %575 = vmax.xlane.f32.xlu0 %v574
      %v576 = vpop.xlane.xlu0 %575
      %v577 = vsel %vm510, %v486, -inf
      %578 = vmax.xlane.f32.xlu0 %v577
      %v579 = vpop.xlane.xlu0 %578
      %v580 = vsel %vm510, %v488, -inf
      %581 = vmax.xlane.f32.xlu0 %v580
      %v582 = vpop.xlane.xlu0 %581
      %v583 = vsel %vm510, %v491, -inf
      %584 = vmax.xlane.f32.xlu0 %v583
      %v585 = vpop.xlane.xlu0 %584
      %v586 = vsel %vm510, %v493, -inf
      %587 = vmax.xlane.f32.xlu0 %v586
      %v588 = vpop.xlane.xlu0 %587
      %v589 = vsel %vm510, %v496, -inf
      %590 = vmax.xlane.f32.xlu0 %v589
      %v591 = vpop.xlane.xlu0 %590
      %v592 = vsel %vm510, %v498, -inf
      %593 = vmax.xlane.f32.xlu0 %v592
      %v594 = vpop.xlane.xlu0 %593
      %v595 = vsel %vm510, %v501, -inf
      %596 = vmax.xlane.f32.xlu0 %v595
      %v597 = vpop.xlane.xlu0 %596
      %v598 = vsel %vm510, %v503, -inf
      %599 = vmax.xlane.f32.xlu0 %v598
      %v600 = vpop.xlane.xlu0 %599
      %v601 = vsel %vm510, %v506, -inf
      %602 = vmax.xlane.f32.xlu0 %v601
      %v603 = vpop.xlane.xlu0 %602
      %v604 = vsel %vm510, %v508, -inf
      %605 = vmax.xlane.f32.xlu0 %v604
      %v606 = vpop.xlane.xlu0 %605
      %v607 = vsub.f32 %v431, %v513
      %v608 = vsub.f32 %v433, %v516
      %v609 = vsub.f32 %v436, %v519
      %v610 = vsub.f32 %v438, %v522
      %v611 = vsub.f32 %v441, %v525
      %v612 = vsub.f32 %v443, %v528
      %v613 = vsub.f32 %v446, %v531
      %v614 = vsub.f32 %v448, %v534
      %v615 = vsub.f32 %v451, %v537
      %v616 = vsub.f32 %v453, %v540
      %v617 = vsub.f32 %v456, %v543
      %v618 = vsub.f32 %v458, %v546
      %v619 = vsub.f32 %v461, %v549
      %v620 = vsub.f32 %v463, %v552
      %v621 = vsub.f32 %v466, %v555
      %v622 = vsub.f32 %v468, %v558
      %v623 = vsub.f32 %v471, %v561
      %v624 = vsub.f32 %v473, %v564
      %v625 = vsub.f32 %v476, %v567
      %v626 = vsub.f32 %v478, %v570
      %v627 = vsub.f32 %v481, %v573
      %v628 = vsub.f32 %v483, %v576
      %v629 = vsub.f32 %v486, %v579
      %v630 = vsub.f32 %v488, %v582
      %v631 = vsub.f32 %v491, %v585
      %v632 = vsub.f32 %v493, %v588
      %v633 = vsub.f32 %v496, %v591
      %v634 = vsub.f32 %v498, %v594
      %v635 = vsub.f32 %v501, %v597
      %v636 = vsub.f32 %v503, %v600
      %v637 = vsub.f32 %v506, %v603
      %v638 = vsub.f32 %v508, %v606
      %v639 = vmul.f32 %v607, 1.442695
      %v640 = vpow.pop %v639
      %v641 = vmul.f32 %v608, 1.442695
      %v642 = vpow.pop %v641
      %v643 = vmul.f32 %v609, 1.442695
      %v644 = vpow.pop %v643
      %v645 = vmul.f32 %v610, 1.442695
      %v646 = vpow.pop %v645
      %v647 = vmul.f32 %v611, 1.442695
      %v648 = vpow.pop %v647
      %v649 = vmul.f32 %v612, 1.442695
      %v650 = vpow.pop %v649
      %v651 = vmul.f32 %v613, 1.442695
      %v652 = vpow.pop %v651
      %v653 = vmul.f32 %v614, 1.442695
      %v654 = vpow.pop %v653
      %v655 = vmul.f32 %v615, 1.442695
      %v656 = vpow.pop %v655
      %v657 = vmul.f32 %v616, 1.442695
      %v658 = vpow.pop %v657
      %v659 = vmul.f32 %v617, 1.442695
      %v660 = vpow.pop %v659
      %v661 = vmul.f32 %v618, 1.442695
      %v662 = vpow.pop %v661
      %v663 = vmul.f32 %v619, 1.442695
      %v664 = vpow.pop %v663
      %v665 = vmul.f32 %v620, 1.442695
      %v666 = vpow.pop %v665
      %v667 = vmul.f32 %v621, 1.442695
      %v668 = vpow.pop %v667
      %v669 = vmul.f32 %v622, 1.442695
      %v670 = vpow.pop %v669
      %v671 = vmul.f32 %v623, 1.442695
      %v672 = vpow.pop %v671
      %v673 = vmul.f32 %v624, 1.442695
      %v674 = vpow.pop %v673
      %v675 = vmul.f32 %v625, 1.442695
      %v676 = vpow.pop %v675
      %v677 = vmul.f32 %v626, 1.442695
      %v678 = vpow.pop %v677
      %v679 = vmul.f32 %v627, 1.442695
      %v680 = vpow.pop %v679
      %v681 = vmul.f32 %v628, 1.442695
      %v682 = vpow.pop %v681
      %v683 = vmul.f32 %v629, 1.442695
      %v684 = vpow.pop %v683
      %v685 = vmul.f32 %v630, 1.442695
      %v686 = vpow.pop %v685
      %v687 = vmul.f32 %v631, 1.442695
      %v688 = vpow.pop %v687
      %v689 = vmul.f32 %v632, 1.442695
      %v690 = vpow.pop %v689
      %v691 = vmul.f32 %v633, 1.442695
      %v692 = vpow.pop %v691
      %v693 = vmul.f32 %v634, 1.442695
      %v694 = vpow.pop %v693
      %v695 = vmul.f32 %v635, 1.442695
      %v696 = vpow.pop %v695
      %v697 = vmul.f32 %v636, 1.442695
      %v698 = vpow.pop %v697
      %v699 = vmul.f32 %v637, 1.442695
      %v700 = vpow.pop %v699
      %v701 = vmul.f32 %v638, 1.442695
      %v702 = vpow.pop %v701
      %v703 = vsel %vm510, %v640, 0.0
      %704 = vadd.xlane.f32.xlu0 %v703
      %v705 = vpop.xlane.xlu0 %704
      %v706 = vsel %vm510, %v642, 0.0
      %707 = vadd.xlane.f32.xlu0 %v706
      %v708 = vpop.xlane.xlu0 %707
      %v709 = vsel %vm510, %v644, 0.0
      %710 = vadd.xlane.f32.xlu0 %v709
      %v711 = vpop.xlane.xlu0 %710
      %v712 = vsel %vm510, %v646, 0.0
      %713 = vadd.xlane.f32.xlu0 %v712
      %v714 = vpop.xlane.xlu0 %713
      %v715 = vsel %vm510, %v648, 0.0
      %716 = vadd.xlane.f32.xlu0 %v715
      %v717 = vpop.xlane.xlu0 %716
      %v718 = vsel %vm510, %v650, 0.0
      %719 = vadd.xlane.f32.xlu0 %v718
      %v720 = vpop.xlane.xlu0 %719
      %v721 = vsel %vm510, %v652, 0.0
      %722 = vadd.xlane.f32.xlu0 %v721
      %v723 = vpop.xlane.xlu0 %722
      %v724 = vsel %vm510, %v654, 0.0
      %725 = vadd.xlane.f32.xlu0 %v724
      %v726 = vpop.xlane.xlu0 %725
      %v727 = vsel %vm510, %v656, 0.0
      %728 = vadd.xlane.f32.xlu0 %v727
      %v729 = vpop.xlane.xlu0 %728
      %v730 = vsel %vm510, %v658, 0.0
      %731 = vadd.xlane.f32.xlu0 %v730
      %v732 = vpop.xlane.xlu0 %731
      %v733 = vsel %vm510, %v660, 0.0
      %734 = vadd.xlane.f32.xlu0 %v733
      %v735 = vpop.xlane.xlu0 %734
      %v736 = vsel %vm510, %v662, 0.0
      %737 = vadd.xlane.f32.xlu0 %v736
      %v738 = vpop.xlane.xlu0 %737
      %v739 = vsel %vm510, %v664, 0.0
      %740 = vadd.xlane.f32.xlu0 %v739
      %v741 = vpop.xlane.xlu0 %740
      %v742 = vsel %vm510, %v666, 0.0
      %743 = vadd.xlane.f32.xlu0 %v742
      %v744 = vpop.xlane.xlu0 %743
      %v745 = vsel %vm510, %v668, 0.0
      %746 = vadd.xlane.f32.xlu0 %v745
      %v747 = vpop.xlane.xlu0 %746
      %v748 = vsel %vm510, %v670, 0.0
      %749 = vadd.xlane.f32.xlu0 %v748
      %v750 = vpop.xlane.xlu0 %749
      %v751 = vsel %vm510, %v672, 0.0
      %752 = vadd.xlane.f32.xlu0 %v751
      %v753 = vpop.xlane.xlu0 %752
      %v754 = vsel %vm510, %v674, 0.0
      %755 = vadd.xlane.f32.xlu0 %v754
      %v756 = vpop.xlane.xlu0 %755
      %v757 = vsel %vm510, %v676, 0.0
      %758 = vadd.xlane.f32.xlu0 %v757
      %v759 = vpop.xlane.xlu0 %758
      %v760 = vsel %vm510, %v678, 0.0
      %761 = vadd.xlane.f32.xlu0 %v760
      %v762 = vpop.xlane.xlu0 %761
      %v763 = vsel %vm510, %v680, 0.0
      %764 = vadd.xlane.f32.xlu0 %v763
      %v765 = vpop.xlane.xlu0 %764
      %v766 = vsel %vm510, %v682, 0.0
      %767 = vadd.xlane.f32.xlu0 %v766
      %v768 = vpop.xlane.xlu0 %767
      %v769 = vsel %vm510, %v684, 0.0
      %770 = vadd.xlane.f32.xlu0 %v769
      %v771 = vpop.xlane.xlu0 %770
      %v772 = vsel %vm510, %v686, 0.0
      %773 = vadd.xlane.f32.xlu0 %v772
      %v774 = vpop.xlane.xlu0 %773
      %v775 = vsel %vm510, %v688, 0.0
      %776 = vadd.xlane.f32.xlu0 %v775
      %v777 = vpop.xlane.xlu0 %776
      %v778 = vsel %vm510, %v690, 0.0
      %779 = vadd.xlane.f32.xlu0 %v778
      %v780 = vpop.xlane.xlu0 %779
      %v781 = vsel %vm510, %v692, 0.0
      %782 = vadd.xlane.f32.xlu0 %v781
      %v783 = vpop.xlane.xlu0 %782
      %v784 = vsel %vm510, %v694, 0.0
      %785 = vadd.xlane.f32.xlu0 %v784
      %v786 = vpop.xlane.xlu0 %785
      %v787 = vsel %vm510, %v696, 0.0
      %788 = vadd.xlane.f32.xlu0 %v787
      %v789 = vpop.xlane.xlu0 %788
      %v790 = vsel %vm510, %v698, 0.0
      %791 = vadd.xlane.f32.xlu0 %v790
      %v792 = vpop.xlane.xlu0 %791
      %v793 = vsel %vm510, %v700, 0.0
      %794 = vadd.xlane.f32.xlu0 %v793
      %v795 = vpop.xlane.xlu0 %794
      %v796 = vsel %vm510, %v702, 0.0
      %797 = vadd.xlane.f32.xlu0 %v796
      %v798 = vpop.xlane.xlu0 %797
      %v799 = vrcp.pop %v705
      %v800 = vrcp.pop %v708
      %v801 = vrcp.pop %v711
      %v802 = vrcp.pop %v714
      %v803 = vrcp.pop %v717
      %v804 = vrcp.pop %v720
      %v805 = vrcp.pop %v723
      %v806 = vrcp.pop %v726
      %v807 = vrcp.pop %v729
      %v808 = vrcp.pop %v732
      %v809 = vrcp.pop %v735
      %v810 = vrcp.pop %v738
      %v811 = vrcp.pop %v741
      %v812 = vrcp.pop %v744
      %v813 = vrcp.pop %v747
      %v814 = vrcp.pop %v750
      %v815 = vrcp.pop %v753
      %v816 = vrcp.pop %v756
      %v817 = vrcp.pop %v759
      %v818 = vrcp.pop %v762
      %v819 = vrcp.pop %v765
      %v820 = vrcp.pop %v768
      %v821 = vrcp.pop %v771
      %v822 = vrcp.pop %v774
      %v823 = vrcp.pop %v777
      %v824 = vrcp.pop %v780
      %v825 = vrcp.pop %v783
      %v826 = vrcp.pop %v786
      %v827 = vrcp.pop %v789
      %v828 = vrcp.pop %v792
      %v829 = vrcp.pop %v795
      %v830 = vrcp.pop %v798
      %v831 = vmul.f32 %v640, %v799
      %v832 = vmul.f32 %v642, %v800
      %v833 = vmul.f32 %v644, %v801
      %v834 = vmul.f32 %v646, %v802
      %v835 = vmul.f32 %v648, %v803
      %v836 = vmul.f32 %v650, %v804
      %v837 = vmul.f32 %v652, %v805
      %v838 = vmul.f32 %v654, %v806
      %v839 = vmul.f32 %v656, %v807
      %v840 = vmul.f32 %v658, %v808
      %v841 = vmul.f32 %v660, %v809
      %v842 = vmul.f32 %v662, %v810
      %v843 = vmul.f32 %v664, %v811
      %v844 = vmul.f32 %v666, %v812
      %v845 = vmul.f32 %v668, %v813
      %v846 = vmul.f32 %v670, %v814
      %v847 = vmul.f32 %v672, %v815
      %v848 = vmul.f32 %v674, %v816
      %v849 = vmul.f32 %v676, %v817
      %v850 = vmul.f32 %v678, %v818
      %v851 = vmul.f32 %v680, %v819
      %v852 = vmul.f32 %v682, %v820
      %v853 = vmul.f32 %v684, %v821
      %v854 = vmul.f32 %v686, %v822
      %v855 = vmul.f32 %v688, %v823
      %v856 = vmul.f32 %v690, %v824
      %v857 = vmul.f32 %v692, %v825
      %v858 = vmul.f32 %v694, %v826
      %v859 = vmul.f32 %v696, %v827
      %v860 = vmul.f32 %v698, %v828
      %v861 = vmul.f32 %v700, %v829
      %v862 = vmul.f32 %v702, %v830
      %v863 = vpack.c.bf16 %v832, %v831
      %v864 = vpack.c.bf16 %v834, %v833
      %v865 = vpack.c.bf16 %v836, %v835
      %v866 = vpack.c.bf16 %v838, %v837
      %v867 = vpack.c.bf16 %v840, %v839
      %v868 = vpack.c.bf16 %v842, %v841
      %v869 = vpack.c.bf16 %v844, %v843
      %v870 = vpack.c.bf16 %v846, %v845
      %v871 = vpack.c.bf16 %v848, %v847
      %v872 = vpack.c.bf16 %v850, %v849
      %v873 = vpack.c.bf16 %v852, %v851
      %v874 = vpack.c.bf16 %v854, %v853
      %v875 = vpack.c.bf16 %v856, %v855
      %v876 = vpack.c.bf16 %v858, %v857
      %v877 = vpack.c.bf16 %v860, %v859
      %v878 = vpack.c.bf16 %v862, %v861
      %v887 = vunpack.c.l.b16 %v316
      %v888 = vunpack.c.l.b16 %v317
      %v889 = vunpack.c.l.b16 %v318
      %v890 = vunpack.c.l.b16 %v319
      %v891 = vunpack.c.l.b16 %v320
      %v892 = vunpack.c.l.b16 %v321
      %v893 = vunpack.c.l.b16 %v322
      %v894 = vunpack.c.l.b16 %v323
      %v895 = vpack.c.b16 %v888, %v887
      %v896 = vpack.c.b16 %v890, %v889
      %v897 = vpack.c.b16 %v892, %v891
      %v898 = vpack.c.b16 %v894, %v893
      %v904 = vsel %vm510, %v863, 0
      %v907 = vsel %vm510, %v864, 0
      %v910 = vsel %vm510, %v865, 0
      %v913 = vsel %vm510, %v866, 0
      %v916 = vsel %vm510, %v867, 0
      %v919 = vsel %vm510, %v868, 0
      %v922 = vsel %vm510, %v869, 0
      %v925 = vsel %vm510, %v870, 0
      %v928 = vsel %vm510, %v871, 0
      %v931 = vsel %vm510, %v872, 0
      %v934 = vsel %vm510, %v873, 0
      %v937 = vsel %vm510, %v874, 0
      %v940 = vsel %vm510, %v875, 0
      %v943 = vsel %vm510, %v876, 0
      %v946 = vsel %vm510, %v877, 0
      %v949 = vsel %vm510, %v878, 0
      %951 = vmatpush.bf16.msra.mxu0 0
      %952 = vmatpush.bf16.msra.mxu0 0
      %953 = vmatpush.bf16.msra.mxu0 0
      %954 = vmatpush.bf16.msra.mxu0 0
      %955 = vmatpush.bf16.msra.mxu0 %v898
      %956 = vmatpush.bf16.msra.mxu0 %v897
      %957 = vmatpush.bf16.msra.mxu0 %v896
      %958 = vmatpush.bf16.msra.mxu0 %v895
      %959 = vmatmul.bf16.gmra.mxu0 %v904
      %v960 = vpop.f32.mrf.mxu0
      %v961 = vadd.f32 0.0, %v960
      %v962 = vpop.f32.mrf.mxu0
      %v963 = vadd.f32 0.0, %v962
      %964 = vmatmul.bf16.gmra.mxu0 %v907
      %v965 = vpop.f32.mrf.mxu0
      %v966 = vadd.f32 0.0, %v965
      %v967 = vpop.f32.mrf.mxu0
      %v968 = vadd.f32 0.0, %v967
      %969 = vmatmul.bf16.gmra.mxu0 %v910
      %v970 = vpop.f32.mrf.mxu0
      %v971 = vadd.f32 0.0, %v970
      %v972 = vpop.f32.mrf.mxu0
      %v973 = vadd.f32 0.0, %v972
      %974 = vmatmul.bf16.gmra.mxu0 %v913
      %v975 = vpop.f32.mrf.mxu0
      %v976 = vadd.f32 0.0, %v975
      %v977 = vpop.f32.mrf.mxu0
      %v978 = vadd.f32 0.0, %v977
      %979 = vmatmul.bf16.gmra.mxu0 %v916
      %v980 = vpop.f32.mrf.mxu0
      %v981 = vadd.f32 0.0, %v980
      %v982 = vpop.f32.mrf.mxu0
      %v983 = vadd.f32 0.0, %v982
      %984 = vmatmul.bf16.gmra.mxu0 %v919
      %v985 = vpop.f32.mrf.mxu0
      %v986 = vadd.f32 0.0, %v985
      %v987 = vpop.f32.mrf.mxu0
      %v988 = vadd.f32 0.0, %v987
      %989 = vmatmul.bf16.gmra.mxu0 %v922
      %v990 = vpop.f32.mrf.mxu0
      %v991 = vadd.f32 0.0, %v990
      %v992 = vpop.f32.mrf.mxu0
      %v993 = vadd.f32 0.0, %v992
      %994 = vmatmul.bf16.gmra.mxu0 %v925
      %v995 = vpop.f32.mrf.mxu0
      %v996 = vadd.f32 0.0, %v995
      %v997 = vpop.f32.mrf.mxu0
      %v998 = vadd.f32 0.0, %v997
      %999 = vmatmul.bf16.gmra.mxu0 %v928
      %v1000 = vpop.f32.mrf.mxu0
      %v1001 = vadd.f32 0.0, %v1000
      %v1002 = vpop.f32.mrf.mxu0
      %v1003 = vadd.f32 0.0, %v1002
      %1004 = vmatmul.bf16.gmra.mxu0 %v931
      %v1005 = vpop.f32.mrf.mxu0
      %v1006 = vadd.f32 0.0, %v1005
      %v1007 = vpop.f32.mrf.mxu0
      %v1008 = vadd.f32 0.0, %v1007
      %1009 = vmatmul.bf16.gmra.mxu0 %v934
      %v1010 = vpop.f32.mrf.mxu0
      %v1011 = vadd.f32 0.0, %v1010
      %v1012 = vpop.f32.mrf.mxu0
      %v1013 = vadd.f32 0.0, %v1012
      %1014 = vmatmul.bf16.gmra.mxu0 %v937
      %v1015 = vpop.f32.mrf.mxu0
      %v1016 = vadd.f32 0.0, %v1015
      %v1017 = vpop.f32.mrf.mxu0
      %v1018 = vadd.f32 0.0, %v1017
      %1019 = vmatmul.bf16.gmra.mxu0 %v940
      %v1020 = vpop.f32.mrf.mxu0
      %v1021 = vadd.f32 0.0, %v1020
      %v1022 = vpop.f32.mrf.mxu0
      %v1023 = vadd.f32 0.0, %v1022
      %1024 = vmatmul.bf16.gmra.mxu0 %v943
      %v1025 = vpop.f32.mrf.mxu0
      %v1026 = vadd.f32 0.0, %v1025
      %v1027 = vpop.f32.mrf.mxu0
      %v1028 = vadd.f32 0.0, %v1027
      %1029 = vmatmul.bf16.gmra.mxu0 %v946
      %v1030 = vpop.f32.mrf.mxu0
      %v1031 = vadd.f32 0.0, %v1030
      %v1032 = vpop.f32.mrf.mxu0
      %v1033 = vadd.f32 0.0, %v1032
      %1034 = vmatmul.bf16.gmra.mxu0 %v949
      %v1035 = vpop.f32.mrf.mxu0
      %v1036 = vadd.f32 0.0, %v1035
      %v1037 = vpop.f32.mrf.mxu0
      %v1038 = vadd.f32 0.0, %v1037
      %1039 = vdwg.mxu0
      %1056 = vrot.lane.b32.xlu0 %v324, 96
      %v1057 = vpop.permute.xlu0 %1056
      %1058 = vrot.lane.b32.xlu0 %v325, 96
      %v1059 = vpop.permute.xlu0 %1058
      %1060 = vrot.lane.b32.xlu0 %v326, 96
      %v1061 = vpop.permute.xlu0 %1060
      %1062 = vrot.lane.b32.xlu0 %v327, 96
      %v1063 = vpop.permute.xlu0 %1062
      %1064 = vrot.lane.b32.xlu0 %v328, 96
      %v1065 = vpop.permute.xlu0 %1064
      %1066 = vrot.lane.b32.xlu0 %v329, 96
      %v1067 = vpop.permute.xlu0 %1066
      %1068 = vrot.lane.b32.xlu0 %v330, 96
      %v1069 = vpop.permute.xlu0 %1068
      %1070 = vrot.lane.b32.xlu0 %v331, 96
      %v1071 = vpop.permute.xlu0 %1070
      %1072 = vrot.lane.b32.xlu0 %v332, 96
      %v1073 = vpop.permute.xlu0 %1072
      %1074 = vrot.lane.b32.xlu0 %v333, 96
      %v1075 = vpop.permute.xlu0 %1074
      %1076 = vrot.lane.b32.xlu0 %v334, 96
      %v1077 = vpop.permute.xlu0 %1076
      %1078 = vrot.lane.b32.xlu0 %v335, 96
      %v1079 = vpop.permute.xlu0 %1078
      %1080 = vrot.lane.b32.xlu0 %v336, 96
      %v1081 = vpop.permute.xlu0 %1080
      %1082 = vrot.lane.b32.xlu0 %v337, 96
      %v1083 = vpop.permute.xlu0 %1082
      %1084 = vrot.lane.b32.xlu0 %v338, 96
      %v1085 = vpop.permute.xlu0 %1084
      %1086 = vrot.lane.b32.xlu0 %v339, 96
      %v1087 = vpop.permute.xlu0 %1086
      %1088 = vrot.lane.b32.xlu0 %v356, 96
      %v1089 = vpop.permute.xlu0 %1088
      %1090 = vrot.lane.b32.xlu0 %v357, 96
      %v1091 = vpop.permute.xlu0 %1090
      %1092 = vrot.lane.b32.xlu0 %v358, 96
      %v1093 = vpop.permute.xlu0 %1092
      %1094 = vrot.lane.b32.xlu0 %v359, 96
      %v1095 = vpop.permute.xlu0 %1094
      %v1097 = vsel %vm360, %v1057, 0
      %v1100 = vsel %vm360, %v1059, 0
      %v1103 = vsel %vm360, %v1061, 0
      %v1106 = vsel %vm360, %v1063, 0
      %v1109 = vsel %vm360, %v1065, 0
      %v1112 = vsel %vm360, %v1067, 0
      %v1115 = vsel %vm360, %v1069, 0
      %v1118 = vsel %vm360, %v1071, 0
      %v1121 = vsel %vm360, %v1073, 0
      %v1124 = vsel %vm360, %v1075, 0
      %v1127 = vsel %vm360, %v1077, 0
      %v1130 = vsel %vm360, %v1079, 0
      %v1133 = vsel %vm360, %v1081, 0
      %v1136 = vsel %vm360, %v1083, 0
      %v1139 = vsel %vm360, %v1085, 0
      %v1142 = vsel %vm360, %v1087, 0
      %v1145 = vsel %vm360, %v1089, 0
      %v1148 = vsel %vm360, %v1091, 0
      %v1151 = vsel %vm360, %v1093, 0
      %v1154 = vsel %vm360, %v1095, 0
      %1156 = vmatpush.bf16.xpose.msra.mxu0 0
      %1157 = vmatpush.bf16.xpose.msra.mxu0 0
      %1158 = vmatpush.bf16.xpose.msra.mxu0 0
      %1159 = vmatpush.bf16.xpose.msra.mxu0 0
      %1160 = vmatpush.bf16.xpose.msra.mxu0 %v1154
      %1161 = vmatpush.bf16.xpose.msra.mxu0 %v1151
      %1162 = vmatpush.bf16.xpose.msra.mxu0 %v1148
      %1163 = vmatpush.bf16.xpose.msra.mxu0 %v1145
      %1164 = vmatmul.bf16.gmra.mxu0 %v1097
      %v1165 = vpop.f32.mrf.mxu0
      %v1166 = vadd.f32 0.0, %v1165
      %v1167 = vpop.f32.mrf.mxu0
      %v1168 = vadd.f32 0.0, %v1167
      %1169 = vmatmul.bf16.gmra.mxu0 %v1100
      %v1170 = vpop.f32.mrf.mxu0
      %v1171 = vadd.f32 0.0, %v1170
      %v1172 = vpop.f32.mrf.mxu0
      %v1173 = vadd.f32 0.0, %v1172
      %1174 = vmatmul.bf16.gmra.mxu0 %v1103
      %v1175 = vpop.f32.mrf.mxu0
      %v1176 = vadd.f32 0.0, %v1175
      %v1177 = vpop.f32.mrf.mxu0
      %v1178 = vadd.f32 0.0, %v1177
      %1179 = vmatmul.bf16.gmra.mxu0 %v1106
      %v1180 = vpop.f32.mrf.mxu0
      %v1181 = vadd.f32 0.0, %v1180
      %v1182 = vpop.f32.mrf.mxu0
      %v1183 = vadd.f32 0.0, %v1182
      %1184 = vmatmul.bf16.gmra.mxu0 %v1109
      %v1185 = vpop.f32.mrf.mxu0
      %v1186 = vadd.f32 0.0, %v1185
      %v1187 = vpop.f32.mrf.mxu0
      %v1188 = vadd.f32 0.0, %v1187
      %1189 = vmatmul.bf16.gmra.mxu0 %v1112
      %v1190 = vpop.f32.mrf.mxu0
      %v1191 = vadd.f32 0.0, %v1190
      %v1192 = vpop.f32.mrf.mxu0
      %v1193 = vadd.f32 0.0, %v1192
      %1194 = vmatmul.bf16.gmra.mxu0 %v1115
      %v1195 = vpop.f32.mrf.mxu0
      %v1196 = vadd.f32 0.0, %v1195
      %v1197 = vpop.f32.mrf.mxu0
      %v1198 = vadd.f32 0.0, %v1197
      %1199 = vmatmul.bf16.gmra.mxu0 %v1118
      %v1200 = vpop.f32.mrf.mxu0
      %v1201 = vadd.f32 0.0, %v1200
      %v1202 = vpop.f32.mrf.mxu0
      %v1203 = vadd.f32 0.0, %v1202
      %1204 = vmatmul.bf16.gmra.mxu0 %v1121
      %v1205 = vpop.f32.mrf.mxu0
      %v1206 = vadd.f32 0.0, %v1205
      %v1207 = vpop.f32.mrf.mxu0
      %v1208 = vadd.f32 0.0, %v1207
      %1209 = vmatmul.bf16.gmra.mxu0 %v1124
      %v1210 = vpop.f32.mrf.mxu0
      %v1211 = vadd.f32 0.0, %v1210
      %v1212 = vpop.f32.mrf.mxu0
      %v1213 = vadd.f32 0.0, %v1212
      %1214 = vmatmul.bf16.gmra.mxu0 %v1127
      %v1215 = vpop.f32.mrf.mxu0
      %v1216 = vadd.f32 0.0, %v1215
      %v1217 = vpop.f32.mrf.mxu0
      %v1218 = vadd.f32 0.0, %v1217
      %1219 = vmatmul.bf16.gmra.mxu0 %v1130
      %v1220 = vpop.f32.mrf.mxu0
      %v1221 = vadd.f32 0.0, %v1220
      %v1222 = vpop.f32.mrf.mxu0
      %v1223 = vadd.f32 0.0, %v1222
      %1224 = vmatmul.bf16.gmra.mxu0 %v1133
      %v1225 = vpop.f32.mrf.mxu0
      %v1226 = vadd.f32 0.0, %v1225
      %v1227 = vpop.f32.mrf.mxu0
      %v1228 = vadd.f32 0.0, %v1227
      %1229 = vmatmul.bf16.gmra.mxu0 %v1136
      %v1230 = vpop.f32.mrf.mxu0
      %v1231 = vadd.f32 0.0, %v1230
      %v1232 = vpop.f32.mrf.mxu0
      %v1233 = vadd.f32 0.0, %v1232
      %1234 = vmatmul.bf16.gmra.mxu0 %v1139
      %v1235 = vpop.f32.mrf.mxu0
      %v1236 = vadd.f32 0.0, %v1235
      %v1237 = vpop.f32.mrf.mxu0
      %v1238 = vadd.f32 0.0, %v1237
      %1239 = vmatmul.bf16.gmra.mxu0 %v1142
      %v1240 = vpop.f32.mrf.mxu0
      %v1241 = vadd.f32 0.0, %v1240
      %v1242 = vpop.f32.mrf.mxu0
      %v1243 = vadd.f32 0.0, %v1242
      %1244 = vdwg.mxu0
      %v1245 = vsel %vm510, %v1166, -inf
      %1246 = vmax.xlane.f32.xlu0 %v1245
      %v1247 = vpop.xlane.xlu0 %1246
      %v1248 = vsel %vm510, %v1168, -inf
      %1249 = vmax.xlane.f32.xlu0 %v1248
      %v1250 = vpop.xlane.xlu0 %1249
      %v1251 = vsel %vm510, %v1171, -inf
      %1252 = vmax.xlane.f32.xlu0 %v1251
      %v1253 = vpop.xlane.xlu0 %1252
      %v1254 = vsel %vm510, %v1173, -inf
      %1255 = vmax.xlane.f32.xlu0 %v1254
      %v1256 = vpop.xlane.xlu0 %1255
      %v1257 = vsel %vm510, %v1176, -inf
      %1258 = vmax.xlane.f32.xlu0 %v1257
      %v1259 = vpop.xlane.xlu0 %1258
      %v1260 = vsel %vm510, %v1178, -inf
      %1261 = vmax.xlane.f32.xlu0 %v1260
      %v1262 = vpop.xlane.xlu0 %1261
      %v1263 = vsel %vm510, %v1181, -inf
      %1264 = vmax.xlane.f32.xlu0 %v1263
      %v1265 = vpop.xlane.xlu0 %1264
      %v1266 = vsel %vm510, %v1183, -inf
      %1267 = vmax.xlane.f32.xlu0 %v1266
      %v1268 = vpop.xlane.xlu0 %1267
      %v1269 = vsel %vm510, %v1186, -inf
      %1270 = vmax.xlane.f32.xlu0 %v1269
      %v1271 = vpop.xlane.xlu0 %1270
      %v1272 = vsel %vm510, %v1188, -inf
      %1273 = vmax.xlane.f32.xlu0 %v1272
      %v1274 = vpop.xlane.xlu0 %1273
      %v1275 = vsel %vm510, %v1191, -inf
      %1276 = vmax.xlane.f32.xlu0 %v1275
      %v1277 = vpop.xlane.xlu0 %1276
      %v1278 = vsel %vm510, %v1193, -inf
      %1279 = vmax.xlane.f32.xlu0 %v1278
      %v1280 = vpop.xlane.xlu0 %1279
      %v1281 = vsel %vm510, %v1196, -inf
      %1282 = vmax.xlane.f32.xlu0 %v1281
      %v1283 = vpop.xlane.xlu0 %1282
      %v1284 = vsel %vm510, %v1198, -inf
      %1285 = vmax.xlane.f32.xlu0 %v1284
      %v1286 = vpop.xlane.xlu0 %1285
      %v1287 = vsel %vm510, %v1201, -inf
      %1288 = vmax.xlane.f32.xlu0 %v1287
      %v1289 = vpop.xlane.xlu0 %1288
      %v1290 = vsel %vm510, %v1203, -inf
      %1291 = vmax.xlane.f32.xlu0 %v1290
      %v1292 = vpop.xlane.xlu0 %1291
      %v1293 = vsel %vm510, %v1206, -inf
      %1294 = vmax.xlane.f32.xlu0 %v1293
      %v1295 = vpop.xlane.xlu0 %1294
      %v1296 = vsel %vm510, %v1208, -inf
      %1297 = vmax.xlane.f32.xlu0 %v1296
      %v1298 = vpop.xlane.xlu0 %1297
      %v1299 = vsel %vm510, %v1211, -inf
      %1300 = vmax.xlane.f32.xlu0 %v1299
      %v1301 = vpop.xlane.xlu0 %1300
      %v1302 = vsel %vm510, %v1213, -inf
      %1303 = vmax.xlane.f32.xlu0 %v1302
      %v1304 = vpop.xlane.xlu0 %1303
      %v1305 = vsel %vm510, %v1216, -inf
      %1306 = vmax.xlane.f32.xlu0 %v1305
      %v1307 = vpop.xlane.xlu0 %1306
      %v1308 = vsel %vm510, %v1218, -inf
      %1309 = vmax.xlane.f32.xlu0 %v1308
      %v1310 = vpop.xlane.xlu0 %1309
      %v1311 = vsel %vm510, %v1221, -inf
      %1312 = vmax.xlane.f32.xlu0 %v1311
      %v1313 = vpop.xlane.xlu0 %1312
      %v1314 = vsel %vm510, %v1223, -inf
      %1315 = vmax.xlane.f32.xlu0 %v1314
      %v1316 = vpop.xlane.xlu0 %1315
      %v1317 = vsel %vm510, %v1226, -inf
      %1318 = vmax.xlane.f32.xlu0 %v1317
      %v1319 = vpop.xlane.xlu0 %1318
      %v1320 = vsel %vm510, %v1228, -inf
      %1321 = vmax.xlane.f32.xlu0 %v1320
      %v1322 = vpop.xlane.xlu0 %1321
      %v1323 = vsel %vm510, %v1231, -inf
      %1324 = vmax.xlane.f32.xlu0 %v1323
      %v1325 = vpop.xlane.xlu0 %1324
      %v1326 = vsel %vm510, %v1233, -inf
      %1327 = vmax.xlane.f32.xlu0 %v1326
      %v1328 = vpop.xlane.xlu0 %1327
      %v1329 = vsel %vm510, %v1236, -inf
      %1330 = vmax.xlane.f32.xlu0 %v1329
      %v1331 = vpop.xlane.xlu0 %1330
      %v1332 = vsel %vm510, %v1238, -inf
      %1333 = vmax.xlane.f32.xlu0 %v1332
      %v1334 = vpop.xlane.xlu0 %1333
      %v1335 = vsel %vm510, %v1241, -inf
      %1336 = vmax.xlane.f32.xlu0 %v1335
      %v1337 = vpop.xlane.xlu0 %1336
      %v1338 = vsel %vm510, %v1243, -inf
      %1339 = vmax.xlane.f32.xlu0 %v1338
      %v1340 = vpop.xlane.xlu0 %1339
      %v1341 = vsub.f32 %v1166, %v1247
      %v1342 = vsub.f32 %v1168, %v1250
      %v1343 = vsub.f32 %v1171, %v1253
      %v1344 = vsub.f32 %v1173, %v1256
      %v1345 = vsub.f32 %v1176, %v1259
      %v1346 = vsub.f32 %v1178, %v1262
      %v1347 = vsub.f32 %v1181, %v1265
      %v1348 = vsub.f32 %v1183, %v1268
      %v1349 = vsub.f32 %v1186, %v1271
      %v1350 = vsub.f32 %v1188, %v1274
      %v1351 = vsub.f32 %v1191, %v1277
      %v1352 = vsub.f32 %v1193, %v1280
      %v1353 = vsub.f32 %v1196, %v1283
      %v1354 = vsub.f32 %v1198, %v1286
      %v1355 = vsub.f32 %v1201, %v1289
      %v1356 = vsub.f32 %v1203, %v1292
      %v1357 = vsub.f32 %v1206, %v1295
      %v1358 = vsub.f32 %v1208, %v1298
      %v1359 = vsub.f32 %v1211, %v1301
      %v1360 = vsub.f32 %v1213, %v1304
      %v1361 = vsub.f32 %v1216, %v1307
      %v1362 = vsub.f32 %v1218, %v1310
      %v1363 = vsub.f32 %v1221, %v1313
      %v1364 = vsub.f32 %v1223, %v1316
      %v1365 = vsub.f32 %v1226, %v1319
      %v1366 = vsub.f32 %v1228, %v1322
      %v1367 = vsub.f32 %v1231, %v1325
      %v1368 = vsub.f32 %v1233, %v1328
      %v1369 = vsub.f32 %v1236, %v1331
      %v1370 = vsub.f32 %v1238, %v1334
      %v1371 = vsub.f32 %v1241, %v1337
      %v1372 = vsub.f32 %v1243, %v1340
      %v1373 = vmul.f32 %v1341, 1.442695
      %v1374 = vpow.pop %v1373
      %v1375 = vmul.f32 %v1342, 1.442695
      %v1376 = vpow.pop %v1375
      %v1377 = vmul.f32 %v1343, 1.442695
      %v1378 = vpow.pop %v1377
      %v1379 = vmul.f32 %v1344, 1.442695
      %v1380 = vpow.pop %v1379
      %v1381 = vmul.f32 %v1345, 1.442695
      %v1382 = vpow.pop %v1381
      %v1383 = vmul.f32 %v1346, 1.442695
      %v1384 = vpow.pop %v1383
      %v1385 = vmul.f32 %v1347, 1.442695
      %v1386 = vpow.pop %v1385
      %v1387 = vmul.f32 %v1348, 1.442695
      %v1388 = vpow.pop %v1387
      %v1389 = vmul.f32 %v1349, 1.442695
      %v1390 = vpow.pop %v1389
      %v1391 = vmul.f32 %v1350, 1.442695
      %v1392 = vpow.pop %v1391
      %v1393 = vmul.f32 %v1351, 1.442695
      %v1394 = vpow.pop %v1393
      %v1395 = vmul.f32 %v1352, 1.442695
      %v1396 = vpow.pop %v1395
      %v1397 = vmul.f32 %v1353, 1.442695
      %v1398 = vpow.pop %v1397
      %v1399 = vmul.f32 %v1354, 1.442695
      %v1400 = vpow.pop %v1399
      %v1401 = vmul.f32 %v1355, 1.442695
      %v1402 = vpow.pop %v1401
      %v1403 = vmul.f32 %v1356, 1.442695
      %v1404 = vpow.pop %v1403
      %v1405 = vmul.f32 %v1357, 1.442695
      %v1406 = vpow.pop %v1405
      %v1407 = vmul.f32 %v1358, 1.442695
      %v1408 = vpow.pop %v1407
      %v1409 = vmul.f32 %v1359, 1.442695
      %v1410 = vpow.pop %v1409
      %v1411 = vmul.f32 %v1360, 1.442695
      %v1412 = vpow.pop %v1411
      %v1413 = vmul.f32 %v1361, 1.442695
      %v1414 = vpow.pop %v1413
      %v1415 = vmul.f32 %v1362, 1.442695
      %v1416 = vpow.pop %v1415
      %v1417 = vmul.f32 %v1363, 1.442695
      %v1418 = vpow.pop %v1417
      %v1419 = vmul.f32 %v1364, 1.442695
      %v1420 = vpow.pop %v1419
      %v1421 = vmul.f32 %v1365, 1.442695
      %v1422 = vpow.pop %v1421
      %v1423 = vmul.f32 %v1366, 1.442695
      %v1424 = vpow.pop %v1423
      %v1425 = vmul.f32 %v1367, 1.442695
      %v1426 = vpow.pop %v1425
      %v1427 = vmul.f32 %v1368, 1.442695
      %v1428 = vpow.pop %v1427
      %v1429 = vmul.f32 %v1369, 1.442695
      %v1430 = vpow.pop %v1429
      %v1431 = vmul.f32 %v1370, 1.442695
      %v1432 = vpow.pop %v1431
      %v1433 = vmul.f32 %v1371, 1.442695
      %v1434 = vpow.pop %v1433
      %v1435 = vmul.f32 %v1372, 1.442695
      %v1436 = vpow.pop %v1435
      %v1437 = vsel %vm510, %v1374, 0.0
      %1438 = vadd.xlane.f32.xlu0 %v1437
      %v1439 = vpop.xlane.xlu0 %1438
      %v1440 = vsel %vm510, %v1376, 0.0
      %1441 = vadd.xlane.f32.xlu0 %v1440
      %v1442 = vpop.xlane.xlu0 %1441
      %v1443 = vsel %vm510, %v1378, 0.0
      %1444 = vadd.xlane.f32.xlu0 %v1443
      %v1445 = vpop.xlane.xlu0 %1444
      %v1446 = vsel %vm510, %v1380, 0.0
      %1447 = vadd.xlane.f32.xlu0 %v1446
      %v1448 = vpop.xlane.xlu0 %1447
      %v1449 = vsel %vm510, %v1382, 0.0
      %1450 = vadd.xlane.f32.xlu0 %v1449
      %v1451 = vpop.xlane.xlu0 %1450
      %v1452 = vsel %vm510, %v1384, 0.0
      %1453 = vadd.xlane.f32.xlu0 %v1452
      %v1454 = vpop.xlane.xlu0 %1453
      %v1455 = vsel %vm510, %v1386, 0.0
      %1456 = vadd.xlane.f32.xlu0 %v1455
      %v1457 = vpop.xlane.xlu0 %1456
      %v1458 = vsel %vm510, %v1388, 0.0
      %1459 = vadd.xlane.f32.xlu0 %v1458
      %v1460 = vpop.xlane.xlu0 %1459
      %v1461 = vsel %vm510, %v1390, 0.0
      %1462 = vadd.xlane.f32.xlu0 %v1461
      %v1463 = vpop.xlane.xlu0 %1462
      %v1464 = vsel %vm510, %v1392, 0.0
      %1465 = vadd.xlane.f32.xlu0 %v1464
      %v1466 = vpop.xlane.xlu0 %1465
      %v1467 = vsel %vm510, %v1394, 0.0
      %1468 = vadd.xlane.f32.xlu0 %v1467
      %v1469 = vpop.xlane.xlu0 %1468
      %v1470 = vsel %vm510, %v1396, 0.0
      %1471 = vadd.xlane.f32.xlu0 %v1470
      %v1472 = vpop.xlane.xlu0 %1471
      %v1473 = vsel %vm510, %v1398, 0.0
      %1474 = vadd.xlane.f32.xlu0 %v1473
      %v1475 = vpop.xlane.xlu0 %1474
      %v1476 = vsel %vm510, %v1400, 0.0
      %1477 = vadd.xlane.f32.xlu0 %v1476
      %v1478 = vpop.xlane.xlu0 %1477
      %v1479 = vsel %vm510, %v1402, 0.0
      %1480 = vadd.xlane.f32.xlu0 %v1479
      %v1481 = vpop.xlane.xlu0 %1480
      %v1482 = vsel %vm510, %v1404, 0.0
      %1483 = vadd.xlane.f32.xlu0 %v1482
      %v1484 = vpop.xlane.xlu0 %1483
      %v1485 = vsel %vm510, %v1406, 0.0
      %1486 = vadd.xlane.f32.xlu0 %v1485
      %v1487 = vpop.xlane.xlu0 %1486
      %v1488 = vsel %vm510, %v1408, 0.0
      %1489 = vadd.xlane.f32.xlu0 %v1488
      %v1490 = vpop.xlane.xlu0 %1489
      %v1491 = vsel %vm510, %v1410, 0.0
      %1492 = vadd.xlane.f32.xlu0 %v1491
      %v1493 = vpop.xlane.xlu0 %1492
      %v1494 = vsel %vm510, %v1412, 0.0
      %1495 = vadd.xlane.f32.xlu0 %v1494
      %v1496 = vpop.xlane.xlu0 %1495
      %v1497 = vsel %vm510, %v1414, 0.0
      %1498 = vadd.xlane.f32.xlu0 %v1497
      %v1499 = vpop.xlane.xlu0 %1498
      %v1500 = vsel %vm510, %v1416, 0.0
      %1501 = vadd.xlane.f32.xlu0 %v1500
      %v1502 = vpop.xlane.xlu0 %1501
      %v1503 = vsel %vm510, %v1418, 0.0
      %1504 = vadd.xlane.f32.xlu0 %v1503
      %v1505 = vpop.xlane.xlu0 %1504
      %v1506 = vsel %vm510, %v1420, 0.0
      %1507 = vadd.xlane.f32.xlu0 %v1506
      %v1508 = vpop.xlane.xlu0 %1507
      %v1509 = vsel %vm510, %v1422, 0.0
      %1510 = vadd.xlane.f32.xlu0 %v1509
      %v1511 = vpop.xlane.xlu0 %1510
      %v1512 = vsel %vm510, %v1424, 0.0
      %1513 = vadd.xlane.f32.xlu0 %v1512
      %v1514 = vpop.xlane.xlu0 %1513
      %v1515 = vsel %vm510, %v1426, 0.0
      %1516 = vadd.xlane.f32.xlu0 %v1515
      %v1517 = vpop.xlane.xlu0 %1516
      %v1518 = vsel %vm510, %v1428, 0.0
      %1519 = vadd.xlane.f32.xlu0 %v1518
      %v1520 = vpop.xlane.xlu0 %1519
      %v1521 = vsel %vm510, %v1430, 0.0
      %1522 = vadd.xlane.f32.xlu0 %v1521
      %v1523 = vpop.xlane.xlu0 %1522
      %v1524 = vsel %vm510, %v1432, 0.0
      %1525 = vadd.xlane.f32.xlu0 %v1524
      %v1526 = vpop.xlane.xlu0 %1525
      %v1527 = vsel %vm510, %v1434, 0.0
      %1528 = vadd.xlane.f32.xlu0 %v1527
      %v1529 = vpop.xlane.xlu0 %1528
      %v1530 = vsel %vm510, %v1436, 0.0
      %1531 = vadd.xlane.f32.xlu0 %v1530
      %v1532 = vpop.xlane.xlu0 %1531
      %v1533 = vrcp.pop %v1439
      %v1534 = vrcp.pop %v1442
      %v1535 = vrcp.pop %v1445
      %v1536 = vrcp.pop %v1448
      %v1537 = vrcp.pop %v1451
      %v1538 = vrcp.pop %v1454
      %v1539 = vrcp.pop %v1457
      %v1540 = vrcp.pop %v1460
      %v1541 = vrcp.pop %v1463
      %v1542 = vrcp.pop %v1466
      %v1543 = vrcp.pop %v1469
      %v1544 = vrcp.pop %v1472
      %v1545 = vrcp.pop %v1475
      %v1546 = vrcp.pop %v1478
      %v1547 = vrcp.pop %v1481
      %v1548 = vrcp.pop %v1484
      %v1549 = vrcp.pop %v1487
      %v1550 = vrcp.pop %v1490
      %v1551 = vrcp.pop %v1493
      %v1552 = vrcp.pop %v1496
      %v1553 = vrcp.pop %v1499
      %v1554 = vrcp.pop %v1502
      %v1555 = vrcp.pop %v1505
      %v1556 = vrcp.pop %v1508
      %v1557 = vrcp.pop %v1511
      %v1558 = vrcp.pop %v1514
      %v1559 = vrcp.pop %v1517
      %v1560 = vrcp.pop %v1520
      %v1561 = vrcp.pop %v1523
      %v1562 = vrcp.pop %v1526
      %v1563 = vrcp.pop %v1529
      %v1564 = vrcp.pop %v1532
      %v1565 = vmul.f32 %v1374, %v1533
      %v1566 = vmul.f32 %v1376, %v1534
      %v1567 = vmul.f32 %v1378, %v1535
      %v1568 = vmul.f32 %v1380, %v1536
      %v1569 = vmul.f32 %v1382, %v1537
      %v1570 = vmul.f32 %v1384, %v1538
      %v1571 = vmul.f32 %v1386, %v1539
      %v1572 = vmul.f32 %v1388, %v1540
      %v1573 = vmul.f32 %v1390, %v1541
      %v1574 = vmul.f32 %v1392, %v1542
      %v1575 = vmul.f32 %v1394, %v1543
      %v1576 = vmul.f32 %v1396, %v1544
      %v1577 = vmul.f32 %v1398, %v1545
      %v1578 = vmul.f32 %v1400, %v1546
      %v1579 = vmul.f32 %v1402, %v1547
      %v1580 = vmul.f32 %v1404, %v1548
      %v1581 = vmul.f32 %v1406, %v1549
      %v1582 = vmul.f32 %v1408, %v1550
      %v1583 = vmul.f32 %v1410, %v1551
      %v1584 = vmul.f32 %v1412, %v1552
      %v1585 = vmul.f32 %v1414, %v1553
      %v1586 = vmul.f32 %v1416, %v1554
      %v1587 = vmul.f32 %v1418, %v1555
      %v1588 = vmul.f32 %v1420, %v1556
      %v1589 = vmul.f32 %v1422, %v1557
      %v1590 = vmul.f32 %v1424, %v1558
      %v1591 = vmul.f32 %v1426, %v1559
      %v1592 = vmul.f32 %v1428, %v1560
      %v1593 = vmul.f32 %v1430, %v1561
      %v1594 = vmul.f32 %v1432, %v1562
      %v1595 = vmul.f32 %v1434, %v1563
      %v1596 = vmul.f32 %v1436, %v1564
      %v1597 = vpack.c.bf16 %v1566, %v1565
      %v1598 = vpack.c.bf16 %v1568, %v1567
      %v1599 = vpack.c.bf16 %v1570, %v1569
      %v1600 = vpack.c.bf16 %v1572, %v1571
      %v1601 = vpack.c.bf16 %v1574, %v1573
      %v1602 = vpack.c.bf16 %v1576, %v1575
      %v1603 = vpack.c.bf16 %v1578, %v1577
      %v1604 = vpack.c.bf16 %v1580, %v1579
      %v1605 = vpack.c.bf16 %v1582, %v1581
      %v1606 = vpack.c.bf16 %v1584, %v1583
      %v1607 = vpack.c.bf16 %v1586, %v1585
      %v1608 = vpack.c.bf16 %v1588, %v1587
      %v1609 = vpack.c.bf16 %v1590, %v1589
      %v1610 = vpack.c.bf16 %v1592, %v1591
      %v1611 = vpack.c.bf16 %v1594, %v1593
      %v1612 = vpack.c.bf16 %v1596, %v1595
      %1613 = vrot.lane.b32.xlu0 %v895, 96
      %v1614 = vpop.permute.xlu0 %1613
      %1615 = vrot.lane.b32.xlu0 %v896, 96
      %v1616 = vpop.permute.xlu0 %1615
      %1617 = vrot.lane.b32.xlu0 %v897, 96
      %v1618 = vpop.permute.xlu0 %1617
      %1619 = vrot.lane.b32.xlu0 %v898, 96
      %v1620 = vpop.permute.xlu0 %1619
      %v1626 = vsel %vm510, %v1597, 0
      %v1629 = vsel %vm510, %v1598, 0
      %v1632 = vsel %vm510, %v1599, 0
      %v1635 = vsel %vm510, %v1600, 0
      %v1638 = vsel %vm510, %v1601, 0
      %v1641 = vsel %vm510, %v1602, 0
      %v1644 = vsel %vm510, %v1603, 0
      %v1647 = vsel %vm510, %v1604, 0
      %v1650 = vsel %vm510, %v1605, 0
      %v1653 = vsel %vm510, %v1606, 0
      %v1656 = vsel %vm510, %v1607, 0
      %v1659 = vsel %vm510, %v1608, 0
      %v1662 = vsel %vm510, %v1609, 0
      %v1665 = vsel %vm510, %v1610, 0
      %v1668 = vsel %vm510, %v1611, 0
      %v1671 = vsel %vm510, %v1612, 0
      %1673 = vmatpush.bf16.msra.mxu0 0
      %1674 = vmatpush.bf16.msra.mxu0 0
      %1675 = vmatpush.bf16.msra.mxu0 0
      %1676 = vmatpush.bf16.msra.mxu0 0
      %1677 = vmatpush.bf16.msra.mxu0 %v1620
      %1678 = vmatpush.bf16.msra.mxu0 %v1618
      %1679 = vmatpush.bf16.msra.mxu0 %v1616
      %1680 = vmatpush.bf16.msra.mxu0 %v1614
      %1681 = vmatmul.bf16.gmra.mxu0 %v1626
      %v1682 = vpop.f32.mrf.mxu0
      %v1683 = vadd.f32 0.0, %v1682
      %v1684 = vpop.f32.mrf.mxu0
      %v1685 = vadd.f32 0.0, %v1684
      %1686 = vmatmul.bf16.gmra.mxu0 %v1629
      %v1687 = vpop.f32.mrf.mxu0
      %v1688 = vadd.f32 0.0, %v1687
      %v1689 = vpop.f32.mrf.mxu0
      %v1690 = vadd.f32 0.0, %v1689
      %1691 = vmatmul.bf16.gmra.mxu0 %v1632
      %v1692 = vpop.f32.mrf.mxu0
      %v1693 = vadd.f32 0.0, %v1692
      %v1694 = vpop.f32.mrf.mxu0
      %v1695 = vadd.f32 0.0, %v1694
      %1696 = vmatmul.bf16.gmra.mxu0 %v1635
      %v1697 = vpop.f32.mrf.mxu0
      %v1698 = vadd.f32 0.0, %v1697
      %v1699 = vpop.f32.mrf.mxu0
      %v1700 = vadd.f32 0.0, %v1699
      %1701 = vmatmul.bf16.gmra.mxu0 %v1638
      %v1702 = vpop.f32.mrf.mxu0
      %v1703 = vadd.f32 0.0, %v1702
      %v1704 = vpop.f32.mrf.mxu0
      %v1705 = vadd.f32 0.0, %v1704
      %1706 = vmatmul.bf16.gmra.mxu0 %v1641
      %v1707 = vpop.f32.mrf.mxu0
      %v1708 = vadd.f32 0.0, %v1707
      %v1709 = vpop.f32.mrf.mxu0
      %v1710 = vadd.f32 0.0, %v1709
      %1711 = vmatmul.bf16.gmra.mxu0 %v1644
      %v1712 = vpop.f32.mrf.mxu0
      %v1713 = vadd.f32 0.0, %v1712
      %v1714 = vpop.f32.mrf.mxu0
      %v1715 = vadd.f32 0.0, %v1714
      %1716 = vmatmul.bf16.gmra.mxu0 %v1647
      %v1717 = vpop.f32.mrf.mxu0
      %v1718 = vadd.f32 0.0, %v1717
      %v1719 = vpop.f32.mrf.mxu0
      %v1720 = vadd.f32 0.0, %v1719
      %1721 = vmatmul.bf16.gmra.mxu0 %v1650
      %v1722 = vpop.f32.mrf.mxu0
      %v1723 = vadd.f32 0.0, %v1722
      %v1724 = vpop.f32.mrf.mxu0
      %v1725 = vadd.f32 0.0, %v1724
      %1726 = vmatmul.bf16.gmra.mxu0 %v1653
      %v1727 = vpop.f32.mrf.mxu0
      %v1728 = vadd.f32 0.0, %v1727
      %v1729 = vpop.f32.mrf.mxu0
      %v1730 = vadd.f32 0.0, %v1729
      %1731 = vmatmul.bf16.gmra.mxu0 %v1656
      %v1732 = vpop.f32.mrf.mxu0
      %v1733 = vadd.f32 0.0, %v1732
      %v1734 = vpop.f32.mrf.mxu0
      %v1735 = vadd.f32 0.0, %v1734
      %1736 = vmatmul.bf16.gmra.mxu0 %v1659
      %v1737 = vpop.f32.mrf.mxu0
      %v1738 = vadd.f32 0.0, %v1737
      %v1739 = vpop.f32.mrf.mxu0
      %v1740 = vadd.f32 0.0, %v1739
      %1741 = vmatmul.bf16.gmra.mxu0 %v1662
      %v1742 = vpop.f32.mrf.mxu0
      %v1743 = vadd.f32 0.0, %v1742
      %v1744 = vpop.f32.mrf.mxu0
      %v1745 = vadd.f32 0.0, %v1744
      %1746 = vmatmul.bf16.gmra.mxu0 %v1665
      %v1747 = vpop.f32.mrf.mxu0
      %v1748 = vadd.f32 0.0, %v1747
      %v1749 = vpop.f32.mrf.mxu0
      %v1750 = vadd.f32 0.0, %v1749
      %1751 = vmatmul.bf16.gmra.mxu0 %v1668
      %v1752 = vpop.f32.mrf.mxu0
      %v1753 = vadd.f32 0.0, %v1752
      %v1754 = vpop.f32.mrf.mxu0
      %v1755 = vadd.f32 0.0, %v1754
      %1756 = vmatmul.bf16.gmra.mxu0 %v1671
      %v1757 = vpop.f32.mrf.mxu0
      %v1758 = vadd.f32 0.0, %v1757
      %v1759 = vpop.f32.mrf.mxu0
      %v1760 = vadd.f32 0.0, %v1759
      %1761 = vdwg.mxu0
      %1794 = vrot.lane.b32.xlu0 %v1683, 32
      %v1795 = vpop.permute.xlu0 %1794
      %1796 = vrot.lane.b32.xlu0 %v1685, 32
      %v1797 = vpop.permute.xlu0 %1796
      %1798 = vrot.lane.b32.xlu0 %v1688, 32
      %v1799 = vpop.permute.xlu0 %1798
      %1800 = vrot.lane.b32.xlu0 %v1690, 32
      %v1801 = vpop.permute.xlu0 %1800
      %1802 = vrot.lane.b32.xlu0 %v1693, 32
      %v1803 = vpop.permute.xlu0 %1802
      %1804 = vrot.lane.b32.xlu0 %v1695, 32
      %v1805 = vpop.permute.xlu0 %1804
      %1806 = vrot.lane.b32.xlu0 %v1698, 32
      %v1807 = vpop.permute.xlu0 %1806
      %1808 = vrot.lane.b32.xlu0 %v1700, 32
      %v1809 = vpop.permute.xlu0 %1808
      %1810 = vrot.lane.b32.xlu0 %v1703, 32
      %v1811 = vpop.permute.xlu0 %1810
      %1812 = vrot.lane.b32.xlu0 %v1705, 32
      %v1813 = vpop.permute.xlu0 %1812
      %1814 = vrot.lane.b32.xlu0 %v1708, 32
      %v1815 = vpop.permute.xlu0 %1814
      %1816 = vrot.lane.b32.xlu0 %v1710, 32
      %v1817 = vpop.permute.xlu0 %1816
      %1818 = vrot.lane.b32.xlu0 %v1713, 32
      %v1819 = vpop.permute.xlu0 %1818
      %1820 = vrot.lane.b32.xlu0 %v1715, 32
      %v1821 = vpop.permute.xlu0 %1820
      %1822 = vrot.lane.b32.xlu0 %v1718, 32
      %v1823 = vpop.permute.xlu0 %1822
      %1824 = vrot.lane.b32.xlu0 %v1720, 32
      %v1825 = vpop.permute.xlu0 %1824
      %1826 = vrot.lane.b32.xlu0 %v1723, 32
      %v1827 = vpop.permute.xlu0 %1826
      %1828 = vrot.lane.b32.xlu0 %v1725, 32
      %v1829 = vpop.permute.xlu0 %1828
      %1830 = vrot.lane.b32.xlu0 %v1728, 32
      %v1831 = vpop.permute.xlu0 %1830
      %1832 = vrot.lane.b32.xlu0 %v1730, 32
      %v1833 = vpop.permute.xlu0 %1832
      %1834 = vrot.lane.b32.xlu0 %v1733, 32
      %v1835 = vpop.permute.xlu0 %1834
      %1836 = vrot.lane.b32.xlu0 %v1735, 32
      %v1837 = vpop.permute.xlu0 %1836
      %1838 = vrot.lane.b32.xlu0 %v1738, 32
      %v1839 = vpop.permute.xlu0 %1838
      %1840 = vrot.lane.b32.xlu0 %v1740, 32
      %v1841 = vpop.permute.xlu0 %1840
      %1842 = vrot.lane.b32.xlu0 %v1743, 32
      %v1843 = vpop.permute.xlu0 %1842
      %1844 = vrot.lane.b32.xlu0 %v1745, 32
      %v1845 = vpop.permute.xlu0 %1844
      %1846 = vrot.lane.b32.xlu0 %v1748, 32
      %v1847 = vpop.permute.xlu0 %1846
      %1848 = vrot.lane.b32.xlu0 %v1750, 32
      %v1849 = vpop.permute.xlu0 %1848
      %1850 = vrot.lane.b32.xlu0 %v1753, 32
      %v1851 = vpop.permute.xlu0 %1850
      %1852 = vrot.lane.b32.xlu0 %v1755, 32
      %v1853 = vpop.permute.xlu0 %1852
      %1854 = vrot.lane.b32.xlu0 %v1758, 32
      %v1855 = vpop.permute.xlu0 %1854
      %1856 = vrot.lane.b32.xlu0 %v1760, 32
      %v1857 = vpop.permute.xlu0 %1856
      %v1890 = vsel %vm360, %v961, %v1795
      %v1891 = vsel %vm360, %v963, %v1797
      %v1892 = vsel %vm360, %v966, %v1799
      %v1893 = vsel %vm360, %v968, %v1801
      %v1894 = vsel %vm360, %v971, %v1803
      %v1895 = vsel %vm360, %v973, %v1805
      %v1896 = vsel %vm360, %v976, %v1807
      %v1897 = vsel %vm360, %v978, %v1809
      %v1898 = vsel %vm360, %v981, %v1811
      %v1899 = vsel %vm360, %v983, %v1813
      %v1900 = vsel %vm360, %v986, %v1815
      %v1901 = vsel %vm360, %v988, %v1817
      %v1902 = vsel %vm360, %v991, %v1819
      %v1903 = vsel %vm360, %v993, %v1821
      %v1904 = vsel %vm360, %v996, %v1823
      %v1905 = vsel %vm360, %v998, %v1825
      %v1906 = vsel %vm360, %v1001, %v1827
      %v1907 = vsel %vm360, %v1003, %v1829
      %v1908 = vsel %vm360, %v1006, %v1831
      %v1909 = vsel %vm360, %v1008, %v1833
      %v1910 = vsel %vm360, %v1011, %v1835
      %v1911 = vsel %vm360, %v1013, %v1837
      %v1912 = vsel %vm360, %v1016, %v1839
      %v1913 = vsel %vm360, %v1018, %v1841
      %v1914 = vsel %vm360, %v1021, %v1843
      %v1915 = vsel %vm360, %v1023, %v1845
      %v1916 = vsel %vm360, %v1026, %v1847
      %v1917 = vsel %vm360, %v1028, %v1849
      %v1918 = vsel %vm360, %v1031, %v1851
      %v1919 = vsel %vm360, %v1033, %v1853
      %v1920 = vsel %vm360, %v1036, %v1855
      %v1921 = vsel %vm360, %v1038, %v1857
      %v1922 = vpack.c.bf16 %v1890, %v1890
      %v1923 = vpack.c.bf16 %v1891, %v1891
      %v1924 = vpack.c.bf16 %v1892, %v1892
      %v1925 = vpack.c.bf16 %v1893, %v1893
      %v1926 = vpack.c.bf16 %v1894, %v1894
      %v1927 = vpack.c.bf16 %v1895, %v1895
      %v1928 = vpack.c.bf16 %v1896, %v1896
      %v1929 = vpack.c.bf16 %v1897, %v1897
      %v1930 = vpack.c.bf16 %v1898, %v1898
      %v1931 = vpack.c.bf16 %v1899, %v1899
      %v1932 = vpack.c.bf16 %v1900, %v1900
      %v1933 = vpack.c.bf16 %v1901, %v1901
      %v1934 = vpack.c.bf16 %v1902, %v1902
      %v1935 = vpack.c.bf16 %v1903, %v1903
      %v1936 = vpack.c.bf16 %v1904, %v1904
      %v1937 = vpack.c.bf16 %v1905, %v1905
      %v1938 = vpack.c.bf16 %v1906, %v1906
      %v1939 = vpack.c.bf16 %v1907, %v1907
      %v1940 = vpack.c.bf16 %v1908, %v1908
      %v1941 = vpack.c.bf16 %v1909, %v1909
      %v1942 = vpack.c.bf16 %v1910, %v1910
      %v1943 = vpack.c.bf16 %v1911, %v1911
      %v1944 = vpack.c.bf16 %v1912, %v1912
      %v1945 = vpack.c.bf16 %v1913, %v1913
      %v1946 = vpack.c.bf16 %v1914, %v1914
      %v1947 = vpack.c.bf16 %v1915, %v1915
      %v1948 = vpack.c.bf16 %v1916, %v1916
      %v1949 = vpack.c.bf16 %v1917, %v1917
      %v1950 = vpack.c.bf16 %v1918, %v1918
      %v1951 = vpack.c.bf16 %v1919, %v1919
      %v1952 = vpack.c.bf16 %v1920, %v1920
      %v1953 = vpack.c.bf16 %v1921, %v1921
      %vm1954 = vcmask 519168
      %1955 = vst.msk [vmem:[%s210] sm:$0xf] %vm1954, %v1922
      %1956 = vst.msk [vmem:[%s210 + $0x4] sm:$0xf] %vm1954, %v1923
      %1957 = vst.msk [vmem:[%s210 + $0x8] sm:$0xf] %vm1954, %v1924
      %1958 = vst.msk [vmem:[%s210 + $0xc] sm:$0xf] %vm1954, %v1925
      %1959 = vst.msk [vmem:[%s210 + $0x10] sm:$0xf] %vm1954, %v1926
      %1960 = vst.msk [vmem:[%s210 + $0x14] sm:$0xf] %vm1954, %v1927
      %1961 = vst.msk [vmem:[%s210 + $0x18] sm:$0xf] %vm1954, %v1928
      %1962 = vst.msk [vmem:[%s210 + $0x1c] sm:$0xf] %vm1954, %v1929
      %1963 = vst.msk [vmem:[%s210 + $0x20] sm:$0xf] %vm1954, %v1930
      %1964 = vst.msk [vmem:[%s210 + $0x24] sm:$0xf] %vm1954, %v1931
      %1965 = vst.msk [vmem:[%s210 + $0x28] sm:$0xf] %vm1954, %v1932
      %1966 = vst.msk [vmem:[%s210 + $0x2c] sm:$0xf] %vm1954, %v1933
      %1967 = vst.msk [vmem:[%s210 + $0x30] sm:$0xf] %vm1954, %v1934
      %1968 = vst.msk [vmem:[%s210 + $0x34] sm:$0xf] %vm1954, %v1935
      %1969 = vst.msk [vmem:[%s210 + $0x38] sm:$0xf] %vm1954, %v1936
      %1970 = vst.msk [vmem:[%s210 + $0x3c] sm:$0xf] %vm1954, %v1937
      %1971 = vst.msk [vmem:[%s210 + $0x40] sm:$0xf] %vm1954, %v1938
      %1972 = vst.msk [vmem:[%s210 + $0x44] sm:$0xf] %vm1954, %v1939
      %1973 = vst.msk [vmem:[%s210 + $0x48] sm:$0xf] %vm1954, %v1940
      %1974 = vst.msk [vmem:[%s210 + $0x4c] sm:$0xf] %vm1954, %v1941
      %1975 = vst.msk [vmem:[%s210 + $0x50] sm:$0xf] %vm1954, %v1942
      %1976 = vst.msk [vmem:[%s210 + $0x54] sm:$0xf] %vm1954, %v1943
      %1977 = vst.msk [vmem:[%s210 + $0x58] sm:$0xf] %vm1954, %v1944
      %1978 = vst.msk [vmem:[%s210 + $0x5c] sm:$0xf] %vm1954, %v1945
      %1979 = vst.msk [vmem:[%s210 + $0x60] sm:$0xf] %vm1954, %v1946
      %1980 = vst.msk [vmem:[%s210 + $0x64] sm:$0xf] %vm1954, %v1947
      %1981 = vst.msk [vmem:[%s210 + $0x68] sm:$0xf] %vm1954, %v1948
      %1982 = vst.msk [vmem:[%s210 + $0x6c] sm:$0xf] %vm1954, %v1949
      %1983 = vst.msk [vmem:[%s210 + $0x70] sm:$0xf] %vm1954, %v1950
      %1984 = vst.msk [vmem:[%s210 + $0x74] sm:$0xf] %vm1954, %v1951
      %1985 = vst.msk [vmem:[%s210 + $0x78] sm:$0xf] %vm1954, %v1952
      %1986 = vst.msk [vmem:[%s210 + $0x7c] sm:$0xf] %vm1954, %v1953
      %p1987 = scmp.lt.s32.totalorder %s14, 1
      %s1988 = scalar_select %p1987, %s14, 1
      %s1989 = smul.addr %s1988, 32
      %s1990 = smul.addr %s1989, 4
      %s1991 = scalar_lea.vmem %s3, %s1990
      // Predicated region
      $region33: #{attention_forward.8} parent=31 // pred_check
        %p1992 = pneg %p110
      $region34: #{attention_forward.8} parent=31 // pred_check_branch
        %1994 = sbr.rel (%p1992) target = $region36
      $region35: #{attention_forward.8} parent=31 // pred_region
        _
      $region36: #{attention_forward.8} parent=31 // pred_fallthru
        _
    $region32: #{attention_forward.8} parent=5 // pred_fallthru
      _
    %p1995 = scmp.le.s32.totalorder 2, %s9
    // Predicated region
    $region37: #{attention_forward.8} parent=5 // pred_check
      %p1996 = pneg %p1995
    $region38: #{attention_forward.8} parent=5 // pred_check_branch
      %1998 = sbr.rel (%p1996) target = $region40
    $region39: #{attention_forward.8} parent=5 // pred_region
      %s1999 = ssub.s32 %s9, 2
      // Predicated region
      $region41: #{attention_forward.8} parent=39 // pred_check
        %p2000 = pneg %p116
      $region42: #{attention_forward.8} parent=39 // pred_check_branch
        %2002 = sbr.rel (%p2000) target = $region44
      $region43: #{attention_forward.8} parent=39 // pred_region
        %p2003 = scmp.lt.s32.totalorder %s15, 1
        %s2004 = scalar_select %p2003, %s15, 1
        %s2005 = smul.addr %s2004, 32
        %s2006 = smul.addr %s2005, 4
        %s2007 = scalar_lea.vmem %s3, %s2006
      $region44: #{attention_forward.8} parent=39 // pred_fallthru
        _
    $region40: #{attention_forward.8} parent=5 // pred_fallthru
      _
  $region6: #{attention_forward.8} parent=0 // loop_footer
    %s13 = sadd.s32 1, %s9
  $region7: #{attention_forward.8} parent=0 // loop_footer_branch
    %8 = sbr.rel target = $region3
  $region8: #{attention_forward.8} parent=0 // loop_exit
    _

// kernel: attention_forward.9
$region0: #{attention_forward.9}
  #allocation0 [shape = 'u32[]', space=smem, size = 0x4, offset = 0x4, fixed_abs, tag = 'smem constant byte address 0x4 - core index']
  #allocation1 [shape = 'u32[72,128]{1,0:T(1,128)}', space=vmem, size = 0x9000, scoped, tag = 'internal scratch']
  #allocation2 [shape = 'f32[256,128]{1,0:T(8,128)}', space=vmem, size = 0x20000, scoped, tag = 'scratch operand']
  %s0 = inlined_call_operand.vmem [shape: bf16[512,64], index: 0, kind: input, shape index: {}]
  %s1 = inlined_call_operand.vmem [shape: bf16[64,128], index: 1, kind: input, shape index: {}]
  %s2 = inlined_call_operand.vmem [shape: f32[1,128], index: 2, kind: input, shape index: {}]
  %s3 = inlined_call_operand.vmem [shape: f32[512,128], index: 3, kind: output, shape index: {}]
  %s4 = sld [smem:[#allocation0]]
  $region53: #{attention_forward.9} parent=0
    _
  %s6 = ssub.s32 1, %s4
  %s7 = scalar_select 0, %s6, %s4
  loop: start=0, step=1, limit=4
  $region2: #{attention_forward.9} parent=0 // loop_pre_header
    _
  $region3: #{attention_forward.9} parent=0 // loop_header
    %s9 = sphi 0, %s13
    %p10 = scmp.ge.s32.totalorder %s9, 4
    %s16 = sphi 0, %s35
    %s17 = sphi 0, %s31
    %s18 = sphi 0, %s27
    %s19 = sphi 0, %s16
    %s20 = sphi 0, %s17
    %s21 = sphi 0, %s18
    %s22 = sphi 0, %s19
    %s23 = sphi 0, %s20
    %s24 = sphi 0, %s21
    %s40 = sphi 0, %s42
    %s43 = sphi 0, %s40
    %s44 = sphi 0, %s43
    %s60 = sphi 0, %s44
    %s68 = sphi 0, %s70
    %s71 = sphi 0, %s68
    %s72 = sphi 0, %s71
    %s88 = sphi 0, %s72
    %s94 = sphi 0, %s96
    %s97 = sphi 0, %s94
    %s98 = sphi 0, %s97
    %s114 = sphi 0, %s98
    %s122 = sphi 0, %s124
    %s125 = sphi 0, %s122
    %s126 = sphi 0, %s125
    %s142 = sphi 0, %s126
  $region4: #{attention_forward.9} parent=0 // loop_header_branch
    %12 = sbr.rel (%p10) target = $region8
  $region5: #{attention_forward.9} parent=0 // loop_body
    %s14 = ssub.s32 %s9, 1
    %s15 = ssub.s32 %s9, 2
    %s25 = sadd.s32 1, %s18
    %p26 = scmp.ge.s32.totalorder %s25, 1
    %s27 = scalar_select %p26, 0, %s25
    %s28 = sadd.s32 1, %s17
    %s29 = scalar_select %p26, %s28, %s17
    %p30 = scmp.ge.s32.totalorder %s29, 1
    %s31 = scalar_select %p30, 0, %s29
    %s32 = sadd.s32 1, %s16
    %s33 = scalar_select %p30, %s32, %s16
    %p34 = scmp.ge.s32.totalorder %s33, 2
    %s35 = scalar_select %p34, 0, %s33
    %s36 = ssub.s32 %s16, %s35
    %s37 = ssub.s32 %s18, %s27
    %s38 = sor.u32 %s36, %s37
    %p39 = scmp.eq.s32.totalorder %s38, 0
    %s41 = sadd.s32 %s40, 1
    %s42 = scalar_select %p39, %s40, %s41
    %p45 = pneg %p39
    %p46 = scmp.eq.s32.totalorder %s9, 1
    %p47 = por %p45, %p46
    %p48 = scmp.ne.s32.totalorder %s40, %s43
    %p49 = scmp.eq.s32.totalorder %s9, 0
    %p50 = por %p48, %p49
    %p51 = scmp.ne.s32.totalorder %s40, %s43
    %p52 = scmp.eq.s32.totalorder %s14, 1
    %p53 = por %p51, %p52
    %p54 = scmp.ne.s32.totalorder %s43, %s44
    %p55 = scmp.eq.s32.totalorder %s14, 0
    %p56 = por %p54, %p55
    %p57 = scmp.ne.s32.totalorder %s43, %s44
    %p58 = scmp.eq.s32.totalorder %s15, 1
    %p59 = por %p57, %p58
    %p61 = scmp.ne.s32.totalorder %s44, %s60
    %p62 = scmp.eq.s32.totalorder %s15, 0
    %p63 = por %p61, %p62
    %s64 = ssub.s32 %s18, %s27
    %s65 = ssub.s32 %s17, %s31
    %s66 = sor.u32 %s64, %s65
    %p67 = scmp.eq.s32.totalorder %s66, 0
    %s69 = sadd.s32 %s68, 1
    %s70 = scalar_select %p67, %s68, %s69
    %p73 = pneg %p67
    %p74 = scmp.eq.s32.totalorder %s9, 1
    %p75 = por %p73, %p74
    %p76 = scmp.ne.s32.totalorder %s68, %s71
    %p77 = scmp.eq.s32.totalorder %s9, 0
    %p78 = por %p76, %p77
    %p79 = scmp.ne.s32.totalorder %s68, %s71
    %p80 = scmp.eq.s32.totalorder %s14, 1
    %p81 = por %p79, %p80
    %p82 = scmp.ne.s32.totalorder %s71, %s72
    %p83 = scmp.eq.s32.totalorder %s14, 0
    %p84 = por %p82, %p83
    %p85 = scmp.ne.s32.totalorder %s71, %s72
    %p86 = scmp.eq.s32.totalorder %s15, 1
    %p87 = por %p85, %p86
    %p89 = scmp.ne.s32.totalorder %s72, %s88
    %p90 = scmp.eq.s32.totalorder %s15, 0
    %p91 = por %p89, %p90
    %s92 = ssub.s32 %s17, %s31
    %p93 = scmp.eq.s32.totalorder %s92, 0
    %s95 = sadd.s32 %s94, 1
    %s96 = scalar_select %p93, %s94, %s95
    %p99 = pneg %p93
    %p100 = scmp.eq.s32.totalorder %s9, 1
    %p101 = por %p99, %p100
    %p102 = scmp.ne.s32.totalorder %s94, %s97
    %p103 = scmp.eq.s32.totalorder %s9, 0
    %p104 = por %p102, %p103
    %p105 = scmp.ne.s32.totalorder %s94, %s97
    %p106 = scmp.eq.s32.totalorder %s14, 1
    %p107 = por %p105, %p106
    %p108 = scmp.ne.s32.totalorder %s97, %s98
    %p109 = scmp.eq.s32.totalorder %s14, 0
    %p110 = por %p108, %p109
    %p111 = scmp.ne.s32.totalorder %s97, %s98
    %p112 = scmp.eq.s32.totalorder %s15, 1
    %p113 = por %p111, %p112
    %p115 = scmp.ne.s32.totalorder %s98, %s114
    %p116 = scmp.eq.s32.totalorder %s15, 0
    %p117 = por %p115, %p116
    %s118 = ssub.s32 %s16, %s35
    %s119 = ssub.s32 %s17, %s31
    %s120 = sor.u32 %s118, %s119
    %p121 = scmp.eq.s32.totalorder %s120, 0
    %s123 = sadd.s32 %s122, 1
    %s124 = scalar_select %p121, %s122, %s123
    %p127 = pneg %p121
    %p128 = scmp.eq.s32.totalorder %s9, 1
    %p129 = por %p127, %p128
    %p130 = scmp.ne.s32.totalorder %s122, %s125
    %p131 = scmp.eq.s32.totalorder %s9, 0
    %p132 = por %p130, %p131
    %p133 = scmp.ne.s32.totalorder %s122, %s125
    %p134 = scmp.eq.s32.totalorder %s14, 1
    %p135 = por %p133, %p134
    %p136 = scmp.ne.s32.totalorder %s125, %s126
    %p137 = scmp.eq.s32.totalorder %s14, 0
    %p138 = por %p136, %p137
    %p139 = scmp.ne.s32.totalorder %s125, %s126
    %p140 = scmp.eq.s32.totalorder %s15, 1
    %p141 = por %p139, %p140
    %p143 = scmp.ne.s32.totalorder %s126, %s142
    %p144 = scmp.eq.s32.totalorder %s15, 0
    %p145 = por %p143, %p144
    %p146 = scmp.le.s32.totalorder 1, %s9
    %p147 = scmp.lt.s32.totalorder %s9, 3
    %p148 = pnand %p146, %p147
    %p149 = pneg %p148
    // Predicated region
    $region9: #{attention_forward.9} parent=5 // pred_check
      _
    $region10: #{attention_forward.9} parent=5 // pred_check_branch
      %151 = sbr.rel (%p148) target = $region12
    $region11: #{attention_forward.9} parent=5 // pred_region
      %s152 = ssub.s32 %s9, 1
      // Predicated region
      $region13: #{attention_forward.9} parent=11 // pred_check
        %p153 = pneg %p84
      $region14: #{attention_forward.9} parent=11 // pred_check_branch
        %155 = sbr.rel (%p153) target = $region16
      $region15: #{attention_forward.9} parent=11 // pred_region
        %s156 = smul.u32 8, %s21
        %p157 = scmp.lt.s32.totalorder %s156, 7
        %s158 = scalar_select %p157, %s156, 7
        %p159 = scmp.lt.s32.totalorder %s20, 0
        %s160 = scalar_select %p159, %s20, 0
        %s161 = sadd.s32 %s160, %s158
        %s162 = smul.addr %s161, 4
        %s163 = scalar_lea.vmem %s1, %s162
        %s164 = smul.u32 8, %s21
      $region16: #{attention_forward.9} parent=11 // pred_fallthru
        _
      // Predicated region
      $region17: #{attention_forward.9} parent=11 // pred_check
        %p165 = pneg %p110
      $region18: #{attention_forward.9} parent=11 // pred_check_branch
        %167 = sbr.rel (%p165) target = $region20
      $region19: #{attention_forward.9} parent=11 // pred_region
        %p168 = scmp.lt.s32.totalorder %s20, 0
        %s169 = scalar_select %p168, %s20, 0
        %s170 = scalar_lea.vmem %s2, %s169
      $region20: #{attention_forward.9} parent=11 // pred_fallthru
        _
    $region12: #{attention_forward.9} parent=5 // pred_fallthru
      _
    %p171 = scmp.lt.s32.totalorder %s9, 2
    // Predicated region
    $region21: #{attention_forward.9} parent=5 // pred_check
      %p172 = pneg %p171
    $region22: #{attention_forward.9} parent=5 // pred_check_branch
      %174 = sbr.rel (%p172) target = $region24
    $region23: #{attention_forward.9} parent=5 // pred_region
      // Predicated region
      $region25: #{attention_forward.9} parent=23 // pred_check
        %p175 = pneg %p50
      $region26: #{attention_forward.9} parent=23 // pred_check_branch
        %177 = sbr.rel (%p175) target = $region28
      $region27: #{attention_forward.9} parent=23 // pred_region
        %s178 = smul.u32 32, %s16
        %p179 = scmp.lt.s32.totalorder %s178, 63
        %s180 = scalar_select %p179, %s178, 63
        %p181 = scmp.lt.s32.totalorder %s18, 0
        %s182 = scalar_select %p181, %s18, 0
        %s183 = sadd.s32 %s182, %s180
        %s184 = smul.addr %s183, 4
        %s185 = scalar_lea.vmem %s0, %s184
        %s186 = smul.u32 32, %s16
      $region28: #{attention_forward.9} parent=23 // pred_fallthru
        _
    $region24: #{attention_forward.9} parent=5 // pred_fallthru
      _
    %p187 = scmp.le.s32.totalorder 1, %s9
    %p188 = scmp.lt.s32.totalorder %s9, 3
    %p189 = pnand %p187, %p188
    %p190 = pneg %p189
    // Predicated region
    $region29: #{attention_forward.9} parent=5 // pred_check
      _
    $region30: #{attention_forward.9} parent=5 // pred_check_branch
      %192 = sbr.rel (%p189) target = $region32
    $region31: #{attention_forward.9} parent=5 // pred_region
      %s193 = ssub.s32 %s9, 1
      %s194 = smul.u32 32, %s19
      %p195 = scmp.lt.s32.totalorder %s194, 63
      %s196 = scalar_select %p195, %s194, 63
      %p197 = scmp.lt.s32.totalorder %s21, 0
      %s198 = scalar_select %p197, %s21, 0
      %s199 = sadd.s32 %s198, %s196
      %s200 = smul.addr %s199, 4
      %s201 = scalar_lea.vmem %s0, %s200
      %p202 = pneg %p56
      %p203 = pneg %p53
      %s204 = smul.u32 8, %s21
      %p205 = scmp.lt.s32.totalorder %s204, 7
      %s206 = scalar_select %p205, %s204, 7
      %p207 = scmp.lt.s32.totalorder %s20, 0
      %s208 = scalar_select %p207, %s20, 0
      %s209 = sadd.s32 %s208, %s206
      %s210 = smul.addr %s209, 4
      %s211 = scalar_lea.vmem %s1, %s210
      %p212 = pneg %p84
      %p213 = pneg %p81
      %p214 = scmp.lt.s32.totalorder %s20, 0
      %s215 = scalar_select %p214, %s20, 0
      %s216 = scalar_lea.vmem %s2, %s215
      %p217 = pneg %p110
      %p218 = pneg %p107
      %p219 = pneg %p138
      %p220 = pneg %p135
      %s221 = smul.u32 32, %s19
      %p222 = scmp.lt.s32.totalorder %s221, 63
      %s223 = scalar_select %p222, %s221, 63
      %p224 = scmp.lt.s32.totalorder %s20, 0
      %s225 = scalar_select %p224, %s20, 0
      %s226 = sadd.s32 %s225, %s223
      %s227 = smul.addr %s226, 8
      %s228 = scalar_lea.vmem %s3, %s227
      %s229 = smul.u32 32, %s19
      %p230 = scmp.lt.s32.totalorder %s229, 63
      %s231 = scalar_select %p230, %s229, 63
      %p232 = scmp.lt.s32.totalorder %s21, 0
      %s233 = scalar_select %p232, %s21, 0
      %s234 = sadd.s32 %s233, %s231
      %s235 = smul.addr %s234, 4
      %s236 = scalar_lea.vmem %s0, %s235
      %s237 = smul.u32 32, %s19
      %s238 = smul.u32 8, %s21
      %p239 = scmp.lt.s32.totalorder %s238, 7
      %s240 = scalar_select %p239, %s238, 7
      %p241 = scmp.lt.s32.totalorder %s20, 0
      %s242 = scalar_select %p241, %s20, 0
      %s243 = sadd.s32 %s242, %s240
      %s244 = smul.addr %s243, 4
      %s245 = scalar_lea.vmem %s1, %s244
      %s246 = smul.u32 8, %s21
      %p247 = scmp.lt.s32.totalorder %s20, 0
      %s248 = scalar_select %p247, %s20, 0
      %s249 = scalar_lea.vmem %s2, %s248
      %s250 = smul.u32 32, %s19
      %p251 = scmp.lt.s32.totalorder %s250, 63
      %s252 = scalar_select %p251, %s250, 63
      %p253 = scmp.lt.s32.totalorder %s20, 0
      %s254 = scalar_select %p253, %s20, 0
      %s255 = sadd.s32 %s254, %s252
      %s256 = smul.addr %s255, 8
      %s257 = scalar_lea.vmem %s3, %s256
      %s258 = smul.u32 32, %s19
      %p260 = scmp.eq.s32.totalorder %s21, 0
      // Predicated region
      $region33: #{attention_forward.9} parent=31 // pred_check
        %p261 = pneg %p260
      $region34: #{attention_forward.9} parent=31 // pred_check_branch
        %263 = sbr.rel (%p261) target = $region36
      $region35: #{attention_forward.9} parent=31 // pred_region
        %264 = vst [vmem:[#allocation2] sm:$0xff] 0.0
        %265 = vst [vmem:[#allocation2 + $0x8] sm:$0xff] 0.0
        %266 = vst [vmem:[#allocation2 + $0x10] sm:$0xff] 0.0
        %267 = vst [vmem:[#allocation2 + $0x18] sm:$0xff] 0.0
        %268 = vst [vmem:[#allocation2 + $0x20] sm:$0xff] 0.0
        %269 = vst [vmem:[#allocation2 + $0x28] sm:$0xff] 0.0
        %270 = vst [vmem:[#allocation2 + $0x30] sm:$0xff] 0.0
        %271 = vst [vmem:[#allocation2 + $0x38] sm:$0xff] 0.0
        %272 = vst [vmem:[#allocation2 + $0x40] sm:$0xff] 0.0
        %273 = vst [vmem:[#allocation2 + $0x48] sm:$0xff] 0.0
        %274 = vst [vmem:[#allocation2 + $0x50] sm:$0xff] 0.0
        %275 = vst [vmem:[#allocation2 + $0x58] sm:$0xff] 0.0
        %276 = vst [vmem:[#allocation2 + $0x60] sm:$0xff] 0.0
        %277 = vst [vmem:[#allocation2 + $0x68] sm:$0xff] 0.0
        %278 = vst [vmem:[#allocation2 + $0x70] sm:$0xff] 0.0
        %279 = vst [vmem:[#allocation2 + $0x78] sm:$0xff] 0.0
        %280 = vst [vmem:[#allocation2 + $0x80] sm:$0xff] 0.0
        %281 = vst [vmem:[#allocation2 + $0x88] sm:$0xff] 0.0
        %282 = vst [vmem:[#allocation2 + $0x90] sm:$0xff] 0.0
        %283 = vst [vmem:[#allocation2 + $0x98] sm:$0xff] 0.0
        %284 = vst [vmem:[#allocation2 + $0xa0] sm:$0xff] 0.0
        %285 = vst [vmem:[#allocation2 + $0xa8] sm:$0xff] 0.0
        %286 = vst [vmem:[#allocation2 + $0xb0] sm:$0xff] 0.0
        %287 = vst [vmem:[#allocation2 + $0xb8] sm:$0xff] 0.0
        %288 = vst [vmem:[#allocation2 + $0xc0] sm:$0xff] 0.0
        %289 = vst [vmem:[#allocation2 + $0xc8] sm:$0xff] 0.0
        %290 = vst [vmem:[#allocation2 + $0xd0] sm:$0xff] 0.0
        %291 = vst [vmem:[#allocation2 + $0xd8] sm:$0xff] 0.0
        %292 = vst [vmem:[#allocation2 + $0xe0] sm:$0xff] 0.0
        %293 = vst [vmem:[#allocation2 + $0xe8] sm:$0xff] 0.0
        %294 = vst [vmem:[#allocation2 + $0xf0] sm:$0xff] 0.0
        %295 = vst [vmem:[#allocation2 + $0xf8] sm:$0xff] 0.0
      $region36: #{attention_forward.9} parent=31 // pred_fallthru
        _
      %v296 = vld [vmem:[#allocation2] sm:$0xff]
      %v297 = vld [vmem:[#allocation2 + $0x8] sm:$0xff]
      %v298 = vld [vmem:[#allocation2 + $0x10] sm:$0xff]
      %v299 = vld [vmem:[#allocation2 + $0x18] sm:$0xff]
      %v300 = vld [vmem:[#allocation2 + $0x20] sm:$0xff]
      %v301 = vld [vmem:[#allocation2 + $0x28] sm:$0xff]
      %v302 = vld [vmem:[#allocation2 + $0x30] sm:$0xff]
      %v303 = vld [vmem:[#allocation2 + $0x38] sm:$0xff]
      %v304 = vld [vmem:[#allocation2 + $0x40] sm:$0xff]
      %v305 = vld [vmem:[#allocation2 + $0x48] sm:$0xff]
      %v306 = vld [vmem:[#allocation2 + $0x50] sm:$0xff]
      %v307 = vld [vmem:[#allocation2 + $0x58] sm:$0xff]
      %v308 = vld [vmem:[#allocation2 + $0x60] sm:$0xff]
      %v309 = vld [vmem:[#allocation2 + $0x68] sm:$0xff]
      %v310 = vld [vmem:[#allocation2 + $0x70] sm:$0xff]
      %v311 = vld [vmem:[#allocation2 + $0x78] sm:$0xff]
      %v312 = vld [vmem:[#allocation2 + $0x80] sm:$0xff]
      %v313 = vld [vmem:[#allocation2 + $0x88] sm:$0xff]
      %v314 = vld [vmem:[#allocation2 + $0x90] sm:$0xff]
      %v315 = vld [vmem:[#allocation2 + $0x98] sm:$0xff]
      %v316 = vld [vmem:[#allocation2 + $0xa0] sm:$0xff]
      %v317 = vld [vmem:[#allocation2 + $0xa8] sm:$0xff]
      %v318 = vld [vmem:[#allocation2 + $0xb0] sm:$0xff]
      %v319 = vld [vmem:[#allocation2 + $0xb8] sm:$0xff]
      %v320 = vld [vmem:[#allocation2 + $0xc0] sm:$0xff]
      %v321 = vld [vmem:[#allocation2 + $0xc8] sm:$0xff]
      %v322 = vld [vmem:[#allocation2 + $0xd0] sm:$0xff]
      %v323 = vld [vmem:[#allocation2 + $0xd8] sm:$0xff]
      %v324 = vld [vmem:[#allocation2 + $0xe0] sm:$0xff]
      %v325 = vld [vmem:[#allocation2 + $0xe8] sm:$0xff]
      %v326 = vld [vmem:[#allocation2 + $0xf0] sm:$0xff]
      %v327 = vld [vmem:[#allocation2 + $0xf8] sm:$0xff]
      %v328 = vld [vmem:[%s236] sm:$0xf]
      %v329 = vld [vmem:[%s236 + $0x4] sm:$0xf]
      %v330 = vld [vmem:[%s236 + $0x8] sm:$0xf]
      %v331 = vld [vmem:[%s236 + $0xc] sm:$0xf]
      %v332 = vld [vmem:[%s236 + $0x10] sm:$0xf]
      %v333 = vld [vmem:[%s236 + $0x14] sm:$0xf]
      %v334 = vld [vmem:[%s236 + $0x18] sm:$0xf]
      %v335 = vld [vmem:[%s236 + $0x1c] sm:$0xf]
      %v336 = vld [vmem:[%s236 + $0x20] sm:$0xf]
      %v337 = vld [vmem:[%s236 + $0x24] sm:$0xf]
      %v338 = vld [vmem:[%s236 + $0x28] sm:$0xf]
      %v339 = vld [vmem:[%s236 + $0x2c] sm:$0xf]
      %v340 = vld [vmem:[%s236 + $0x30] sm:$0xf]
      %v341 = vld [vmem:[%s236 + $0x34] sm:$0xf]
      %v342 = vld [vmem:[%s236 + $0x38] sm:$0xf]
      %v343 = vld [vmem:[%s236 + $0x3c] sm:$0xf]
      %v344 = vld [vmem:[%s236 + $0x40] sm:$0xf]
      %v345 = vld [vmem:[%s236 + $0x44] sm:$0xf]
      %v346 = vld [vmem:[%s236 + $0x48] sm:$0xf]
      %v347 = vld [vmem:[%s236 + $0x4c] sm:$0xf]
      %v348 = vld [vmem:[%s236 + $0x50] sm:$0xf]
      %v349 = vld [vmem:[%s236 + $0x54] sm:$0xf]
      %v350 = vld [vmem:[%s236 + $0x58] sm:$0xf]
      %v351 = vld [vmem:[%s236 + $0x5c] sm:$0xf]
      %v352 = vld [vmem:[%s236 + $0x60] sm:$0xf]
      %v353 = vld [vmem:[%s236 + $0x64] sm:$0xf]
      %v354 = vld [vmem:[%s236 + $0x68] sm:$0xf]
      %v355 = vld [vmem:[%s236 + $0x6c] sm:$0xf]
      %v356 = vld [vmem:[%s236 + $0x70] sm:$0xf]
      %v357 = vld [vmem:[%s236 + $0x74] sm:$0xf]
      %v358 = vld [vmem:[%s236 + $0x78] sm:$0xf]
      %v359 = vld [vmem:[%s236 + $0x7c] sm:$0xf]
      %v360 = vld [vmem:[%s245] sm:$0xf]
      %v361 = vld [vmem:[%s245 + $0x4] sm:$0xf]
      %v362 = vld [vmem:[%s245 + $0x8] sm:$0xf]
      %v363 = vld [vmem:[%s245 + $0xc] sm:$0xf]
      %v364 = vld [vmem:[%s245 + $0x10] sm:$0xf]
      %v365 = vld [vmem:[%s245 + $0x14] sm:$0xf]
      %v366 = vld [vmem:[%s245 + $0x18] sm:$0xf]
      %v367 = vld [vmem:[%s245 + $0x1c] sm:$0xf]
      %v400 = vunpack.c.l.b16 %v328
      %v401 = vunpack.c.l.b16 %v329
      %v402 = vunpack.c.l.b16 %v330
      %v403 = vunpack.c.l.b16 %v331
      %v404 = vunpack.c.l.b16 %v332
      %v405 = vunpack.c.l.b16 %v333
      %v406 = vunpack.c.l.b16 %v334
      %v407 = vunpack.c.l.b16 %v335
      %v408 = vunpack.c.l.b16 %v336
      %v409 = vunpack.c.l.b16 %v337
      %v410 = vunpack.c.l.b16 %v338
      %v411 = vunpack.c.l.b16 %v339
      %v412 = vunpack.c.l.b16 %v340
      %v413 = vunpack.c.l.b16 %v341
      %v414 = vunpack.c.l.b16 %v342
      %v415 = vunpack.c.l.b16 %v343
      %v416 = vunpack.c.l.b16 %v344
      %v417 = vunpack.c.l.b16 %v345
      %v418 = vunpack.c.l.b16 %v346
      %v419 = vunpack.c.l.b16 %v347
      %v420 = vunpack.c.l.b16 %v348
      %v421 = vunpack.c.l.b16 %v349
      %v422 = vunpack.c.l.b16 %v350
      %v423 = vunpack.c.l.b16 %v351
      %v424 = vunpack.c.l.b16 %v352
      %v425 = vunpack.c.l.b16 %v353
      %v426 = vunpack.c.l.b16 %v354
      %v427 = vunpack.c.l.b16 %v355
      %v428 = vunpack.c.l.b16 %v356
      %v429 = vunpack.c.l.b16 %v357
      %v430 = vunpack.c.l.b16 %v358
      %v431 = vunpack.c.l.b16 %v359
      %v432 = vpack.c.b16 %v401, %v400
      %v433 = vpack.c.b16 %v403, %v402
      %v434 = vpack.c.b16 %v405, %v404
      %v435 = vpack.c.b16 %v407, %v406
      %v436 = vpack.c.b16 %v409, %v408
      %v437 = vpack.c.b16 %v411, %v410
      %v438 = vpack.c.b16 %v413, %v412
      %v439 = vpack.c.b16 %v415, %v414
      %v440 = vpack.c.b16 %v417, %v416
      %v441 = vpack.c.b16 %v419, %v418
      %v442 = vpack.c.b16 %v421, %v420
      %v443 = vpack.c.b16 %v423, %v422
      %v444 = vpack.c.b16 %v425, %v424
      %v445 = vpack.c.b16 %v427, %v426
      %v446 = vpack.c.b16 %v429, %v428
      %v447 = vpack.c.b16 %v431, %v430
      %v456 = vunpack.c.l.b16 %v360
      %v457 = vunpack.c.l.b16 %v361
      %v458 = vunpack.c.l.b16 %v362
      %v459 = vunpack.c.l.b16 %v363
      %v460 = vunpack.c.l.b16 %v364
      %v461 = vunpack.c.l.b16 %v365
      %v462 = vunpack.c.l.b16 %v366
      %v463 = vunpack.c.l.b16 %v367
      %v464 = vpack.c.b16 %v457, %v456
      %v465 = vpack.c.b16 %v459, %v458
      %v466 = vpack.c.b16 %v461, %v460
      %v467 = vpack.c.b16 %v463, %v462
      %vm472 = vcmask 523264
      %v474 = vsel %vm472, %v432, 0
      %v477 = vsel %vm472, %v433, 0
      %v480 = vsel %vm472, %v434, 0
      %v483 = vsel %vm472, %v435, 0
      %v486 = vsel %vm472, %v436, 0
      %v489 = vsel %vm472, %v437, 0
      %v492 = vsel %vm472, %v438, 0
      %v495 = vsel %vm472, %v439, 0
      %v498 = vsel %vm472, %v440, 0
      %v501 = vsel %vm472, %v441, 0
      %v504 = vsel %vm472, %v442, 0
      %v507 = vsel %vm472, %v443, 0
      %v510 = vsel %vm472, %v444, 0
      %v513 = vsel %vm472, %v445, 0
      %v516 = vsel %vm472, %v446, 0
      %v519 = vsel %vm472, %v447, 0
      %521 = vmatpush.bf16.msra.mxu0 0
      %522 = vmatpush.bf16.msra.mxu0 0
      %523 = vmatpush.bf16.msra.mxu0 0
      %524 = vmatpush.bf16.msra.mxu0 0
      %525 = vmatpush.bf16.msra.mxu0 %v467
      %526 = vmatpush.bf16.msra.mxu0 %v466
      %527 = vmatpush.bf16.msra.mxu0 %v465
      %528 = vmatpush.bf16.msra.mxu0 %v464
      %529 = vmatmul.bf16.gmra.mxu0 %v474
      %v530 = vpop.f32.mrf.mxu0
      %v531 = vadd.f32 0.0, %v530
      %v532 = vpop.f32.mrf.mxu0
      %v533 = vadd.f32 0.0, %v532
      %534 = vmatmul.bf16.gmra.mxu0 %v477
      %v535 = vpop.f32.mrf.mxu0
      %v536 = vadd.f32 0.0, %v535
      %v537 = vpop.f32.mrf.mxu0
      %v538 = vadd.f32 0.0, %v537
      %539 = vmatmul.bf16.gmra.mxu0 %v480
      %v540 = vpop.f32.mrf.mxu0
      %v541 = vadd.f32 0.0, %v540
      %v542 = vpop.f32.mrf.mxu0
      %v543 = vadd.f32 0.0, %v542
      %544 = vmatmul.bf16.gmra.mxu0 %v483
      %v545 = vpop.f32.mrf.mxu0
      %v546 = vadd.f32 0.0, %v545
      %v547 = vpop.f32.mrf.mxu0
      %v548 = vadd.f32 0.0, %v547
      %549 = vmatmul.bf16.gmra.mxu0 %v486
      %v550 = vpop.f32.mrf.mxu0
      %v551 = vadd.f32 0.0, %v550
      %v552 = vpop.f32.mrf.mxu0
      %v553 = vadd.f32 0.0, %v552
      %554 = vmatmul.bf16.gmra.mxu0 %v489
      %v555 = vpop.f32.mrf.mxu0
      %v556 = vadd.f32 0.0, %v555
      %v557 = vpop.f32.mrf.mxu0
      %v558 = vadd.f32 0.0, %v557
      %559 = vmatmul.bf16.gmra.mxu0 %v492
      %v560 = vpop.f32.mrf.mxu0
      %v561 = vadd.f32 0.0, %v560
      %v562 = vpop.f32.mrf.mxu0
      %v563 = vadd.f32 0.0, %v562
      %564 = vmatmul.bf16.gmra.mxu0 %v495
      %v565 = vpop.f32.mrf.mxu0
      %v566 = vadd.f32 0.0, %v565
      %v567 = vpop.f32.mrf.mxu0
      %v568 = vadd.f32 0.0, %v567
      %569 = vmatmul.bf16.gmra.mxu0 %v498
      %v570 = vpop.f32.mrf.mxu0
      %v571 = vadd.f32 0.0, %v570
      %v572 = vpop.f32.mrf.mxu0
      %v573 = vadd.f32 0.0, %v572
      %574 = vmatmul.bf16.gmra.mxu0 %v501
      %v575 = vpop.f32.mrf.mxu0
      %v576 = vadd.f32 0.0, %v575
      %v577 = vpop.f32.mrf.mxu0
      %v578 = vadd.f32 0.0, %v577
      %579 = vmatmul.bf16.gmra.mxu0 %v504
      %v580 = vpop.f32.mrf.mxu0
      %v581 = vadd.f32 0.0, %v580
      %v582 = vpop.f32.mrf.mxu0
      %v583 = vadd.f32 0.0, %v582
      %584 = vmatmul.bf16.gmra.mxu0 %v507
      %v585 = vpop.f32.mrf.mxu0
      %v586 = vadd.f32 0.0, %v585
      %v587 = vpop.f32.mrf.mxu0
      %v588 = vadd.f32 0.0, %v587
      %589 = vmatmul.bf16.gmra.mxu0 %v510
      %v590 = vpop.f32.mrf.mxu0
      %v591 = vadd.f32 0.0, %v590
      %v592 = vpop.f32.mrf.mxu0
      %v593 = vadd.f32 0.0, %v592
      %594 = vmatmul.bf16.gmra.mxu0 %v513
      %v595 = vpop.f32.mrf.mxu0
      %v596 = vadd.f32 0.0, %v595
      %v597 = vpop.f32.mrf.mxu0
      %v598 = vadd.f32 0.0, %v597
      %599 = vmatmul.bf16.gmra.mxu0 %v516
      %v600 = vpop.f32.mrf.mxu0
      %v601 = vadd.f32 0.0, %v600
      %v602 = vpop.f32.mrf.mxu0
      %v603 = vadd.f32 0.0, %v602
      %604 = vmatmul.bf16.gmra.mxu0 %v519
      %v605 = vpop.f32.mrf.mxu0
      %v606 = vadd.f32 0.0, %v605
      %v607 = vpop.f32.mrf.mxu0
      %v608 = vadd.f32 0.0, %v607
      %609 = vdwg.mxu0
      %v610 = vadd.f32 %v296, %v531
      %v611 = vadd.f32 %v297, %v533
      %v612 = vadd.f32 %v298, %v536
      %v613 = vadd.f32 %v299, %v538
      %v614 = vadd.f32 %v300, %v541
      %v615 = vadd.f32 %v301, %v543
      %v616 = vadd.f32 %v302, %v546
      %v617 = vadd.f32 %v303, %v548
      %v618 = vadd.f32 %v304, %v551
      %v619 = vadd.f32 %v305, %v553
      %v620 = vadd.f32 %v306, %v556
      %v621 = vadd.f32 %v307, %v558
      %v622 = vadd.f32 %v308, %v561
      %v623 = vadd.f32 %v309, %v563
      %v624 = vadd.f32 %v310, %v566
      %v625 = vadd.f32 %v311, %v568
      %v626 = vadd.f32 %v312, %v571
      %v627 = vadd.f32 %v313, %v573
      %v628 = vadd.f32 %v314, %v576
      %v629 = vadd.f32 %v315, %v578
      %v630 = vadd.f32 %v316, %v581
      %v631 = vadd.f32 %v317, %v583
      %v632 = vadd.f32 %v318, %v586
      %v633 = vadd.f32 %v319, %v588
      %v634 = vadd.f32 %v320, %v591
      %v635 = vadd.f32 %v321, %v593
      %v636 = vadd.f32 %v322, %v596
      %v637 = vadd.f32 %v323, %v598
      %v638 = vadd.f32 %v324, %v601
      %v639 = vadd.f32 %v325, %v603
      %v640 = vadd.f32 %v326, %v606
      %v641 = vadd.f32 %v327, %v608
      %642 = vst [vmem:[#allocation2] sm:$0xff] %v610
      %643 = vst [vmem:[#allocation2 + $0x8] sm:$0xff] %v611
      %644 = vst [vmem:[#allocation2 + $0x10] sm:$0xff] %v612
      %645 = vst [vmem:[#allocation2 + $0x18] sm:$0xff] %v613
      %646 = vst [vmem:[#allocation2 + $0x20] sm:$0xff] %v614
      %647 = vst [vmem:[#allocation2 + $0x28] sm:$0xff] %v615
      %648 = vst [vmem:[#allocation2 + $0x30] sm:$0xff] %v616
      %649 = vst [vmem:[#allocation2 + $0x38] sm:$0xff] %v617
      %650 = vst [vmem:[#allocation2 + $0x40] sm:$0xff] %v618
      %651 = vst [vmem:[#allocation2 + $0x48] sm:$0xff] %v619
      %652 = vst [vmem:[#allocation2 + $0x50] sm:$0xff] %v620
      %653 = vst [vmem:[#allocation2 + $0x58] sm:$0xff] %v621
      %654 = vst [vmem:[#allocation2 + $0x60] sm:$0xff] %v622
      %655 = vst [vmem:[#allocation2 + $0x68] sm:$0xff] %v623
      %656 = vst [vmem:[#allocation2 + $0x70] sm:$0xff] %v624
      %657 = vst [vmem:[#allocation2 + $0x78] sm:$0xff] %v625
      %658 = vst [vmem:[#allocation2 + $0x80] sm:$0xff] %v626
      %659 = vst [vmem:[#allocation2 + $0x88] sm:$0xff] %v627
      %660 = vst [vmem:[#allocation2 + $0x90] sm:$0xff] %v628
      %661 = vst [vmem:[#allocation2 + $0x98] sm:$0xff] %v629
      %662 = vst [vmem:[#allocation2 + $0xa0] sm:$0xff] %v630
      %663 = vst [vmem:[#allocation2 + $0xa8] sm:$0xff] %v631
      %664 = vst [vmem:[#allocation2 + $0xb0] sm:$0xff] %v632
      %665 = vst [vmem:[#allocation2 + $0xb8] sm:$0xff] %v633
      %666 = vst [vmem:[#allocation2 + $0xc0] sm:$0xff] %v634
      %667 = vst [vmem:[#allocation2 + $0xc8] sm:$0xff] %v635
      %668 = vst [vmem:[#allocation2 + $0xd0] sm:$0xff] %v636
      %669 = vst [vmem:[#allocation2 + $0xd8] sm:$0xff] %v637
      %670 = vst [vmem:[#allocation2 + $0xe0] sm:$0xff] %v638
      %671 = vst [vmem:[#allocation2 + $0xe8] sm:$0xff] %v639
      %672 = vst [vmem:[#allocation2 + $0xf0] sm:$0xff] %v640
      %673 = vst [vmem:[#allocation2 + $0xf8] sm:$0xff] %v641
      // Predicated region
      $region37: #{attention_forward.9} parent=31 // pred_check
        %p674 = pneg %p260
      $region38: #{attention_forward.9} parent=31 // pred_check_branch
        %676 = sbr.rel (%p674) target = $region40
      $region39: #{attention_forward.9} parent=31 // pred_region
        %v677 = vld [vmem:[#allocation2] sm:$0xff]
        %v678 = vld [vmem:[#allocation2 + $0x8] sm:$0xff]
        %v679 = vld [vmem:[#allocation2 + $0x10] sm:$0xff]
        %v680 = vld [vmem:[#allocation2 + $0x18] sm:$0xff]
        %v681 = vld [vmem:[#allocation2 + $0x20] sm:$0xff]
        %v682 = vld [vmem:[#allocation2 + $0x28] sm:$0xff]
        %v683 = vld [vmem:[#allocation2 + $0x30] sm:$0xff]
        %v684 = vld [vmem:[#allocation2 + $0x38] sm:$0xff]
        %v685 = vld [vmem:[#allocation2 + $0x40] sm:$0xff]
        %v686 = vld [vmem:[#allocation2 + $0x48] sm:$0xff]
        %v687 = vld [vmem:[#allocation2 + $0x50] sm:$0xff]
        %v688 = vld [vmem:[#allocation2 + $0x58] sm:$0xff]
        %v689 = vld [vmem:[#allocation2 + $0x60] sm:$0xff]
        %v690 = vld [vmem:[#allocation2 + $0x68] sm:$0xff]
        %v691 = vld [vmem:[#allocation2 + $0x70] sm:$0xff]
        %v692 = vld [vmem:[#allocation2 + $0x78] sm:$0xff]
        %v693 = vld [vmem:[#allocation2 + $0x80] sm:$0xff]
        %v694 = vld [vmem:[#allocation2 + $0x88] sm:$0xff]
        %v695 = vld [vmem:[#allocation2 + $0x90] sm:$0xff]
        %v696 = vld [vmem:[#allocation2 + $0x98] sm:$0xff]
        %v697 = vld [vmem:[#allocation2 + $0xa0] sm:$0xff]
        %v698 = vld [vmem:[#allocation2 + $0xa8] sm:$0xff]
        %v699 = vld [vmem:[#allocation2 + $0xb0] sm:$0xff]
        %v700 = vld [vmem:[#allocation2 + $0xb8] sm:$0xff]
        %v701 = vld [vmem:[#allocation2 + $0xc0] sm:$0xff]
        %v702 = vld [vmem:[#allocation2 + $0xc8] sm:$0xff]
        %v703 = vld [vmem:[#allocation2 + $0xd0] sm:$0xff]
        %v704 = vld [vmem:[#allocation2 + $0xd8] sm:$0xff]
        %v705 = vld [vmem:[#allocation2 + $0xe0] sm:$0xff]
        %v706 = vld [vmem:[#allocation2 + $0xe8] sm:$0xff]
        %v707 = vld [vmem:[#allocation2 + $0xf0] sm:$0xff]
        %v708 = vld [vmem:[#allocation2 + $0xf8] sm:$0xff]
        %v709 = vld [vmem:[%s249] sm:$0x1]
        %v711 = vperm.slane %v709, 0
        %v713 = vadd.f32 %v677, %v711
        %v714 = vadd.f32 %v678, %v711
        %v715 = vadd.f32 %v679, %v711
        %v716 = vadd.f32 %v680, %v711
        %v717 = vadd.f32 %v681, %v711
        %v718 = vadd.f32 %v682, %v711
        %v719 = vadd.f32 %v683, %v711
        %v720 = vadd.f32 %v684, %v711
        %v721 = vadd.f32 %v685, %v711
        %v722 = vadd.f32 %v686, %v711
        %v723 = vadd.f32 %v687, %v711
        %v724 = vadd.f32 %v688, %v711
        %v725 = vadd.f32 %v689, %v711
        %v726 = vadd.f32 %v690, %v711
        %v727 = vadd.f32 %v691, %v711
        %v728 = vadd.f32 %v692, %v711
        %v729 = vadd.f32 %v693, %v711
        %v730 = vadd.f32 %v694, %v711
        %v731 = vadd.f32 %v695, %v711
        %v732 = vadd.f32 %v696, %v711
        %v733 = vadd.f32 %v697, %v711
        %v734 = vadd.f32 %v698, %v711
        %v735 = vadd.f32 %v699, %v711
        %v736 = vadd.f32 %v700, %v711
        %v737 = vadd.f32 %v701, %v711
        %v738 = vadd.f32 %v702, %v711
        %v739 = vadd.f32 %v703, %v711
        %v740 = vadd.f32 %v704, %v711
        %v741 = vadd.f32 %v705, %v711
        %v742 = vadd.f32 %v706, %v711
        %v743 = vadd.f32 %v707, %v711
        %v744 = vadd.f32 %v708, %v711
        %745 = vst [vmem:[%s257] sm:$0xff] %v713
        %746 = vst [vmem:[%s257 + $0x8] sm:$0xff] %v714
        %747 = vst [vmem:[%s257 + $0x10] sm:$0xff] %v715
        %748 = vst [vmem:[%s257 + $0x18] sm:$0xff] %v716
        %749 = vst [vmem:[%s257 + $0x20] sm:$0xff] %v717
        %750 = vst [vmem:[%s257 + $0x28] sm:$0xff] %v718
        %751 = vst [vmem:[%s257 + $0x30] sm:$0xff] %v719
        %752 = vst [vmem:[%s257 + $0x38] sm:$0xff] %v720
        %753 = vst [vmem:[%s257 + $0x40] sm:$0xff] %v721
        %754 = vst [vmem:[%s257 + $0x48] sm:$0xff] %v722
        %755 = vst [vmem:[%s257 + $0x50] sm:$0xff] %v723
        %756 = vst [vmem:[%s257 + $0x58] sm:$0xff] %v724
        %757 = vst [vmem:[%s257 + $0x60] sm:$0xff] %v725
        %758 = vst [vmem:[%s257 + $0x68] sm:$0xff] %v726
        %759 = vst [vmem:[%s257 + $0x70] sm:$0xff] %v727
        %760 = vst [vmem:[%s257 + $0x78] sm:$0xff] %v728
        %761 = vst [vmem:[%s257 + $0x80] sm:$0xff] %v729
        %762 = vst [vmem:[%s257 + $0x88] sm:$0xff] %v730
        %763 = vst [vmem:[%s257 + $0x90] sm:$0xff] %v731
        %764 = vst [vmem:[%s257 + $0x98] sm:$0xff] %v732
        %765 = vst [vmem:[%s257 + $0xa0] sm:$0xff] %v733
        %766 = vst [vmem:[%s257 + $0xa8] sm:$0xff] %v734
        %767 = vst [vmem:[%s257 + $0xb0] sm:$0xff] %v735
        %768 = vst [vmem:[%s257 + $0xb8] sm:$0xff] %v736
        %769 = vst [vmem:[%s257 + $0xc0] sm:$0xff] %v737
        %770 = vst [vmem:[%s257 + $0xc8] sm:$0xff] %v738
        %771 = vst [vmem:[%s257 + $0xd0] sm:$0xff] %v739
        %772 = vst [vmem:[%s257 + $0xd8] sm:$0xff] %v740
        %773 = vst [vmem:[%s257 + $0xe0] sm:$0xff] %v741
        %774 = vst [vmem:[%s257 + $0xe8] sm:$0xff] %v742
        %775 = vst [vmem:[%s257 + $0xf0] sm:$0xff] %v743
        %776 = vst [vmem:[%s257 + $0xf8] sm:$0xff] %v744
      $region40: #{attention_forward.9} parent=31 // pred_fallthru
        _
      %s777 = smul.u32 32, %s19
      %p778 = scmp.lt.s32.totalorder %s777, 63
      %s779 = scalar_select %p778, %s777, 63
      %p780 = scmp.lt.s32.totalorder %s20, 0
      %s781 = scalar_select %p780, %s20, 0
      %s782 = sadd.s32 %s781, %s779
      %s783 = smul.addr %s782, 8
      %s784 = scalar_lea.vmem %s3, %s783
      // Predicated region
      $region41: #{attention_forward.9} parent=31 // pred_check
        %p785 = pneg %p135
      $region42: #{attention_forward.9} parent=31 // pred_check_branch
        %787 = sbr.rel (%p785) target = $region44
      $region43: #{attention_forward.9} parent=31 // pred_region
        %s788 = smul.u32 32, %s19
      $region44: #{attention_forward.9} parent=31 // pred_fallthru
        _
    $region32: #{attention_forward.9} parent=5 // pred_fallthru
      _
    %p789 = scmp.le.s32.totalorder 2, %s9
    // Predicated region
    $region45: #{attention_forward.9} parent=5 // pred_check
      %p790 = pneg %p789
    $region46: #{attention_forward.9} parent=5 // pred_check_branch
      %792 = sbr.rel (%p790) target = $region48
    $region47: #{attention_forward.9} parent=5 // pred_region
      %s793 = ssub.s32 %s9, 2
      // Predicated region
      $region49: #{attention_forward.9} parent=47 // pred_check
        %p794 = pneg %p141
      $region50: #{attention_forward.9} parent=47 // pred_check_branch
        %796 = sbr.rel (%p794) target = $region52
      $region51: #{attention_forward.9} parent=47 // pred_region
        %s797 = smul.u32 32, %s22
        %p798 = scmp.lt.s32.totalorder %s797, 63
        %s799 = scalar_select %p798, %s797, 63
        %p800 = scmp.lt.s32.totalorder %s23, 0
        %s801 = scalar_select %p800, %s23, 0
        %s802 = sadd.s32 %s801, %s799
        %s803 = smul.addr %s802, 8
        %s804 = scalar_lea.vmem %s3, %s803
      $region52: #{attention_forward.9} parent=47 // pred_fallthru
        _
    $region48: #{attention_forward.9} parent=5 // pred_fallthru
      _
  $region6: #{attention_forward.9} parent=0 // loop_footer
    %s13 = sadd.s32 1, %s9
  $region7: #{attention_forward.9} parent=0 // loop_footer_branch
    %8 = sbr.rel target = $region3
  $region8: #{attention_forward.9} parent=0 // loop_exit
    _

</llo_original>
